<compile_context>
chip_gen: v6e
topology: v6e:2x2x1
jax: 0.10.0
libtpu: 0.0.40
codegen_flags: <defaults>
</compile_context>

<pallas_src>
import jax
import jax.numpy as jnp
from jax.experimental import pallas as pl
from jax.experimental.pallas import tpu as pltpu

_BN_EPS = 1e-5
_VMEM_LIMIT = 32 * 1024 * 1024


def _round_up(x, m):
    return (x + m - 1) // m * m


def _largest_divisor(n, cap):
    """Largest divisor of n that is <= cap (always >= 1)."""
    for t in range(min(n, cap), 0, -1):
        if n % t == 0:
            return t
    return 1


def _pick_m_tile(m, cap=512):
    """M tile for the GEMM: multiple of 8, <= cap, prefers an exact divisor and >= 2 tiles.
    Returns (tile, padded_m)."""
    cap = max(8, min(cap, _round_up(max(m // 2, 1), 8)))
    start = cap - cap % 8
    for t in range(start, 7, -8):
        if m % t == 0:
            return t, m
    return start, _round_up(m, start)


# ----------------------------------------------------------------------------------
# K1: M/K-tiled GEMM + bias + ReLU (1x1 up-conv)
# ----------------------------------------------------------------------------------
def _gemm_bias_relu_kernel(a_ref, w_ref, b_ref, o_ref, acc_ref):
    @pl.when(pl.program_id(1) == 0)
    def _init():
        acc_ref[...] = jnp.zeros_like(acc_ref)

    acc_ref[...] += jnp.dot(a_ref[...], w_ref[...],
                            preferred_element_type=jnp.float32)

    @pl.when(pl.program_id(1) == pl.num_programs(1) - 1)
    def _finish():
        o_ref[...] = jnp.maximum(acc_ref[...] + b_ref[...], 0.0).astype(o_ref.dtype)


def gemm_bias_relu(a, w, b, out_dtype=jnp.bfloat16):
    m, k = a.shape
    cout = w.shape[1]
    tm, mp = _pick_m_tile(m)                 # >= 2 M tiles when possible (v7x megacore)
    if mp != m:
        a = jnp.pad(a, ((0, mp - m), (0, 0)))
    tk = min(k, 512)
    kp = _round_up(k, tk)
    if kp != k:                              # zero-pad K on both operands (exact)
        a = jnp.pad(a, ((0, 0), (0, kp - k)))
        w = jnp.pad(w, ((0, kp - k), (0, 0)))
    out = pl.pallas_call(
        _gemm_bias_relu_kernel,
        out_shape=jax.ShapeDtypeStruct((mp, cout), out_dtype),
        grid_spec=pltpu.PrefetchScalarGridSpec(
            num_scalar_prefetch=0,
            grid=(mp // tm, kp // tk),
            in_specs=[
                pl.BlockSpec((tm, tk), lambda i, j: (i, j)),
                pl.BlockSpec((tk, cout), lambda i, j: (j, 0)),
                pl.BlockSpec((1, cout), lambda i, j: (0, 0)),
            ],
            out_specs=pl.BlockSpec((tm, cout), lambda i, j: (i, 0)),
            scratch_shapes=[pltpu.VMEM((tm, cout), jnp.float32)],
        ),
        compiler_params=pltpu.CompilerParams(
            dimension_semantics=("parallel", "arbitrary"),
            vmem_limit_bytes=_VMEM_LIMIT),
    )(a, w, b.reshape(1, cout).astype(jnp.float32))
    return out[:m] if mp != m else out


# ----------------------------------------------------------------------------------
# K2: fused PixelShuffle(2) + ReplicationPad2d((1,0,1,0)) + AvgPool2d(2, stride=1)
#     Input channel groups (after weight permutation): [(i,j)=(0,0) | (0,1) | (1,0) | (1,1)]
#     Output is column-packed: (N, 2*H1, W1, 2C), lanes = [even col | odd col].
# ----------------------------------------------------------------------------------
def _shuffle_blur_kernel(halo_ref, cur_ref, o_ref):
    j = pl.program_id(1)
    rh = cur_ref.shape[1]
    c4 = cur_ref.shape[3]
    c = c4 // 4

    cur = cur_ref[0].astype(jnp.float32)               # (Rh, W1, 4C), yup rows j*Rh + r
    halo = halo_ref[0, 0].astype(jnp.float32)          # yup row j*Rh - 1 (clamped)
    if rh > 1:
        prv = jnp.concatenate([halo[None], cur[:-1]], axis=0)
    else:
        prv = halo[None]

    a_ = cur[..., 0 * c:1 * c]      # shuffled row 2h, even cols
    b_ = cur[..., 1 * c:2 * c]      # shuffled row 2h, odd cols
    d_ = cur[..., 2 * c:3 * c]      # shuffled row 2h+1, even cols
    e_ = cur[..., 3 * c:4 * c]      # shuffled row 2h+1, odd cols
    pd = prv[..., 2 * c:3 * c]      # shuffled row 2h-1, even cols
    pe = prv[..., 3 * c:4 * c]      # shuffled row 2h-1, odd cols

    # Replication pad at the image top: shuffled row -1 == shuffled row 0.
    row_ids = j * rh + jax.lax.broadcasted_iota(jnp.int32, (rh, 1, 1), 0)
    is_top = row_ids == 0
    t0 = jnp.where(is_top, a_, pd)
    t1 = jnp.where(is_top, b_, pe)

    def at_prev_odd_col(odd, even):
        # shuffled value at column 2w-1 (left replication pad at w == 0).
        return jnp.concatenate([even[:, :1, :], odd[:, :-1, :]], axis=1)

    t1m = at_prev_odd_col(t1, t0)
    m1m = at_prev_odd_col(b_, a_)
    b1m = at_prev_odd_col(e_, d_)
    top_e = (t1m + t0 + m1m + a_) * 0.25
    top_o = (t0 + t1 + a_ + b_) * 0.25
    bot_e = (m1m + a_ + b1m + d_) * 0.25
    bot_o = (a_ + b_ + d_ + e_) * 0.25

    top = jnp.concatenate([top_e, top_o], axis=-1)      # (Rh, W1, 2C) packed
    bot = jnp.concatenate([bot_e, bot_o], axis=-1)
    for r in range(rh):                                 # static loop: plain sub-block stores
        o_ref[0, 2 * r] = top[r].astype(o_ref.dtype)
        o_ref[0, 2 * r + 1] = bot[r].astype(o_ref.dtype)


def shuffle_blur(yup, rh_cap=8):
    n, h1, w1, c4 = yup.shape
    c = c4 // 4
    rh = _largest_divisor(h1, rh_cap)
    return pl.pallas_call(
        _shuffle_blur_kernel,
        out_shape=jax.ShapeDtypeStruct((n, 2 * h1, w1, 2 * c), yup.dtype),
        grid_spec=pltpu.PrefetchScalarGridSpec(
            num_scalar_prefetch=0,
            grid=(n, h1 // rh),
            in_specs=[
                pl.BlockSpec((1, 1, w1, c4),
                             lambda i, j: (i, jnp.maximum(j * rh - 1, 0), 0, 0)),
                pl.BlockSpec((1, rh, w1, c4), lambda i, j: (i, j, 0, 0)),
            ],
            out_specs=pl.BlockSpec((1, 2 * rh, w1, 2 * c), lambda i, j: (i, j, 0, 0)),
        ),
        compiler_params=pltpu.CompilerParams(
            dimension_semantics=("parallel", "parallel"),
            vmem_limit_bytes=_VMEM_LIMIT),
    )(yup, yup)


# ----------------------------------------------------------------------------------
# K3/K4: fused prologue -> depthwise 3x3 (zero pad) -> pointwise 1x1 -> partial BN stats
#        All activations column-packed (N, H, W/2, 2C); R-row tiles with 1-row halos.
# ----------------------------------------------------------------------------------
def _dw_pw_tile(xbuf, wd_ref, wp_ref, y_ref, st_ref):
    """xbuf: (R+2, W, 2C) f32 conv input rows in packed layout; rows 0 / R+1 are the
    vertical halo (already zeroed at the image border)."""
    rpp, w, c2 = xbuf.shape
    r, c = rpp - 2, c2 // 2
    wd = wd_ref[...].astype(jnp.float32)                              # (9, 2C)
    zcol = jnp.zeros((r, 1, c), jnp.float32)
    acc = jnp.zeros((r, w, c2), jnp.float32)
    for ky in range(3):
        rows = xbuf[ky:ky + r]                                        # (R, W, 2C)
        ev, od = rows[..., :c], rows[..., c:]                         # even / odd columns
        od_prev = jnp.concatenate([zcol, od[:, :-1, :]], axis=1)      # col-1 of even outputs
        ev_next = jnp.concatenate([ev[:, 1:, :], zcol], axis=1)       # col+1 of odd outputs
        left = jnp.concatenate([od_prev, ev], axis=-1)                # packed col-1 neighbours
        right = jnp.concatenate([od, ev_next], axis=-1)               # packed col+1 neighbours
        wl = wd[3 * ky + 0:3 * ky + 1, :].reshape(1, 1, c2)
        wc = wd[3 * ky + 1:3 * ky + 2, :].reshape(1, 1, c2)
        wr = wd[3 * ky + 2:3 * ky + 3, :].reshape(1, 1, c2)
        acc = acc + left * wl + rows * wc + right * wr
    y = jnp.dot(acc.reshape(r * w, c2).astype(jnp.bfloat16), wp_ref[...],
                preferred_element_type=jnp.float32)                   # (R*W, 2C), block-diag PW
    y_ref[0] = y.reshape(r, w, c2).astype(y_ref.dtype)
    st_ref[0, 0] = jnp.concatenate(
        [jnp.sum(y, axis=0, keepdims=True),
         jnp.sum(y * y, axis=0, keepdims=True)], axis=0)


def _dwpw_sub_kernel(x_t_ref, x_m_ref, x_b_ref, u_t_ref, u_m_ref, u_b_ref,
                     wd_ref, wp_ref, y_ref, st_ref):
    j = pl.program_id(1)
    ntiles = pl.num_programs(1)
    top = x_t_ref[0, 0].astype(jnp.float32) - u_t_ref[0, 0].astype(jnp.float32)
    bot = x_b_ref[0, 0].astype(jnp.float32) - u_b_ref[0, 0].astype(jnp.float32)
    mid = x_m_ref[0].astype(jnp.float32) - u_m_ref[0].astype(jnp.float32)
    top = jnp.where(j == 0, 0.0, top)                 # conv zero padding (top image border)
    bot = jnp.where(j == ntiles - 1, 0.0, bot)        # conv zero padding (bottom border)
    xbuf = jnp.concatenate([top[None], mid, bot[None]], axis=0)
    _dw_pw_tile(xbuf, wd_ref, wp_ref, y_ref, st_ref)


def _dwpw_affine_kernel(a_t_ref, a_m_ref, a_b_ref, sc_ref, sh_ref,
                        wd_ref, wp_ref, y_ref, st_ref):
    j = pl.program_id(1)
    ntiles = pl.num_programs(1)
    sc = sc_ref[...]
    sh = sh_ref[...]

    def bn_relu(x):
        return jnp.maximum(x.astype(jnp.float32) * sc + sh, 0.0)

    top = bn_relu(a_t_ref[0, 0])
    bot = bn_relu(a_b_ref[0, 0])
    mid = bn_relu(a_m_ref[0])
    top = jnp.where(j == 0, 0.0, top)
    bot = jnp.where(j == ntiles - 1, 0.0, bot)
    xbuf = jnp.concatenate([top[None], mid, bot[None]], axis=0)
    _dw_pw_tile(xbuf, wd_ref, wp_ref, y_ref, st_ref)


def _halo_specs(h, w, c, r):
    return [
        pl.BlockSpec((1, 1, w, c), lambda i, j: (i, jnp.maximum(j * r - 1, 0), 0, 0)),
        pl.BlockSpec((1, r, w, c), lambda i, j: (i, j, 0, 0)),
        pl.BlockSpec((1, 1, w, c), lambda i, j: (i, jnp.minimum(j * r + r, h - 1), 0, 0)),
    ]


def _dwpw_out(n, h, w, c2, r, t):
    return (
        (jax.ShapeDtypeStruct((n, h, w, c2), jnp.bfloat16),
         jax.ShapeDtypeStruct((n, t, 2, c2), jnp.float32)),
        [pl.BlockSpec((1, r, w, c2), lambda i, j: (i, j, 0, 0)),
         pl.BlockSpec((1, 1, 2, c2), lambda i, j: (i, j, 0, 0))],
    )


def dwpw_sub(x2p, up, wd2, wp2, r_cap=16):
    n, h, w, c2 = x2p.shape
    r = _largest_divisor(h, r_cap)
    t = h // r
    out_shape, out_specs = _dwpw_out(n, h, w, c2, r, t)
    in_specs = (_halo_specs(h, w, c2, r) + _halo_specs(h, w, c2, r) + [
        pl.BlockSpec((9, c2), lambda i, j: (0, 0)),
        pl.BlockSpec((c2, c2), lambda i, j: (0, 0)),
    ])
    return pl.pallas_call(
        _dwpw_sub_kernel,
        out_shape=out_shape,
        grid_spec=pltpu.PrefetchScalarGridSpec(
            num_scalar_prefetch=0, grid=(n, t),
            in_specs=in_specs, out_specs=out_specs),
        compiler_params=pltpu.CompilerParams(
            dimension_semantics=("parallel", "parallel"),
            vmem_limit_bytes=_VMEM_LIMIT),
    )(x2p, x2p, x2p, up, up, up, wd2, wp2)


def dwpw_affine(yprev, scale2, shift2, wd2, wp2, r_cap=16):
    n, h, w, c2 = yprev.shape
    r = _largest_divisor(h, r_cap)
    t = h // r
    out_shape, out_specs = _dwpw_out(n, h, w, c2, r, t)
    in_specs = (_halo_specs(h, w, c2, r) + [
        pl.BlockSpec((1, c2), lambda i, j: (0, 0)),
        pl.BlockSpec((1, c2), lambda i, j: (0, 0)),
        pl.BlockSpec((9, c2), lambda i, j: (0, 0)),
        pl.BlockSpec((c2, c2), lambda i, j: (0, 0)),
    ])
    return pl.pallas_call(
        _dwpw_affine_kernel,
        out_shape=out_shape,
        grid_spec=pltpu.PrefetchScalarGridSpec(
            num_scalar_prefetch=0, grid=(n, t),
            in_specs=in_specs, out_specs=out_specs),
        compiler_params=pltpu.CompilerParams(
            dimension_semantics=("parallel", "parallel"),
            vmem_limit_bytes=_VMEM_LIMIT),
    )(yprev, yprev, yprev, scale2, shift2, wd2, wp2)


# ----------------------------------------------------------------------------------
# K5: final BN + ReLU apply (row-tiled, lane-dense in the packed layout)
# ----------------------------------------------------------------------------------
def _affine_relu_kernel(x_ref, sc_ref, sh_ref, o_ref):
    x = x_ref[...].astype(jnp.float32)
    o_ref[...] = jnp.maximum(x * sc_ref[...] + sh_ref[...], 0.0).astype(o_ref.dtype)


def affine_relu(yp, scale2, shift2, out_dtype=jnp.float32, r_cap=32):
    n, h, w, c2 = yp.shape
    r = _largest_divisor(h, r_cap)
    return pl.pallas_call(
        _affine_relu_kernel,
        out_shape=jax.ShapeDtypeStruct((n, h, w, c2), out_dtype),
        grid_spec=pltpu.PrefetchScalarGridSpec(
            num_scalar_prefetch=0, grid=(n, h // r),
            in_specs=[
                pl.BlockSpec((1, r, w, c2), lambda i, j: (i, j, 0, 0)),
                pl.BlockSpec((1, c2), lambda i, j: (0, 0)),
                pl.BlockSpec((1, c2), lambda i, j: (0, 0)),
            ],
            out_specs=pl.BlockSpec((1, r, w, c2), lambda i, j: (i, j, 0, 0))),
        compiler_params=pltpu.CompilerParams(
            dimension_semantics=("parallel", "parallel"),
            vmem_limit_bytes=_VMEM_LIMIT),
    )(yp, scale2, shift2)


# ----------------------------------------------------------------------------------
# Glue: BN scale/shift from partial stats, packed weights, forward pass, params.
# ----------------------------------------------------------------------------------
def bn_scale_shift_packed(stats, gamma, beta, count):
    """stats (N, T, 2, 2C) -> packed (1, 2C) scale / shift (training-mode batch stats)."""
    s = jnp.sum(stats, axis=(0, 1))                         # (2, 2C)
    c = gamma.shape[0]
    mean = (s[0, :c] + s[0, c:]) / count
    var = jnp.maximum((s[1, :c] + s[1, c:]) / count - mean * mean, 0.0)
    scale = gamma * jax.lax.rsqrt(var + _BN_EPS)
    shift = beta - mean * scale
    scale2 = jnp.concatenate([scale, scale]).reshape(1, 2 * c)
    shift2 = jnp.concatenate([shift, shift]).reshape(1, 2 * c)
    return scale2, shift2


def _block_diag2(wp):
    c = wp.shape[0]
    z = jnp.zeros((c, c), wp.dtype)
    return jnp.concatenate(
        [jnp.concatenate([wp, z], axis=1), jnp.concatenate([z, wp], axis=1)], axis=0)


def up_forward(params, x1, x2):
    """Up.forward(x1, x2): x1 (N,H1,W1,Cin), x2 (N,H2,W2,C) -> (N,H2,W2,C)."""
    n, h1, w1, cin = x1.shape
    _, h2, w2, c = x2.shape
    assert w2 % 2 == 0, "column-packed path requires an even skip width"

    # PixelShuffle_ICNR: 1x1 conv (+bias) -> ReLU (K1), then fused shuffle+pad+blur (K2).
    a = x1.reshape(n * h1 * w1, cin).astype(jnp.bfloat16)
    yup = gemm_bias_relu(a, params["up_w"], params["up_b"]).reshape(n, h1, w1, 4 * c)
    u = shuffle_blur(yup)                                   # (N, 2H1, W1, 2C) packed bf16

    # F.pad(x1_up, ...) to x2's spatial size (no-op when sizes already match).
    dy, dx = h2 - 2 * h1, w2 - 2 * w1
    if dy or dx:
        u = u.reshape(n, 2 * h1, 2 * w1, c)
        u = jnp.pad(u, ((0, 0), (dy // 2, dy - dy // 2), (dx // 2, dx - dx // 2), (0, 0)))
        u = u.reshape(n, h2, w2 // 2, 2 * c)

    # DoubleConv block 1: (x2 - u) -> depthwise 3x3 -> pointwise 1x1 (+ BN1 stats).
    x2p = x2.reshape(n, h2, w2 // 2, 2 * c)                 # free view; x2 stays f32
    wd1 = jnp.tile(params["dw1"], (1, 2))
    wp1 = _block_diag2(params["pw1"])
    y1, st1 = dwpw_sub(x2p, u, wd1, wp1)
    sc1, sh1 = bn_scale_shift_packed(st1, params["bn1_g"], params["bn1_b"], n * h2 * w2)

    # DoubleConv block 2: BN1+ReLU fused prologue -> depthwise 3x3 -> pointwise 1x1.
    wd2 = jnp.tile(params["dw2"], (1, 2))
    wp2 = _block_diag2(params["pw2"])
    y2, st2 = dwpw_affine(y1, sc1, sh1, wd2, wp2)
    sc2, sh2 = bn_scale_shift_packed(st2, params["bn2_g"], params["bn2_b"], n * h2 * w2)

    # Final BN2 + ReLU (K5), then unpack the column-packed layout (free reshape).
    out = affine_relu(y2, sc2, sh2)
    return out.reshape(n, h2, w2, c)


def init_params(key, in_channels, out_channels):
    # NOTE: the reference module only type-checks when in_channels == out_channels
    # (x2 - up(x1) feeds DoubleConv(in_channels, out_channels)).
    cin, c = in_channels, out_channels
    keys = iter(jax.random.split(key, 12))

    def normal(shape, std):
        return std * jax.random.normal(next(keys), shape, jnp.float32)

    # PixelShuffle_ICNR.conv = nn.Conv2d(ni, nf*4, 1) (bias=True); PyTorch out-channel
    # order is 4*ch + 2i + j.  Permute once to (i, j, ch) groups so the fused
    # shuffle+blur kernel can slice lane-contiguous groups (same semantics).
    w_up = normal((cin, 4 * c), (2.0 / cin) ** 0.5)
    b_up = normal((4 * c,), 0.01)
    w_up = w_up.reshape(cin, c, 2, 2).transpose(0, 2, 3, 1).reshape(cin, 4 * c)
    b_up = b_up.reshape(c, 2, 2).transpose(1, 2, 0).reshape(4 * c)
    p = {"up_w": w_up.astype(jnp.bfloat16), "up_b": b_up}

    for blk in ("1", "2"):
        p["dw" + blk] = normal((9, c), (2.0 / 9.0) ** 0.5)              # 3x3 taps, row-major
        p["pw" + blk] = normal((c, c), (2.0 / c) ** 0.5).astype(jnp.bfloat16)
        p["bn" + blk + "_g"] = 1.0 + 0.1 * normal((c,), 1.0)
        p["bn" + blk + "_b"] = 0.1 * normal((c,), 1.0)
    return p


if __name__ == "__main__":
    key = jax.random.PRNGKey(0)
    kx1, kx2, kp = jax.random.split(key, 3)
    # Up(in_channels=64, out_channels=64); NHWC inputs
    # (== PyTorch NCHW x1: (2, 64, 8, 8), x2: (2, 64, 16, 16)).
    n, h1, w1, c = 2, 8, 8, 64
    x1 = jax.random.normal(kx1, (n, h1, w1, c), jnp.float32)
    x2 = jax.random.normal(kx2, (n, 2 * h1, 2 * w1, c), jnp.float32)
    params = init_params(kp, c, c)

    out = jax.block_until_ready(jax.jit(up_forward)(params, x1, x2))
    assert out.shape == (n, 2 * h1, 2 * w1, c), out.shape
    assert bool(jnp.all(jnp.isfinite(out)))
    print("KERNEL_OK")
</pallas_src>

<mosaic_0001>
module attributes {stable_mosaic.version = 11 : i64} {
  func.func @_gemm_bias_relu_kernel(%arg0: i32, %arg1: i32, %arg2: memref<64x64xbf16, #tpu.memory_space<vmem>>, %arg3: memref<64x256xbf16, #tpu.memory_space<vmem>>, %arg4: memref<1x256xf32, #tpu.memory_space<vmem>>, %arg5: memref<64x256xbf16, #tpu.memory_space<vmem>>, %arg6: memref<64x256xf32, #tpu.memory_space<vmem>>) attributes {dimension_semantics = [#tpu.dimension_semantics<parallel>, #tpu.dimension_semantics<arbitrary>], iteration_bounds = array<i64: 2, 1>, scalar_prefetch = 0 : i64, scratch_operands = 1 : i64, tpu.core_type = #tpu.core_type<tc>, window_params = [{transform_indices = @transform_0, window_bounds = array<i64: 64, 64>}, {transform_indices = @transform_1, window_bounds = array<i64: 64, 256>}, {pipeline_mode = #tpu.pipeline_mode<synchronous>, transform_indices = @transform_2, window_bounds = array<i64: 1, 256>}, {transform_indices = @transform_3, window_bounds = array<i64: 64, 256>}]} {
    %c0_i32 = arith.constant 0 : i32
    %0 = arith.cmpi eq, %arg1, %c0_i32 : i32
    %1 = arith.extui %0 : i1 to i32
    %c0_i32_0 = arith.constant 0 : i32
    %2 = arith.cmpi ne, %1, %c0_i32_0 : i32
    scf.if %2 {
      %cst_10 = arith.constant 0.000000e+00 : f32
      %12 = vector.broadcast %cst_10 : f32 to vector<64x256xf32>
      %c0_11 = arith.constant 0 : index
      %c0_12 = arith.constant 0 : index
      %13 = vector.load %arg6[%c0_11, %c0_12] : memref<64x256xf32, #tpu.memory_space<vmem>>, vector<64x256xf32>
      tpu.vector_store %arg6[%c0_11, %c0_12], %12 {strides = array<i32>} : memref<64x256xf32, #tpu.memory_space<vmem>>, vector<64x256xf32>,
    } else {
    }
    %c0 = arith.constant 0 : index
    %c0_1 = arith.constant 0 : index
    %3 = vector.load %arg6[%c0, %c0_1] : memref<64x256xf32, #tpu.memory_space<vmem>>, vector<64x256xf32>
    %c0_2 = arith.constant 0 : index
    %c0_3 = arith.constant 0 : index
    %4 = vector.load %arg2[%c0_2, %c0_3] : memref<64x64xbf16, #tpu.memory_space<vmem>>, vector<64x64xbf16>
    %c0_4 = arith.constant 0 : index
    %c0_5 = arith.constant 0 : index
    %5 = vector.load %arg3[%c0_4, %c0_5] : memref<64x256xbf16, #tpu.memory_space<vmem>>, vector<64x256xbf16>
    %cst = arith.constant dense<0.000000e+00> : vector<64x256xf32>
    %6 = tpu.matmul %4, %5, %cst {dimension_numbers = #tpu.dot_dimension_numbers<[1], [0], [0], [1], [0, 0, 1, 1], [], []>} : vector<64x64xbf16>, vector<64x256xbf16>, vector<64x256xf32> -> vector<64x256xf32>
    %7 = arith.addf %3, %6 : vector<64x256xf32>
    %c0_6 = arith.constant 0 : index
    %c0_7 = arith.constant 0 : index
    %8 = vector.load %arg6[%c0_6, %c0_7] : memref<64x256xf32, #tpu.memory_space<vmem>>, vector<64x256xf32>
    tpu.vector_store %arg6[%c0_6, %c0_7], %7 {strides = array<i32>} : memref<64x256xf32, #tpu.memory_space<vmem>>, vector<64x256xf32>,
    %c0_i32_8 = arith.constant 0 : i32
    %9 = arith.cmpi eq, %arg1, %c0_i32_8 : i32
    %10 = arith.extui %9 : i1 to i32
    %c0_i32_9 = arith.constant 0 : i32
    %11 = arith.cmpi ne, %10, %c0_i32_9 : i32
    scf.if %11 {
      %c0_10 = arith.constant 0 : index
      %c0_11 = arith.constant 0 : index
      %12 = vector.load %arg6[%c0_10, %c0_11] : memref<64x256xf32, #tpu.memory_space<vmem>>, vector<64x256xf32>
      %c0_12 = arith.constant 0 : index
      %c0_13 = arith.constant 0 : index
      %13 = vector.load %arg4[%c0_12, %c0_13] : memref<1x256xf32, #tpu.memory_space<vmem>>, vector<1x256xf32>
      %14 = vector.broadcast %13 : vector<1x256xf32> to vector<64x256xf32>
      %15 = arith.addf %12, %14 : vector<64x256xf32>
      %cst_14 = arith.constant 0.000000e+00 : f32
      %16 = vector.broadcast %cst_14 : f32 to vector<64x256xf32>
      %17 = arith.maximumf %15, %16 : vector<64x256xf32>
      %18 = arith.truncf %17 : vector<64x256xf32> to vector<64x256xbf16>
      %c0_15 = arith.constant 0 : index
      %c0_16 = arith.constant 0 : index
      %19 = vector.load %arg5[%c0_15, %c0_16] : memref<64x256xbf16, #tpu.memory_space<vmem>>, vector<64x256xbf16>
      tpu.vector_store %arg5[%c0_15, %c0_16], %18 {strides = array<i32>} : memref<64x256xbf16, #tpu.memory_space<vmem>>, vector<64x256xbf16>,
    } else {
    }
    return
  }
  func.func @transform_0(%arg0: i32, %arg1: i32) -> (i32, i32) {
    %c0_i32 = arith.constant 0 : i32
    return %arg0, %arg1 : i32, i32
  }
  func.func @transform_1(%arg0: i32, %arg1: i32) -> (i32, i32) {
    %c0_i32 = arith.constant 0 : i32
    %c0_i32_0 = arith.constant 0 : i32
    return %arg1, %c0_i32 : i32, i32
  }
  func.func @transform_2(%arg0: i32, %arg1: i32) -> (i32, i32) {
    %c0_i32 = arith.constant 0 : i32
    %c0_i32_0 = arith.constant 0 : i32
    %c0_i32_1 = arith.constant 0 : i32
    return %c0_i32, %c0_i32_0 : i32, i32
  }
  func.func @transform_3(%arg0: i32, %arg1: i32) -> (i32, i32) {
    %c0_i32 = arith.constant 0 : i32
    %c0_i32_0 = arith.constant 0 : i32
    return %arg0, %c0_i32 : i32, i32
  }
}

module attributes {stable_mosaic.version = 11 : i64} {
  func.func @_shuffle_blur_kernel(%arg0: i32, %arg1: i32, %arg2: memref<1x1x8x256xbf16, #tpu.memory_space<vmem>>, %arg3: memref<1x8x8x256xbf16, #tpu.memory_space<vmem>>, %arg4: memref<1x16x8x128xbf16, #tpu.memory_space<vmem>>) attributes {dimension_semantics = [#tpu.dimension_semantics<parallel>, #tpu.dimension_semantics<parallel>], iteration_bounds = array<i64: 2, 1>, scalar_prefetch = 0 : i64, scratch_operands = 0 : i64, tpu.core_type = #tpu.core_type<tc>, window_params = [{transform_indices = @transform_0, window_bounds = array<i64: 1, 1, 8, 256>}, {transform_indices = @transform_1, window_bounds = array<i64: 1, 8, 8, 256>}, {transform_indices = @transform_2, window_bounds = array<i64: 1, 16, 8, 128>}]} {
    %c0 = arith.constant 0 : index
    %c0_0 = arith.constant 0 : index
    %c0_1 = arith.constant 0 : index
    %c0_2 = arith.constant 0 : index
    %0 = vector.load %arg3[%c0, %c0_0, %c0_1, %c0_2] : memref<1x8x8x256xbf16, #tpu.memory_space<vmem>>, vector<1x8x8x256xbf16>
    %1 = vector.shape_cast %0 : vector<1x8x8x256xbf16> to vector<8x8x256xbf16>
    %2 = arith.extf %1 : vector<8x8x256xbf16> to vector<8x8x256xf32>
    %c0_3 = arith.constant 0 : index
    %c0_4 = arith.constant 0 : index
    %c0_5 = arith.constant 0 : index
    %c0_6 = arith.constant 0 : index
    %3 = vector.load %arg2[%c0_3, %c0_4, %c0_5, %c0_6] : memref<1x1x8x256xbf16, #tpu.memory_space<vmem>>, vector<1x1x8x256xbf16>
    %4 = vector.shape_cast %3 : vector<1x1x8x256xbf16> to vector<8x256xbf16>
    %5 = arith.extf %4 : vector<8x256xbf16> to vector<8x256xf32>
    %6 = vector.shape_cast %5 : vector<8x256xf32> to vector<1x8x256xf32>
    %7 = vector.extract_strided_slice %2 {offsets = [0, 0, 0], sizes = [7, 8, 256], strides = [1, 1, 1]} : vector<8x8x256xf32> to vector<7x8x256xf32>
    %8 = tpu.concatenate %6, %7 in 0 : vector<1x8x256xf32>, vector<7x8x256xf32> -> vector<8x8x256xf32>
    %9 = vector.extract_strided_slice %2 {offsets = [0, 0, 0], sizes = [8, 8, 64], strides = [1, 1, 1]} : vector<8x8x256xf32> to vector<8x8x64xf32>
    %10 = vector.extract_strided_slice %2 {offsets = [0, 0, 64], sizes = [8, 8, 64], strides = [1, 1, 1]} : vector<8x8x256xf32> to vector<8x8x64xf32>
    %11 = vector.extract_strided_slice %2 {offsets = [0, 0, 128], sizes = [8, 8, 64], strides = [1, 1, 1]} : vector<8x8x256xf32> to vector<8x8x64xf32>
    %12 = vector.extract_strided_slice %2 {offsets = [0, 0, 192], sizes = [8, 8, 64], strides = [1, 1, 1]} : vector<8x8x256xf32> to vector<8x8x64xf32>
    %13 = vector.extract_strided_slice %8 {offsets = [0, 0, 128], sizes = [8, 8, 64], strides = [1, 1, 1]} : vector<8x8x256xf32> to vector<8x8x64xf32>
    %14 = vector.extract_strided_slice %8 {offsets = [0, 0, 192], sizes = [8, 8, 64], strides = [1, 1, 1]} : vector<8x8x256xf32> to vector<8x8x64xf32>
    %c8_i32 = arith.constant 8 : i32
    %15 = arith.muli %arg1, %c8_i32 : i32
    %16 = tpu.iota {dimensions = array<i32: 0>} : vector<8x1x1xi32>
    %17 = vector.broadcast %15 : i32 to vector<8x1x1xi32>
    %18 = arith.addi %17, %16 : vector<8x1x1xi32>
    %c0_i32 = arith.constant 0 : i32
    %19 = vector.broadcast %c0_i32 : i32 to vector<8x1x1xi32>
    %20 = arith.cmpi eq, %18, %19 : vector<8x1x1xi32>
    %21 = vector.shape_cast %20 : vector<8x1x1xi1> to vector<8x1x1xi1>
    %22 = vector.broadcast %21 : vector<8x1x1xi1> to vector<8x8x64xi1>
    %23 = arith.select %22, %9, %13 : vector<8x8x64xi1>, vector<8x8x64xf32>
    %24 = vector.shape_cast %20 : vector<8x1x1xi1> to vector<8x1x1xi1>
    %25 = vector.broadcast %24 : vector<8x1x1xi1> to vector<8x8x64xi1>
    %26 = arith.select %25, %10, %14 : vector<8x8x64xi1>, vector<8x8x64xf32>
    %27 = vector.extract_strided_slice %23 {offsets = [0, 0, 0], sizes = [8, 1, 64], strides = [1, 1, 1]} : vector<8x8x64xf32> to vector<8x1x64xf32>
    %28 = vector.extract_strided_slice %26 {offsets = [0, 0, 0], sizes = [8, 7, 64], strides = [1, 1, 1]} : vector<8x8x64xf32> to vector<8x7x64xf32>
    %29 = tpu.concatenate %27, %28 in 1 : vector<8x1x64xf32>, vector<8x7x64xf32> -> vector<8x8x64xf32>
    %30 = vector.extract_strided_slice %9 {offsets = [0, 0, 0], sizes = [8, 1, 64], strides = [1, 1, 1]} : vector<8x8x64xf32> to vector<8x1x64xf32>
    %31 = vector.extract_strided_slice %10 {offsets = [0, 0, 0], sizes = [8, 7, 64], strides = [1, 1, 1]} : vector<8x8x64xf32> to vector<8x7x64xf32>
    %32 = tpu.concatenate %30, %31 in 1 : vector<8x1x64xf32>, vector<8x7x64xf32> -> vector<8x8x64xf32>
    %33 = vector.extract_strided_slice %11 {offsets = [0, 0, 0], sizes = [8, 1, 64], strides = [1, 1, 1]} : vector<8x8x64xf32> to vector<8x1x64xf32>
    %34 = vector.extract_strided_slice %12 {offsets = [0, 0, 0], sizes = [8, 7, 64], strides = [1, 1, 1]} : vector<8x8x64xf32> to vector<8x7x64xf32>
    %35 = tpu.concatenate %33, %34 in 1 : vector<8x1x64xf32>, vector<8x7x64xf32> -> vector<8x8x64xf32>
    %36 = arith.addf %29, %23 : vector<8x8x64xf32>
    %37 = arith.addf %36, %32 : vector<8x8x64xf32>
    %38 = arith.addf %37, %9 : vector<8x8x64xf32>
    %cst = arith.constant 2.500000e-01 : f32
    %39 = vector.broadcast %cst : f32 to vector<8x8x64xf32>
    %40 = arith.mulf %38, %39 : vector<8x8x64xf32>
    %41 = arith.addf %23, %26 : vector<8x8x64xf32>
    %42 = arith.addf %41, %9 : vector<8x8x64xf32>
    %43 = arith.addf %42, %10 : vector<8x8x64xf32>
    %cst_7 = arith.constant 2.500000e-01 : f32
    %44 = vector.broadcast %cst_7 : f32 to vector<8x8x64xf32>
    %45 = arith.mulf %43, %44 : vector<8x8x64xf32>
    %46 = arith.addf %32, %9 : vector<8x8x64xf32>
    %47 = arith.addf %46, %35 : vector<8x8x64xf32>
    %48 = arith.addf %47, %11 : vector<8x8x64xf32>
    %cst_8 = arith.constant 2.500000e-01 : f32
    %49 = vector.broadcast %cst_8 : f32 to vector<8x8x64xf32>
    %50 = arith.mulf %48, %49 : vector<8x8x64xf32>
    %51 = arith.addf %9, %10 : vector<8x8x64xf32>
    %52 = arith.addf %51, %11 : vector<8x8x64xf32>
    %53 = arith.addf %52, %12 : vector<8x8x64xf32>
    %cst_9 = arith.constant 2.500000e-01 : f32
    %54 = vector.broadcast %cst_9 : f32 to vector<8x8x64xf32>
    %55 = arith.mulf %53, %54 : vector<8x8x64xf32>
    %56 = tpu.concatenate %40, %45 in 2 : vector<8x8x64xf32>, vector<8x8x64xf32> -> vector<8x8x128xf32>
    %57 = tpu.concatenate %50, %55 in 2 : vector<8x8x64xf32>, vector<8x8x64xf32> -> vector<8x8x128xf32>
    %58 = vector.extract_strided_slice %56 {offsets = [0, 0, 0], sizes = [1, 8, 128], strides = [1, 1, 1]} : vector<8x8x128xf32> to vector<1x8x128xf32>
    %59 = vector.shape_cast %58 : vector<1x8x128xf32> to vector<8x128xf32>
    %60 = arith.truncf %59 : vector<8x128xf32> to vector<8x128xbf16>
    %c0_10 = arith.constant 0 : index
    %c0_11 = arith.constant 0 : index
    %c0_12 = arith.constant 0 : index
    %c0_13 = arith.constant 0 : index
    %61 = vector.load %arg4[%c0_10, %c0_11, %c0_12, %c0_13] : memref<1x16x8x128xbf16, #tpu.memory_space<vmem>>, vector<1x1x8x128xbf16>
    %62 = vector.shape_cast %61 : vector<1x1x8x128xbf16> to vector<8x128xbf16>
    %63 = vector.shape_cast %60 : vector<8x128xbf16> to vector<1x1x8x128xbf16>
    tpu.vector_store %arg4[%c0_10, %c0_11, %c0_12, %c0_13], %63 {strides = array<i32>} : memref<1x16x8x128xbf16, #tpu.memory_space<vmem>>, vector<1x1x8x128xbf16>,
    %64 = vector.extract_strided_slice %57 {offsets = [0, 0, 0], sizes = [1, 8, 128], strides = [1, 1, 1]} : vector<8x8x128xf32> to vector<1x8x128xf32>
    %65 = vector.shape_cast %64 : vector<1x8x128xf32> to vector<8x128xf32>
    %66 = arith.truncf %65 : vector<8x128xf32> to vector<8x128xbf16>
    %c0_14 = arith.constant 0 : index
    %c1 = arith.constant 1 : index
    %c0_15 = arith.constant 0 : index
    %c0_16 = arith.constant 0 : index
    %67 = vector.load %arg4[%c0_14, %c1, %c0_15, %c0_16] : memref<1x16x8x128xbf16, #tpu.memory_space<vmem>>, vector<1x1x8x128xbf16>
    %68 = vector.shape_cast %67 : vector<1x1x8x128xbf16> to vector<8x128xbf16>
    %69 = vector.shape_cast %66 : vector<8x128xbf16> to vector<1x1x8x128xbf16>
    tpu.vector_store %arg4[%c0_14, %c1, %c0_15, %c0_16], %69 {strides = array<i32>} : memref<1x16x8x128xbf16, #tpu.memory_space<vmem>>, vector<1x1x8x128xbf16>,
    %70 = vector.extract_strided_slice %56 {offsets = [1, 0, 0], sizes = [1, 8, 128], strides = [1, 1, 1]} : vector<8x8x128xf32> to vector<1x8x128xf32>
    %71 = vector.shape_cast %70 : vector<1x8x128xf32> to vector<8x128xf32>
    %72 = arith.truncf %71 : vector<8x128xf32> to vector<8x128xbf16>
    %c0_17 = arith.constant 0 : index
    %c2 = arith.constant 2 : index
    %c0_18 = arith.constant 0 : index
    %c0_19 = arith.constant 0 : index
    %73 = vector.load %arg4[%c0_17, %c2, %c0_18, %c0_19] : memref<1x16x8x128xbf16, #tpu.memory_space<vmem>>, vector<1x1x8x128xbf16>
    %74 = vector.shape_cast %73 : vector<1x1x8x128xbf16> to vector<8x128xbf16>
    %75 = vector.shape_cast %72 : vector<8x128xbf16> to vector<1x1x8x128xbf16>
    tpu.vector_store %arg4[%c0_17, %c2, %c0_18, %c0_19], %75 {strides = array<i32>} : memref<1x16x8x128xbf16, #tpu.memory_space<vmem>>, vector<1x1x8x128xbf16>,
    %76 = vector.extract_strided_slice %57 {offsets = [1, 0, 0], sizes = [1, 8, 128], strides = [1, 1, 1]} : vector<8x8x128xf32> to vector<1x8x128xf32>
    %77 = vector.shape_cast %76 : vector<1x8x128xf32> to vector<8x128xf32>
    %78 = arith.truncf %77 : vector<8x128xf32> to vector<8x128xbf16>
    %c0_20 = arith.constant 0 : index
    %c3 = arith.constant 3 : index
    %c0_21 = arith.constant 0 : index
    %c0_22 = arith.constant 0 : index
    %79 = vector.load %arg4[%c0_20, %c3, %c0_21, %c0_22] : memref<1x16x8x128xbf16, #tpu.memory_space<vmem>>, vector<1x1x8x128xbf16>
    %80 = vector.shape_cast %79 : vector<1x1x8x128xbf16> to vector<8x128xbf16>
    %81 = vector.shape_cast %78 : vector<8x128xbf16> to vector<1x1x8x128xbf16>
    tpu.vector_store %arg4[%c0_20, %c3, %c0_21, %c0_22], %81 {strides = array<i32>} : memref<1x16x8x128xbf16, #tpu.memory_space<vmem>>, vector<1x1x8x128xbf16>,
    %82 = vector.extract_strided_slice %56 {offsets = [2, 0, 0], sizes = [1, 8, 128], strides = [1, 1, 1]} : vector<8x8x128xf32> to vector<1x8x128xf32>
    %83 = vector.shape_cast %82 : vector<1x8x128xf32> to vector<8x128xf32>
    %84 = arith.truncf %83 : vector<8x128xf32> to vector<8x128xbf16>
    %c0_23 = arith.constant 0 : index
    %c4 = arith.constant 4 : index
    %c0_24 = arith.constant 0 : index
    %c0_25 = arith.constant 0 : index
    %85 = vector.load %arg4[%c0_23, %c4, %c0_24, %c0_25] : memref<1x16x8x128xbf16, #tpu.memory_space<vmem>>, vector<1x1x8x128xbf16>
    %86 = vector.shape_cast %85 : vector<1x1x8x128xbf16> to vector<8x128xbf16>
    %87 = vector.shape_cast %84 : vector<8x128xbf16> to vector<1x1x8x128xbf16>
    tpu.vector_store %arg4[%c0_23, %c4, %c0_24, %c0_25], %87 {strides = array<i32>} : memref<1x16x8x128xbf16, #tpu.memory_space<vmem>>, vector<1x1x8x128xbf16>,
    %88 = vector.extract_strided_slice %57 {offsets = [2, 0, 0], sizes = [1, 8, 128], strides = [1, 1, 1]} : vector<8x8x128xf32> to vector<1x8x128xf32>
    %89 = vector.shape_cast %88 : vector<1x8x128xf32> to vector<8x128xf32>
    %90 = arith.truncf %89 : vector<8x128xf32> to vector<8x128xbf16>
    %c0_26 = arith.constant 0 : index
    %c5 = arith.constant 5 : index
    %c0_27 = arith.constant 0 : index
    %c0_28 = arith.constant 0 : index
    %91 = vector.load %arg4[%c0_26, %c5, %c0_27, %c0_28] : memref<1x16x8x128xbf16, #tpu.memory_space<vmem>>, vector<1x1x8x128xbf16>
    %92 = vector.shape_cast %91 : vector<1x1x8x128xbf16> to vector<8x128xbf16>
    %93 = vector.shape_cast %90 : vector<8x128xbf16> to vector<1x1x8x128xbf16>
    tpu.vector_store %arg4[%c0_26, %c5, %c0_27, %c0_28], %93 {strides = array<i32>} : memref<1x16x8x128xbf16, #tpu.memory_space<vmem>>, vector<1x1x8x128xbf16>,
    %94 = vector.extract_strided_slice %56 {offsets = [3, 0, 0], sizes = [1, 8, 128], strides = [1, 1, 1]} : vector<8x8x128xf32> to vector<1x8x128xf32>
    %95 = vector.shape_cast %94 : vector<1x8x128xf32> to vector<8x128xf32>
    %96 = arith.truncf %95 : vector<8x128xf32> to vector<8x128xbf16>
    %c0_29 = arith.constant 0 : index
    %c6 = arith.constant 6 : index
    %c0_30 = arith.constant 0 : index
    %c0_31 = arith.constant 0 : index
    %97 = vector.load %arg4[%c0_29, %c6, %c0_30, %c0_31] : memref<1x16x8x128xbf16, #tpu.memory_space<vmem>>, vector<1x1x8x128xbf16>
    %98 = vector.shape_cast %97 : vector<1x1x8x128xbf16> to vector<8x128xbf16>
    %99 = vector.shape_cast %96 : vector<8x128xbf16> to vector<1x1x8x128xbf16>
    tpu.vector_store %arg4[%c0_29, %c6, %c0_30, %c0_31], %99 {strides = array<i32>} : memref<1x16x8x128xbf16, #tpu.memory_space<vmem>>, vector<1x1x8x128xbf16>,
    %100 = vector.extract_strided_slice %57 {offsets = [3, 0, 0], sizes = [1, 8, 128], strides = [1, 1, 1]} : vector<8x8x128xf32> to vector<1x8x128xf32>
    %101 = vector.shape_cast %100 : vector<1x8x128xf32> to vector<8x128xf32>
    %102 = arith.truncf %101 : vector<8x128xf32> to vector<8x128xbf16>
    %c0_32 = arith.constant 0 : index
    %c7 = arith.constant 7 : index
    %c0_33 = arith.constant 0 : index
    %c0_34 = arith.constant 0 : index
    %103 = vector.load %arg4[%c0_32, %c7, %c0_33, %c0_34] : memref<1x16x8x128xbf16, #tpu.memory_space<vmem>>, vector<1x1x8x128xbf16>
    %104 = vector.shape_cast %103 : vector<1x1x8x128xbf16> to vector<8x128xbf16>
    %105 = vector.shape_cast %102 : vector<8x128xbf16> to vector<1x1x8x128xbf16>
    tpu.vector_store %arg4[%c0_32, %c7, %c0_33, %c0_34], %105 {strides = array<i32>} : memref<1x16x8x128xbf16, #tpu.memory_space<vmem>>, vector<1x1x8x128xbf16>,
    %106 = vector.extract_strided_slice %56 {offsets = [4, 0, 0], sizes = [1, 8, 128], strides = [1, 1, 1]} : vector<8x8x128xf32> to vector<1x8x128xf32>
    %107 = vector.shape_cast %106 : vector<1x8x128xf32> to vector<8x128xf32>
    %108 = arith.truncf %107 : vector<8x128xf32> to vector<8x128xbf16>
    %c0_35 = arith.constant 0 : index
    %c8 = arith.constant 8 : index
    %c0_36 = arith.constant 0 : index
    %c0_37 = arith.constant 0 : index
    %109 = vector.load %arg4[%c0_35, %c8, %c0_36, %c0_37] : memref<1x16x8x128xbf16, #tpu.memory_space<vmem>>, vector<1x1x8x128xbf16>
    %110 = vector.shape_cast %109 : vector<1x1x8x128xbf16> to vector<8x128xbf16>
    %111 = vector.shape_cast %108 : vector<8x128xbf16> to vector<1x1x8x128xbf16>
    tpu.vector_store %arg4[%c0_35, %c8, %c0_36, %c0_37], %111 {strides = array<i32>} : memref<1x16x8x128xbf16, #tpu.memory_space<vmem>>, vector<1x1x8x128xbf16>,
    %112 = vector.extract_strided_slice %57 {offsets = [4, 0, 0], sizes = [1, 8, 128], strides = [1, 1, 1]} : vector<8x8x128xf32> to vector<1x8x128xf32>
    %113 = vector.shape_cast %112 : vector<1x8x128xf32> to vector<8x128xf32>
    %114 = arith.truncf %113 : vector<8x128xf32> to vector<8x128xbf16>
    %c0_38 = arith.constant 0 : index
    %c9 = arith.constant 9 : index
    %c0_39 = arith.constant 0 : index
    %c0_40 = arith.constant 0 : index
    %115 = vector.load %arg4[%c0_38, %c9, %c0_39, %c0_40] : memref<1x16x8x128xbf16, #tpu.memory_space<vmem>>, vector<1x1x8x128xbf16>
    %116 = vector.shape_cast %115 : vector<1x1x8x128xbf16> to vector<8x128xbf16>
    %117 = vector.shape_cast %114 : vector<8x128xbf16> to vector<1x1x8x128xbf16>
    tpu.vector_store %arg4[%c0_38, %c9, %c0_39, %c0_40], %117 {strides = array<i32>} : memref<1x16x8x128xbf16, #tpu.memory_space<vmem>>, vector<1x1x8x128xbf16>,
    %118 = vector.extract_strided_slice %56 {offsets = [5, 0, 0], sizes = [1, 8, 128], strides = [1, 1, 1]} : vector<8x8x128xf32> to vector<1x8x128xf32>
    %119 = vector.shape_cast %118 : vector<1x8x128xf32> to vector<8x128xf32>
    %120 = arith.truncf %119 : vector<8x128xf32> to vector<8x128xbf16>
    %c0_41 = arith.constant 0 : index
    %c10 = arith.constant 10 : index
    %c0_42 = arith.constant 0 : index
    %c0_43 = arith.constant 0 : index
    %121 = vector.load %arg4[%c0_41, %c10, %c0_42, %c0_43] : memref<1x16x8x128xbf16, #tpu.memory_space<vmem>>, vector<1x1x8x128xbf16>
    %122 = vector.shape_cast %121 : vector<1x1x8x128xbf16> to vector<8x128xbf16>
    %123 = vector.shape_cast %120 : vector<8x128xbf16> to vector<1x1x8x128xbf16>
    tpu.vector_store %arg4[%c0_41, %c10, %c0_42, %c0_43], %123 {strides = array<i32>} : memref<1x16x8x128xbf16, #tpu.memory_space<vmem>>, vector<1x1x8x128xbf16>,
    %124 = vector.extract_strided_slice %57 {offsets = [5, 0, 0], sizes = [1, 8, 128], strides = [1, 1, 1]} : vector<8x8x128xf32> to vector<1x8x128xf32>
    %125 = vector.shape_cast %124 : vector<1x8x128xf32> to vector<8x128xf32>
    %126 = arith.truncf %125 : vector<8x128xf32> to vector<8x128xbf16>
    %c0_44 = arith.constant 0 : index
    %c11 = arith.constant 11 : index
    %c0_45 = arith.constant 0 : index
    %c0_46 = arith.constant 0 : index
    %127 = vector.load %arg4[%c0_44, %c11, %c0_45, %c0_46] : memref<1x16x8x128xbf16, #tpu.memory_space<vmem>>, vector<1x1x8x128xbf16>
    %128 = vector.shape_cast %127 : vector<1x1x8x128xbf16> to vector<8x128xbf16>
    %129 = vector.shape_cast %126 : vector<8x128xbf16> to vector<1x1x8x128xbf16>
    tpu.vector_store %arg4[%c0_44, %c11, %c0_45, %c0_46], %129 {strides = array<i32>} : memref<1x16x8x128xbf16, #tpu.memory_space<vmem>>, vector<1x1x8x128xbf16>,
    %130 = vector.extract_strided_slice %56 {offsets = [6, 0, 0], sizes = [1, 8, 128], strides = [1, 1, 1]} : vector<8x8x128xf32> to vector<1x8x128xf32>
    %131 = vector.shape_cast %130 : vector<1x8x128xf32> to vector<8x128xf32>
    %132 = arith.truncf %131 : vector<8x128xf32> to vector<8x128xbf16>
    %c0_47 = arith.constant 0 : index
    %c12 = arith.constant 12 : index
    %c0_48 = arith.constant 0 : index
    %c0_49 = arith.constant 0 : index
    %133 = vector.load %arg4[%c0_47, %c12, %c0_48, %c0_49] : memref<1x16x8x128xbf16, #tpu.memory_space<vmem>>, vector<1x1x8x128xbf16>
    %134 = vector.shape_cast %133 : vector<1x1x8x128xbf16> to vector<8x128xbf16>
    %135 = vector.shape_cast %132 : vector<8x128xbf16> to vector<1x1x8x128xbf16>
    tpu.vector_store %arg4[%c0_47, %c12, %c0_48, %c0_49], %135 {strides = array<i32>} : memref<1x16x8x128xbf16, #tpu.memory_space<vmem>>, vector<1x1x8x128xbf16>,
    %136 = vector.extract_strided_slice %57 {offsets = [6, 0, 0], sizes = [1, 8, 128], strides = [1, 1, 1]} : vector<8x8x128xf32> to vector<1x8x128xf32>
    %137 = vector.shape_cast %136 : vector<1x8x128xf32> to vector<8x128xf32>
    %138 = arith.truncf %137 : vector<8x128xf32> to vector<8x128xbf16>
    %c0_50 = arith.constant 0 : index
    %c13 = arith.constant 13 : index
    %c0_51 = arith.constant 0 : index
    %c0_52 = arith.constant 0 : index
    %139 = vector.load %arg4[%c0_50, %c13, %c0_51, %c0_52] : memref<1x16x8x128xbf16, #tpu.memory_space<vmem>>, vector<1x1x8x128xbf16>
    %140 = vector.shape_cast %139 : vector<1x1x8x128xbf16> to vector<8x128xbf16>
    %141 = vector.shape_cast %138 : vector<8x128xbf16> to vector<1x1x8x128xbf16>
    tpu.vector_store %arg4[%c0_50, %c13, %c0_51, %c0_52], %141 {strides = array<i32>} : memref<1x16x8x128xbf16, #tpu.memory_space<vmem>>, vector<1x1x8x128xbf16>,
    %142 = vector.extract_strided_slice %56 {offsets = [7, 0, 0], sizes = [1, 8, 128], strides = [1, 1, 1]} : vector<8x8x128xf32> to vector<1x8x128xf32>
    %143 = vector.shape_cast %142 : vector<1x8x128xf32> to vector<8x128xf32>
    %144 = arith.truncf %143 : vector<8x128xf32> to vector<8x128xbf16>
    %c0_53 = arith.constant 0 : index
    %c14 = arith.constant 14 : index
    %c0_54 = arith.constant 0 : index
    %c0_55 = arith.constant 0 : index
    %145 = vector.load %arg4[%c0_53, %c14, %c0_54, %c0_55] : memref<1x16x8x128xbf16, #tpu.memory_space<vmem>>, vector<1x1x8x128xbf16>
    %146 = vector.shape_cast %145 : vector<1x1x8x128xbf16> to vector<8x128xbf16>
    %147 = vector.shape_cast %144 : vector<8x128xbf16> to vector<1x1x8x128xbf16>
    tpu.vector_store %arg4[%c0_53, %c14, %c0_54, %c0_55], %147 {strides = array<i32>} : memref<1x16x8x128xbf16, #tpu.memory_space<vmem>>, vector<1x1x8x128xbf16>,
    %148 = vector.extract_strided_slice %57 {offsets = [7, 0, 0], sizes = [1, 8, 128], strides = [1, 1, 1]} : vector<8x8x128xf32> to vector<1x8x128xf32>
    %149 = vector.shape_cast %148 : vector<1x8x128xf32> to vector<8x128xf32>
    %150 = arith.truncf %149 : vector<8x128xf32> to vector<8x128xbf16>
    %c0_56 = arith.constant 0 : index
    %c15 = arith.constant 15 : index
    %c0_57 = arith.constant 0 : index
    %c0_58 = arith.constant 0 : index
    %151 = vector.load %arg4[%c0_56, %c15, %c0_57, %c0_58] : memref<1x16x8x128xbf16, #tpu.memory_space<vmem>>, vector<1x1x8x128xbf16>
    %152 = vector.shape_cast %151 : vector<1x1x8x128xbf16> to vector<8x128xbf16>
    %153 = vector.shape_cast %150 : vector<8x128xbf16> to vector<1x1x8x128xbf16>
    tpu.vector_store %arg4[%c0_56, %c15, %c0_57, %c0_58], %153 {strides = array<i32>} : memref<1x16x8x128xbf16, #tpu.memory_space<vmem>>, vector<1x1x8x128xbf16>,
    return
  }
  func.func @transform_0(%arg0: i32, %arg1: i32) -> (i32, i32, i32, i32) {
    %c8_i32 = arith.constant 8 : i32
    %0 = arith.muli %arg1, %c8_i32 : i32
    %c1_i32 = arith.constant 1 : i32
    %1 = arith.subi %0, %c1_i32 : i32
    %c0_i32 = arith.constant 0 : i32
    %2 = arith.maxsi %1, %c0_i32 : i32
    %c0_i32_0 = arith.constant 0 : i32
    %c0_i32_1 = arith.constant 0 : i32
    %c0_i32_2 = arith.constant 0 : i32
    return %arg0, %2, %c0_i32_0, %c0_i32_1 : i32, i32, i32, i32
  }
  func.func @transform_1(%arg0: i32, %arg1: i32) -> (i32, i32, i32, i32) {
    %c0_i32 = arith.constant 0 : i32
    %c0_i32_0 = arith.constant 0 : i32
    %c0_i32_1 = arith.constant 0 : i32
    return %arg0, %arg1, %c0_i32, %c0_i32_0 : i32, i32, i32, i32
  }
  func.func @transform_2(%arg0: i32, %arg1: i32) -> (i32, i32, i32, i32) {
    %c0_i32 = arith.constant 0 : i32
    %c0_i32_0 = arith.constant 0 : i32
    %c0_i32_1 = arith.constant 0 : i32
    return %arg0, %arg1, %c0_i32, %c0_i32_0 : i32, i32, i32, i32
  }
}

module attributes {stable_mosaic.version = 11 : i64} {
  func.func @_dwpw_sub_kernel(%arg0: i32, %arg1: i32, %arg2: memref<1x1x8x128xf32, #tpu.memory_space<vmem>>, %arg3: memref<1x16x8x128xf32, #tpu.memory_space<vmem>>, %arg4: memref<1x1x8x128xf32, #tpu.memory_space<vmem>>, %arg5: memref<1x1x8x128xbf16, #tpu.memory_space<vmem>>, %arg6: memref<1x16x8x128xbf16, #tpu.memory_space<vmem>>, %arg7: memref<1x1x8x128xbf16, #tpu.memory_space<vmem>>, %arg8: memref<9x128xf32, #tpu.memory_space<vmem>>, %arg9: memref<128x128xbf16, #tpu.memory_space<vmem>>, %arg10: memref<1x16x8x128xbf16, #tpu.memory_space<vmem>>, %arg11: memref<1x1x2x128xf32, #tpu.memory_space<vmem>>) attributes {dimension_semantics = [#tpu.dimension_semantics<parallel>, #tpu.dimension_semantics<parallel>], iteration_bounds = array<i64: 2, 1>, scalar_prefetch = 0 : i64, scratch_operands = 0 : i64, tpu.core_type = #tpu.core_type<tc>, window_params = [{transform_indices = @transform_0, window_bounds = array<i64: 1, 1, 8, 128>}, {transform_indices = @transform_1, window_bounds = array<i64: 1, 16, 8, 128>}, {transform_indices = @transform_2, window_bounds = array<i64: 1, 1, 8, 128>}, {transform_indices = @transform_3, window_bounds = array<i64: 1, 1, 8, 128>}, {transform_indices = @transform_4, window_bounds = array<i64: 1, 16, 8, 128>}, {transform_indices = @transform_5, window_bounds = array<i64: 1, 1, 8, 128>}, {pipeline_mode = #tpu.pipeline_mode<synchronous>, transform_indices = @transform_6, window_bounds = array<i64: 9, 128>}, {pipeline_mode = #tpu.pipeline_mode<synchronous>, transform_indices = @transform_7, window_bounds = array<i64: 128, 128>}, {transform_indices = @transform_8, window_bounds = array<i64: 1, 16, 8, 128>}, {transform_indices = @transform_9, window_bounds = array<i64: 1, 1, 2, 128>}]} {
    %c0 = arith.constant 0 : index
    %c0_0 = arith.constant 0 : index
    %c0_1 = arith.constant 0 : index
    %c0_2 = arith.constant 0 : index
    %0 = vector.load %arg2[%c0, %c0_0, %c0_1, %c0_2] : memref<1x1x8x128xf32, #tpu.memory_space<vmem>>, vector<1x1x8x128xf32>
    %1 = vector.shape_cast %0 : vector<1x1x8x128xf32> to vector<8x128xf32>
    %c0_3 = arith.constant 0 : index
    %c0_4 = arith.constant 0 : index
    %c0_5 = arith.constant 0 : index
    %c0_6 = arith.constant 0 : index
    %2 = vector.load %arg5[%c0_3, %c0_4, %c0_5, %c0_6] : memref<1x1x8x128xbf16, #tpu.memory_space<vmem>>, vector<1x1x8x128xbf16>
    %3 = vector.shape_cast %2 : vector<1x1x8x128xbf16> to vector<8x128xbf16>
    %4 = arith.extf %3 : vector<8x128xbf16> to vector<8x128xf32>
    %5 = arith.subf %1, %4 : vector<8x128xf32>
    %c0_7 = arith.constant 0 : index
    %c0_8 = arith.constant 0 : index
    %c0_9 = arith.constant 0 : index
    %c0_10 = arith.constant 0 : index
    %6 = vector.load %arg4[%c0_7, %c0_8, %c0_9, %c0_10] : memref<1x1x8x128xf32, #tpu.memory_space<vmem>>, vector<1x1x8x128xf32>
    %7 = vector.shape_cast %6 : vector<1x1x8x128xf32> to vector<8x128xf32>
    %c0_11 = arith.constant 0 : index
    %c0_12 = arith.constant 0 : index
    %c0_13 = arith.constant 0 : index
    %c0_14 = arith.constant 0 : index
    %8 = vector.load %arg7[%c0_11, %c0_12, %c0_13, %c0_14] : memref<1x1x8x128xbf16, #tpu.memory_space<vmem>>, vector<1x1x8x128xbf16>
    %9 = vector.shape_cast %8 : vector<1x1x8x128xbf16> to vector<8x128xbf16>
    %10 = arith.extf %9 : vector<8x128xbf16> to vector<8x128xf32>
    %11 = arith.subf %7, %10 : vector<8x128xf32>
    %c0_15 = arith.constant 0 : index
    %c0_16 = arith.constant 0 : index
    %c0_17 = arith.constant 0 : index
    %c0_18 = arith.constant 0 : index
    %12 = vector.load %arg3[%c0_15, %c0_16, %c0_17, %c0_18] : memref<1x16x8x128xf32, #tpu.memory_space<vmem>>, vector<1x16x8x128xf32>
    %13 = vector.shape_cast %12 : vector<1x16x8x128xf32> to vector<16x8x128xf32>
    %c0_19 = arith.constant 0 : index
    %c0_20 = arith.constant 0 : index
    %c0_21 = arith.constant 0 : index
    %c0_22 = arith.constant 0 : index
    %14 = vector.load %arg6[%c0_19, %c0_20, %c0_21, %c0_22] : memref<1x16x8x128xbf16, #tpu.memory_space<vmem>>, vector<1x16x8x128xbf16>
    %15 = vector.shape_cast %14 : vector<1x16x8x128xbf16> to vector<16x8x128xbf16>
    %16 = arith.extf %15 : vector<16x8x128xbf16> to vector<16x8x128xf32>
    %17 = arith.subf %13, %16 : vector<16x8x128xf32>
    %c0_i32 = arith.constant 0 : i32
    %18 = arith.cmpi eq, %arg1, %c0_i32 : i32
    %cst = arith.constant 0.000000e+00 : f32
    %19 = vector.broadcast %cst : f32 to vector<8x128xf32>
    %20 = arith.select %18, %19, %5 : vector<8x128xf32>
    %c0_i32_23 = arith.constant 0 : i32
    %21 = arith.cmpi eq, %arg1, %c0_i32_23 : i32
    %cst_24 = arith.constant 0.000000e+00 : f32
    %22 = vector.broadcast %cst_24 : f32 to vector<8x128xf32>
    %23 = arith.select %21, %22, %11 : vector<8x128xf32>
    %24 = vector.shape_cast %20 : vector<8x128xf32> to vector<1x8x128xf32>
    %25 = vector.shape_cast %23 : vector<8x128xf32> to vector<1x8x128xf32>
    %26 = tpu.concatenate %24, %17, %25 in 0 : vector<1x8x128xf32>, vector<16x8x128xf32>, vector<1x8x128xf32> -> vector<18x8x128xf32>
    %c0_25 = arith.constant 0 : index
    %c0_26 = arith.constant 0 : index
    %27 = vector.load %arg8[%c0_25, %c0_26] : memref<9x128xf32, #tpu.memory_space<vmem>>, vector<9x128xf32>
    %cst_27 = arith.constant 0.000000e+00 : f32
    %28 = vector.broadcast %cst_27 : f32 to vector<16x1x64xf32>
    %cst_28 = arith.constant 0.000000e+00 : f32
    %29 = vector.broadcast %cst_28 : f32 to vector<16x8x128xf32>
    %30 = vector.extract_strided_slice %26 {offsets = [0, 0, 0], sizes = [16, 8, 128], strides = [1, 1, 1]} : vector<18x8x128xf32> to vector<16x8x128xf32>
    %31 = vector.extract_strided_slice %30 {offsets = [0, 0, 0], sizes = [16, 8, 64], strides = [1, 1, 1]} : vector<16x8x128xf32> to vector<16x8x64xf32>
    %32 = vector.extract_strided_slice %30 {offsets = [0, 0, 64], sizes = [16, 8, 64], strides = [1, 1, 1]} : vector<16x8x128xf32> to vector<16x8x64xf32>
    %33 = vector.extract_strided_slice %32 {offsets = [0, 0, 0], sizes = [16, 7, 64], strides = [1, 1, 1]} : vector<16x8x64xf32> to vector<16x7x64xf32>
    %34 = tpu.concatenate %28, %33 in 1 : vector<16x1x64xf32>, vector<16x7x64xf32> -> vector<16x8x64xf32>
    %35 = vector.extract_strided_slice %31 {offsets = [0, 1, 0], sizes = [16, 7, 64], strides = [1, 1, 1]} : vector<16x8x64xf32> to vector<16x7x64xf32>
    %36 = tpu.concatenate %35, %28 in 1 : vector<16x7x64xf32>, vector<16x1x64xf32> -> vector<16x8x64xf32>
    %37 = tpu.concatenate %34, %31 in 2 : vector<16x8x64xf32>, vector<16x8x64xf32> -> vector<16x8x128xf32>
    %38 = tpu.concatenate %32, %36 in 2 : vector<16x8x64xf32>, vector<16x8x64xf32> -> vector<16x8x128xf32>
    %39 = vector.extract_strided_slice %27 {offsets = [0, 0], sizes = [1, 128], strides = [1, 1]} : vector<9x128xf32> to vector<1x128xf32>
    %40 = vector.shape_cast %39 : vector<1x128xf32> to vector<1x1x128xf32>
    %41 = vector.extract_strided_slice %27 {offsets = [1, 0], sizes = [1, 128], strides = [1, 1]} : vector<9x128xf32> to vector<1x128xf32>
    %42 = vector.shape_cast %41 : vector<1x128xf32> to vector<1x1x128xf32>
    %43 = vector.extract_strided_slice %27 {offsets = [2, 0], sizes = [1, 128], strides = [1, 1]} : vector<9x128xf32> to vector<1x128xf32>
    %44 = vector.shape_cast %43 : vector<1x128xf32> to vector<1x1x128xf32>
    %45 = vector.broadcast %40 : vector<1x1x128xf32> to vector<16x8x128xf32>
    %46 = arith.mulf %37, %45 : vector<16x8x128xf32>
    %47 = arith.addf %29, %46 : vector<16x8x128xf32>
    %48 = vector.broadcast %42 : vector<1x1x128xf32> to vector<16x8x128xf32>
    %49 = arith.mulf %30, %48 : vector<16x8x128xf32>
    %50 = arith.addf %47, %49 : vector<16x8x128xf32>
    %51 = vector.broadcast %44 : vector<1x1x128xf32> to vector<16x8x128xf32>
    %52 = arith.mulf %38, %51 : vector<16x8x128xf32>
    %53 = arith.addf %50, %52 : vector<16x8x128xf32>
    %54 = vector.extract_strided_slice %26 {offsets = [1, 0, 0], sizes = [16, 8, 128], strides = [1, 1, 1]} : vector<18x8x128xf32> to vector<16x8x128xf32>
    %55 = vector.extract_strided_slice %54 {offsets = [0, 0, 0], sizes = [16, 8, 64], strides = [1, 1, 1]} : vector<16x8x128xf32> to vector<16x8x64xf32>
    %56 = vector.extract_strided_slice %54 {offsets = [0, 0, 64], sizes = [16, 8, 64], strides = [1, 1, 1]} : vector<16x8x128xf32> to vector<16x8x64xf32>
    %57 = vector.extract_strided_slice %56 {offsets = [0, 0, 0], sizes = [16, 7, 64], strides = [1, 1, 1]} : vector<16x8x64xf32> to vector<16x7x64xf32>
    %58 = tpu.concatenate %28, %57 in 1 : vector<16x1x64xf32>, vector<16x7x64xf32> -> vector<16x8x64xf32>
    %59 = vector.extract_strided_slice %55 {offsets = [0, 1, 0], sizes = [16, 7, 64], strides = [1, 1, 1]} : vector<16x8x64xf32> to vector<16x7x64xf32>
    %60 = tpu.concatenate %59, %28 in 1 : vector<16x7x64xf32>, vector<16x1x64xf32> -> vector<16x8x64xf32>
    %61 = tpu.concatenate %58, %55 in 2 : vector<16x8x64xf32>, vector<16x8x64xf32> -> vector<16x8x128xf32>
    %62 = tpu.concatenate %56, %60 in 2 : vector<16x8x64xf32>, vector<16x8x64xf32> -> vector<16x8x128xf32>
    %63 = vector.extract_strided_slice %27 {offsets = [3, 0], sizes = [1, 128], strides = [1, 1]} : vector<9x128xf32> to vector<1x128xf32>
    %64 = vector.shape_cast %63 : vector<1x128xf32> to vector<1x1x128xf32>
    %65 = vector.extract_strided_slice %27 {offsets = [4, 0], sizes = [1, 128], strides = [1, 1]} : vector<9x128xf32> to vector<1x128xf32>
    %66 = vector.shape_cast %65 : vector<1x128xf32> to vector<1x1x128xf32>
    %67 = vector.extract_strided_slice %27 {offsets = [5, 0], sizes = [1, 128], strides = [1, 1]} : vector<9x128xf32> to vector<1x128xf32>
    %68 = vector.shape_cast %67 : vector<1x128xf32> to vector<1x1x128xf32>
    %69 = vector.broadcast %64 : vector<1x1x128xf32> to vector<16x8x128xf32>
    %70 = arith.mulf %61, %69 : vector<16x8x128xf32>
    %71 = arith.addf %53, %70 : vector<16x8x128xf32>
    %72 = vector.broadcast %66 : vector<1x1x128xf32> to vector<16x8x128xf32>
    %73 = arith.mulf %54, %72 : vector<16x8x128xf32>
    %74 = arith.addf %71, %73 : vector<16x8x128xf32>
    %75 = vector.broadcast %68 : vector<1x1x128xf32> to vector<16x8x128xf32>
    %76 = arith.mulf %62, %75 : vector<16x8x128xf32>
    %77 = arith.addf %74, %76 : vector<16x8x128xf32>
    %78 = vector.extract_strided_slice %26 {offsets = [2, 0, 0], sizes = [16, 8, 128], strides = [1, 1, 1]} : vector<18x8x128xf32> to vector<16x8x128xf32>
    %79 = vector.extract_strided_slice %78 {offsets = [0, 0, 0], sizes = [16, 8, 64], strides = [1, 1, 1]} : vector<16x8x128xf32> to vector<16x8x64xf32>
    %80 = vector.extract_strided_slice %78 {offsets = [0, 0, 64], sizes = [16, 8, 64], strides = [1, 1, 1]} : vector<16x8x128xf32> to vector<16x8x64xf32>
    %81 = vector.extract_strided_slice %80 {offsets = [0, 0, 0], sizes = [16, 7, 64], strides = [1, 1, 1]} : vector<16x8x64xf32> to vector<16x7x64xf32>
    %82 = tpu.concatenate %28, %81 in 1 : vector<16x1x64xf32>, vector<16x7x64xf32> -> vector<16x8x64xf32>
    %83 = vector.extract_strided_slice %79 {offsets = [0, 1, 0], sizes = [16, 7, 64], strides = [1, 1, 1]} : vector<16x8x64xf32> to vector<16x7x64xf32>
    %84 = tpu.concatenate %83, %28 in 1 : vector<16x7x64xf32>, vector<16x1x64xf32> -> vector<16x8x64xf32>
    %85 = tpu.concatenate %82, %79 in 2 : vector<16x8x64xf32>, vector<16x8x64xf32> -> vector<16x8x128xf32>
    %86 = tpu.concatenate %80, %84 in 2 : vector<16x8x64xf32>, vector<16x8x64xf32> -> vector<16x8x128xf32>
    %87 = vector.extract_strided_slice %27 {offsets = [6, 0], sizes = [1, 128], strides = [1, 1]} : vector<9x128xf32> to vector<1x128xf32>
    %88 = vector.shape_cast %87 : vector<1x128xf32> to vector<1x1x128xf32>
    %89 = vector.extract_strided_slice %27 {offsets = [7, 0], sizes = [1, 128], strides = [1, 1]} : vector<9x128xf32> to vector<1x128xf32>
    %90 = vector.shape_cast %89 : vector<1x128xf32> to vector<1x1x128xf32>
    %91 = vector.extract_strided_slice %27 {offsets = [8, 0], sizes = [1, 128], strides = [1, 1]} : vector<9x128xf32> to vector<1x128xf32>
    %92 = vector.shape_cast %91 : vector<1x128xf32> to vector<1x1x128xf32>
    %93 = vector.broadcast %88 : vector<1x1x128xf32> to vector<16x8x128xf32>
    %94 = arith.mulf %85, %93 : vector<16x8x128xf32>
    %95 = arith.addf %77, %94 : vector<16x8x128xf32>
    %96 = vector.broadcast %90 : vector<1x1x128xf32> to vector<16x8x128xf32>
    %97 = arith.mulf %78, %96 : vector<16x8x128xf32>
    %98 = arith.addf %95, %97 : vector<16x8x128xf32>
    %99 = vector.broadcast %92 : vector<1x1x128xf32> to vector<16x8x128xf32>
    %100 = arith.mulf %86, %99 : vector<16x8x128xf32>
    %101 = arith.addf %98, %100 : vector<16x8x128xf32>
    %102 = vector.shape_cast %101 : vector<16x8x128xf32> to vector<128x128xf32>
    %103 = arith.truncf %102 : vector<128x128xf32> to vector<128x128xbf16>
    %c0_29 = arith.constant 0 : index
    %c0_30 = arith.constant 0 : index
    %104 = vector.load %arg9[%c0_29, %c0_30] : memref<128x128xbf16, #tpu.memory_space<vmem>>, vector<128x128xbf16>
    %cst_31 = arith.constant dense<0.000000e+00> : vector<128x128xf32>
    %105 = tpu.matmul %103, %104, %cst_31 {dimension_numbers = #tpu.dot_dimension_numbers<[1], [0], [0], [1], [0, 0, 1, 1], [], []>} : vector<128x128xbf16>, vector<128x128xbf16>, vector<128x128xf32> -> vector<128x128xf32>
    %106 = vector.shape_cast %105 : vector<128x128xf32> to vector<16x8x128xf32>
    %107 = arith.truncf %106 : vector<16x8x128xf32> to vector<16x8x128xbf16>
    %c0_32 = arith.constant 0 : index
    %c0_33 = arith.constant 0 : index
    %c0_34 = arith.constant 0 : index
    %c0_35 = arith.constant 0 : index
    %108 = vector.load %arg10[%c0_32, %c0_33, %c0_34, %c0_35] : memref<1x16x8x128xbf16, #tpu.memory_space<vmem>>, vector<1x16x8x128xbf16>
    %109 = vector.shape_cast %108 : vector<1x16x8x128xbf16> to vector<16x8x128xbf16>
    %110 = vector.shape_cast %107 : vector<16x8x128xbf16> to vector<1x16x8x128xbf16>
    tpu.vector_store %arg10[%c0_32, %c0_33, %c0_34, %c0_35], %110 {strides = array<i32>} : memref<1x16x8x128xbf16, #tpu.memory_space<vmem>>, vector<1x16x8x128xbf16>,
    %cst_36 = arith.constant dense<0.000000e+00> : vector<128xf32>
    %111 = vector.multi_reduction <add>, %105, %cst_36 [0] : vector<128x128xf32> to vector<128xf32>
    %112 = vector.shape_cast %111 : vector<128xf32> to vector<1x128xf32>
    %113 = arith.mulf %105, %105 : vector<128x128xf32>
    %cst_37 = arith.constant dense<0.000000e+00> : vector<128xf32>
    %114 = vector.multi_reduction <add>, %113, %cst_37 [0] : vector<128x128xf32> to vector<128xf32>
    %115 = vector.shape_cast %114 : vector<128xf32> to vector<1x128xf32>
    %116 = tpu.concatenate %112, %115 in 0 : vector<1x128xf32>, vector<1x128xf32> -> vector<2x128xf32>
    %c0_38 = arith.constant 0 : index
    %c0_39 = arith.constant 0 : index
    %c0_40 = arith.constant 0 : index
    %c0_41 = arith.constant 0 : index
    %117 = vector.load %arg11[%c0_38, %c0_39, %c0_40, %c0_41] : memref<1x1x2x128xf32, #tpu.memory_space<vmem>>, vector<1x1x2x128xf32>
    %118 = vector.shape_cast %117 : vector<1x1x2x128xf32> to vector<2x128xf32>
    %119 = vector.shape_cast %116 : vector<2x128xf32> to vector<1x1x2x128xf32>
    tpu.vector_store %arg11[%c0_38, %c0_39, %c0_40, %c0_41], %119 {strides = array<i32>} : memref<1x1x2x128xf32, #tpu.memory_space<vmem>>, vector<1x1x2x128xf32>,
    return
  }
  func.func @transform_0(%arg0: i32, %arg1: i32) -> (i32, i32, i32, i32) {
    %c16_i32 = arith.constant 16 : i32
    %0 = arith.muli %arg1, %c16_i32 : i32
    %c1_i32 = arith.constant 1 : i32
    %1 = arith.subi %0, %c1_i32 : i32
    %c0_i32 = arith.constant 0 : i32
    %2 = arith.maxsi %1, %c0_i32 : i32
    %c0_i32_0 = arith.constant 0 : i32
    %c0_i32_1 = arith.constant 0 : i32
    %c0_i32_2 = arith.constant 0 : i32
    return %arg0, %2, %c0_i32_0, %c0_i32_1 : i32, i32, i32, i32
  }
  func.func @transform_1(%arg0: i32, %arg1: i32) -> (i32, i32, i32, i32) {
    %c0_i32 = arith.constant 0 : i32
    %c0_i32_0 = arith.constant 0 : i32
    %c0_i32_1 = arith.constant 0 : i32
    return %arg0, %arg1, %c0_i32, %c0_i32_0 : i32, i32, i32, i32
  }
  func.func @transform_2(%arg0: i32, %arg1: i32) -> (i32, i32, i32, i32) {
    %c16_i32 = arith.constant 16 : i32
    %0 = arith.muli %arg1, %c16_i32 : i32
    %c16_i32_0 = arith.constant 16 : i32
    %1 = arith.addi %0, %c16_i32_0 : i32
    %c15_i32 = arith.constant 15 : i32
    %2 = arith.minsi %1, %c15_i32 : i32
    %c0_i32 = arith.constant 0 : i32
    %c0_i32_1 = arith.constant 0 : i32
    %c0_i32_2 = arith.constant 0 : i32
    return %arg0, %2, %c0_i32, %c0_i32_1 : i32, i32, i32, i32
  }
  func.func @transform_3(%arg0: i32, %arg1: i32) -> (i32, i32, i32, i32) {
    %c16_i32 = arith.constant 16 : i32
    %0 = arith.muli %arg1, %c16_i32 : i32
    %c1_i32 = arith.constant 1 : i32
    %1 = arith.subi %0, %c1_i32 : i32
    %c0_i32 = arith.constant 0 : i32
    %2 = arith.maxsi %1, %c0_i32 : i32
    %c0_i32_0 = arith.constant 0 : i32
    %c0_i32_1 = arith.constant 0 : i32
    %c0_i32_2 = arith.constant 0 : i32
    return %arg0, %2, %c0_i32_0, %c0_i32_1 : i32, i32, i32, i32
  }
  func.func @transform_4(%arg0: i32, %arg1: i32) -> (i32, i32, i32, i32) {
    %c0_i32 = arith.constant 0 : i32
    %c0_i32_0 = arith.constant 0 : i32
    %c0_i32_1 = arith.constant 0 : i32
    return %arg0, %arg1, %c0_i32, %c0_i32_0 : i32, i32, i32, i32
  }
  func.func @transform_5(%arg0: i32, %arg1: i32) -> (i32, i32, i32, i32) {
    %c16_i32 = arith.constant 16 : i32
    %0 = arith.muli %arg1, %c16_i32 : i32
    %c16_i32_0 = arith.constant 16 : i32
    %1 = arith.addi %0, %c16_i32_0 : i32
    %c15_i32 = arith.constant 15 : i32
    %2 = arith.minsi %1, %c15_i32 : i32
    %c0_i32 = arith.constant 0 : i32
    %c0_i32_1 = arith.constant 0 : i32
    %c0_i32_2 = arith.constant 0 : i32
    return %arg0, %2, %c0_i32, %c0_i32_1 : i32, i32, i32, i32
  }
  func.func @transform_6(%arg0: i32, %arg1: i32) -> (i32, i32) {
    %c0_i32 = arith.constant 0 : i32
    %c0_i32_0 = arith.constant 0 : i32
    %c0_i32_1 = arith.constant 0 : i32
    return %c0_i32, %c0_i32_0 : i32, i32
  }
  func.func @transform_7(%arg0: i32, %arg1: i32) -> (i32, i32) {
    %c0_i32 = arith.constant 0 : i32
    %c0_i32_0 = arith.constant 0 : i32
    %c0_i32_1 = arith.constant 0 : i32
    return %c0_i32, %c0_i32_0 : i32, i32
  }
  func.func @transform_8(%arg0: i32, %arg1: i32) -> (i32, i32, i32, i32) {
    %c0_i32 = arith.constant 0 : i32
    %c0_i32_0 = arith.constant 0 : i32
    %c0_i32_1 = arith.constant 0 : i32
    return %arg0, %arg1, %c0_i32, %c0_i32_0 : i32, i32, i32, i32
  }
  func.func @transform_9(%arg0: i32, %arg1: i32) -> (i32, i32, i32, i32) {
    %c0_i32 = arith.constant 0 : i32
    %c0_i32_0 = arith.constant 0 : i32
    %c0_i32_1 = arith.constant 0 : i32
    return %arg0, %arg1, %c0_i32, %c0_i32_0 : i32, i32, i32, i32
  }
}

module attributes {stable_mosaic.version = 11 : i64} {
  func.func @_dwpw_affine_kernel(%arg0: i32, %arg1: i32, %arg2: memref<1x1x8x128xbf16, #tpu.memory_space<vmem>>, %arg3: memref<1x16x8x128xbf16, #tpu.memory_space<vmem>>, %arg4: memref<1x1x8x128xbf16, #tpu.memory_space<vmem>>, %arg5: memref<1x128xf32, #tpu.memory_space<vmem>>, %arg6: memref<1x128xf32, #tpu.memory_space<vmem>>, %arg7: memref<9x128xf32, #tpu.memory_space<vmem>>, %arg8: memref<128x128xbf16, #tpu.memory_space<vmem>>, %arg9: memref<1x16x8x128xbf16, #tpu.memory_space<vmem>>, %arg10: memref<1x1x2x128xf32, #tpu.memory_space<vmem>>) attributes {dimension_semantics = [#tpu.dimension_semantics<parallel>, #tpu.dimension_semantics<parallel>], iteration_bounds = array<i64: 2, 1>, scalar_prefetch = 0 : i64, scratch_operands = 0 : i64, tpu.core_type = #tpu.core_type<tc>, window_params = [{transform_indices = @transform_0, window_bounds = array<i64: 1, 1, 8, 128>}, {transform_indices = @transform_1, window_bounds = array<i64: 1, 16, 8, 128>}, {transform_indices = @transform_2, window_bounds = array<i64: 1, 1, 8, 128>}, {pipeline_mode = #tpu.pipeline_mode<synchronous>, transform_indices = @transform_3, window_bounds = array<i64: 1, 128>}, {pipeline_mode = #tpu.pipeline_mode<synchronous>, transform_indices = @transform_4, window_bounds = array<i64: 1, 128>}, {pipeline_mode = #tpu.pipeline_mode<synchronous>, transform_indices = @transform_5, window_bounds = array<i64: 9, 128>}, {pipeline_mode = #tpu.pipeline_mode<synchronous>, transform_indices = @transform_6, window_bounds = array<i64: 128, 128>}, {transform_indices = @transform_7, window_bounds = array<i64: 1, 16, 8, 128>}, {transform_indices = @transform_8, window_bounds = array<i64: 1, 1, 2, 128>}]} {
    %c0 = arith.constant 0 : index
    %c0_0 = arith.constant 0 : index
    %0 = vector.load %arg5[%c0, %c0_0] : memref<1x128xf32, #tpu.memory_space<vmem>>, vector<1x128xf32>
    %c0_1 = arith.constant 0 : index
    %c0_2 = arith.constant 0 : index
    %1 = vector.load %arg6[%c0_1, %c0_2] : memref<1x128xf32, #tpu.memory_space<vmem>>, vector<1x128xf32>
    %c0_3 = arith.constant 0 : index
    %c0_4 = arith.constant 0 : index
    %c0_5 = arith.constant 0 : index
    %c0_6 = arith.constant 0 : index
    %2 = vector.load %arg2[%c0_3, %c0_4, %c0_5, %c0_6] : memref<1x1x8x128xbf16, #tpu.memory_space<vmem>>, vector<1x1x8x128xbf16>
    %3 = vector.shape_cast %2 : vector<1x1x8x128xbf16> to vector<8x128xbf16>
    %4 = arith.extf %3 : vector<8x128xbf16> to vector<8x128xf32>
    %5 = vector.broadcast %0 : vector<1x128xf32> to vector<8x128xf32>
    %6 = arith.mulf %4, %5 : vector<8x128xf32>
    %7 = vector.broadcast %1 : vector<1x128xf32> to vector<8x128xf32>
    %8 = arith.addf %6, %7 : vector<8x128xf32>
    %cst = arith.constant 0.000000e+00 : f32
    %9 = vector.broadcast %cst : f32 to vector<8x128xf32>
    %10 = arith.maximumf %8, %9 : vector<8x128xf32>
    %c0_7 = arith.constant 0 : index
    %c0_8 = arith.constant 0 : index
    %c0_9 = arith.constant 0 : index
    %c0_10 = arith.constant 0 : index
    %11 = vector.load %arg4[%c0_7, %c0_8, %c0_9, %c0_10] : memref<1x1x8x128xbf16, #tpu.memory_space<vmem>>, vector<1x1x8x128xbf16>
    %12 = vector.shape_cast %11 : vector<1x1x8x128xbf16> to vector<8x128xbf16>
    %13 = arith.extf %12 : vector<8x128xbf16> to vector<8x128xf32>
    %14 = vector.broadcast %0 : vector<1x128xf32> to vector<8x128xf32>
    %15 = arith.mulf %13, %14 : vector<8x128xf32>
    %16 = vector.broadcast %1 : vector<1x128xf32> to vector<8x128xf32>
    %17 = arith.addf %15, %16 : vector<8x128xf32>
    %cst_11 = arith.constant 0.000000e+00 : f32
    %18 = vector.broadcast %cst_11 : f32 to vector<8x128xf32>
    %19 = arith.maximumf %17, %18 : vector<8x128xf32>
    %c0_12 = arith.constant 0 : index
    %c0_13 = arith.constant 0 : index
    %c0_14 = arith.constant 0 : index
    %c0_15 = arith.constant 0 : index
    %20 = vector.load %arg3[%c0_12, %c0_13, %c0_14, %c0_15] : memref<1x16x8x128xbf16, #tpu.memory_space<vmem>>, vector<1x16x8x128xbf16>
    %21 = vector.shape_cast %20 : vector<1x16x8x128xbf16> to vector<16x8x128xbf16>
    %22 = arith.extf %21 : vector<16x8x128xbf16> to vector<16x8x128xf32>
    %23 = vector.shape_cast %0 : vector<1x128xf32> to vector<1x1x128xf32>
    %24 = vector.broadcast %23 : vector<1x1x128xf32> to vector<16x8x128xf32>
    %25 = arith.mulf %22, %24 : vector<16x8x128xf32>
    %26 = vector.shape_cast %1 : vector<1x128xf32> to vector<1x1x128xf32>
    %27 = vector.broadcast %26 : vector<1x1x128xf32> to vector<16x8x128xf32>
    %28 = arith.addf %25, %27 : vector<16x8x128xf32>
    %cst_16 = arith.constant 0.000000e+00 : f32
    %29 = vector.broadcast %cst_16 : f32 to vector<16x8x128xf32>
    %30 = arith.maximumf %28, %29 : vector<16x8x128xf32>
    %c0_i32 = arith.constant 0 : i32
    %31 = arith.cmpi eq, %arg1, %c0_i32 : i32
    %cst_17 = arith.constant 0.000000e+00 : f32
    %32 = vector.broadcast %cst_17 : f32 to vector<8x128xf32>
    %33 = arith.select %31, %32, %10 : vector<8x128xf32>
    %c0_i32_18 = arith.constant 0 : i32
    %34 = arith.cmpi eq, %arg1, %c0_i32_18 : i32
    %cst_19 = arith.constant 0.000000e+00 : f32
    %35 = vector.broadcast %cst_19 : f32 to vector<8x128xf32>
    %36 = arith.select %34, %35, %19 : vector<8x128xf32>
    %37 = vector.shape_cast %33 : vector<8x128xf32> to vector<1x8x128xf32>
    %38 = vector.shape_cast %36 : vector<8x128xf32> to vector<1x8x128xf32>
    %39 = tpu.concatenate %37, %30, %38 in 0 : vector<1x8x128xf32>, vector<16x8x128xf32>, vector<1x8x128xf32> -> vector<18x8x128xf32>
    %c0_20 = arith.constant 0 : index
    %c0_21 = arith.constant 0 : index
    %40 = vector.load %arg7[%c0_20, %c0_21] : memref<9x128xf32, #tpu.memory_space<vmem>>, vector<9x128xf32>
    %cst_22 = arith.constant 0.000000e+00 : f32
    %41 = vector.broadcast %cst_22 : f32 to vector<16x1x64xf32>
    %cst_23 = arith.constant 0.000000e+00 : f32
    %42 = vector.broadcast %cst_23 : f32 to vector<16x8x128xf32>
    %43 = vector.extract_strided_slice %39 {offsets = [0, 0, 0], sizes = [16, 8, 128], strides = [1, 1, 1]} : vector<18x8x128xf32> to vector<16x8x128xf32>
    %44 = vector.extract_strided_slice %43 {offsets = [0, 0, 0], sizes = [16, 8, 64], strides = [1, 1, 1]} : vector<16x8x128xf32> to vector<16x8x64xf32>
    %45 = vector.extract_strided_slice %43 {offsets = [0, 0, 64], sizes = [16, 8, 64], strides = [1, 1, 1]} : vector<16x8x128xf32> to vector<16x8x64xf32>
    %46 = vector.extract_strided_slice %45 {offsets = [0, 0, 0], sizes = [16, 7, 64], strides = [1, 1, 1]} : vector<16x8x64xf32> to vector<16x7x64xf32>
    %47 = tpu.concatenate %41, %46 in 1 : vector<16x1x64xf32>, vector<16x7x64xf32> -> vector<16x8x64xf32>
    %48 = vector.extract_strided_slice %44 {offsets = [0, 1, 0], sizes = [16, 7, 64], strides = [1, 1, 1]} : vector<16x8x64xf32> to vector<16x7x64xf32>
    %49 = tpu.concatenate %48, %41 in 1 : vector<16x7x64xf32>, vector<16x1x64xf32> -> vector<16x8x64xf32>
    %50 = tpu.concatenate %47, %44 in 2 : vector<16x8x64xf32>, vector<16x8x64xf32> -> vector<16x8x128xf32>
    %51 = tpu.concatenate %45, %49 in 2 : vector<16x8x64xf32>, vector<16x8x64xf32> -> vector<16x8x128xf32>
    %52 = vector.extract_strided_slice %40 {offsets = [0, 0], sizes = [1, 128], strides = [1, 1]} : vector<9x128xf32> to vector<1x128xf32>
    %53 = vector.shape_cast %52 : vector<1x128xf32> to vector<1x1x128xf32>
    %54 = vector.extract_strided_slice %40 {offsets = [1, 0], sizes = [1, 128], strides = [1, 1]} : vector<9x128xf32> to vector<1x128xf32>
    %55 = vector.shape_cast %54 : vector<1x128xf32> to vector<1x1x128xf32>
    %56 = vector.extract_strided_slice %40 {offsets = [2, 0], sizes = [1, 128], strides = [1, 1]} : vector<9x128xf32> to vector<1x128xf32>
    %57 = vector.shape_cast %56 : vector<1x128xf32> to vector<1x1x128xf32>
    %58 = vector.broadcast %53 : vector<1x1x128xf32> to vector<16x8x128xf32>
    %59 = arith.mulf %50, %58 : vector<16x8x128xf32>
    %60 = arith.addf %42, %59 : vector<16x8x128xf32>
    %61 = vector.broadcast %55 : vector<1x1x128xf32> to vector<16x8x128xf32>
    %62 = arith.mulf %43, %61 : vector<16x8x128xf32>
    %63 = arith.addf %60, %62 : vector<16x8x128xf32>
    %64 = vector.broadcast %57 : vector<1x1x128xf32> to vector<16x8x128xf32>
    %65 = arith.mulf %51, %64 : vector<16x8x128xf32>
    %66 = arith.addf %63, %65 : vector<16x8x128xf32>
    %67 = vector.extract_strided_slice %39 {offsets = [1, 0, 0], sizes = [16, 8, 128], strides = [1, 1, 1]} : vector<18x8x128xf32> to vector<16x8x128xf32>
    %68 = vector.extract_strided_slice %67 {offsets = [0, 0, 0], sizes = [16, 8, 64], strides = [1, 1, 1]} : vector<16x8x128xf32> to vector<16x8x64xf32>
    %69 = vector.extract_strided_slice %67 {offsets = [0, 0, 64], sizes = [16, 8, 64], strides = [1, 1, 1]} : vector<16x8x128xf32> to vector<16x8x64xf32>
    %70 = vector.extract_strided_slice %69 {offsets = [0, 0, 0], sizes = [16, 7, 64], strides = [1, 1, 1]} : vector<16x8x64xf32> to vector<16x7x64xf32>
    %71 = tpu.concatenate %41, %70 in 1 : vector<16x1x64xf32>, vector<16x7x64xf32> -> vector<16x8x64xf32>
    %72 = vector.extract_strided_slice %68 {offsets = [0, 1, 0], sizes = [16, 7, 64], strides = [1, 1, 1]} : vector<16x8x64xf32> to vector<16x7x64xf32>
    %73 = tpu.concatenate %72, %41 in 1 : vector<16x7x64xf32>, vector<16x1x64xf32> -> vector<16x8x64xf32>
    %74 = tpu.concatenate %71, %68 in 2 : vector<16x8x64xf32>, vector<16x8x64xf32> -> vector<16x8x128xf32>
    %75 = tpu.concatenate %69, %73 in 2 : vector<16x8x64xf32>, vector<16x8x64xf32> -> vector<16x8x128xf32>
    %76 = vector.extract_strided_slice %40 {offsets = [3, 0], sizes = [1, 128], strides = [1, 1]} : vector<9x128xf32> to vector<1x128xf32>
    %77 = vector.shape_cast %76 : vector<1x128xf32> to vector<1x1x128xf32>
    %78 = vector.extract_strided_slice %40 {offsets = [4, 0], sizes = [1, 128], strides = [1, 1]} : vector<9x128xf32> to vector<1x128xf32>
    %79 = vector.shape_cast %78 : vector<1x128xf32> to vector<1x1x128xf32>
    %80 = vector.extract_strided_slice %40 {offsets = [5, 0], sizes = [1, 128], strides = [1, 1]} : vector<9x128xf32> to vector<1x128xf32>
    %81 = vector.shape_cast %80 : vector<1x128xf32> to vector<1x1x128xf32>
    %82 = vector.broadcast %77 : vector<1x1x128xf32> to vector<16x8x128xf32>
    %83 = arith.mulf %74, %82 : vector<16x8x128xf32>
    %84 = arith.addf %66, %83 : vector<16x8x128xf32>
    %85 = vector.broadcast %79 : vector<1x1x128xf32> to vector<16x8x128xf32>
    %86 = arith.mulf %67, %85 : vector<16x8x128xf32>
    %87 = arith.addf %84, %86 : vector<16x8x128xf32>
    %88 = vector.broadcast %81 : vector<1x1x128xf32> to vector<16x8x128xf32>
    %89 = arith.mulf %75, %88 : vector<16x8x128xf32>
    %90 = arith.addf %87, %89 : vector<16x8x128xf32>
    %91 = vector.extract_strided_slice %39 {offsets = [2, 0, 0], sizes = [16, 8, 128], strides = [1, 1, 1]} : vector<18x8x128xf32> to vector<16x8x128xf32>
    %92 = vector.extract_strided_slice %91 {offsets = [0, 0, 0], sizes = [16, 8, 64], strides = [1, 1, 1]} : vector<16x8x128xf32> to vector<16x8x64xf32>
    %93 = vector.extract_strided_slice %91 {offsets = [0, 0, 64], sizes = [16, 8, 64], strides = [1, 1, 1]} : vector<16x8x128xf32> to vector<16x8x64xf32>
    %94 = vector.extract_strided_slice %93 {offsets = [0, 0, 0], sizes = [16, 7, 64], strides = [1, 1, 1]} : vector<16x8x64xf32> to vector<16x7x64xf32>
    %95 = tpu.concatenate %41, %94 in 1 : vector<16x1x64xf32>, vector<16x7x64xf32> -> vector<16x8x64xf32>
    %96 = vector.extract_strided_slice %92 {offsets = [0, 1, 0], sizes = [16, 7, 64], strides = [1, 1, 1]} : vector<16x8x64xf32> to vector<16x7x64xf32>
    %97 = tpu.concatenate %96, %41 in 1 : vector<16x7x64xf32>, vector<16x1x64xf32> -> vector<16x8x64xf32>
    %98 = tpu.concatenate %95, %92 in 2 : vector<16x8x64xf32>, vector<16x8x64xf32> -> vector<16x8x128xf32>
    %99 = tpu.concatenate %93, %97 in 2 : vector<16x8x64xf32>, vector<16x8x64xf32> -> vector<16x8x128xf32>
    %100 = vector.extract_strided_slice %40 {offsets = [6, 0], sizes = [1, 128], strides = [1, 1]} : vector<9x128xf32> to vector<1x128xf32>
    %101 = vector.shape_cast %100 : vector<1x128xf32> to vector<1x1x128xf32>
    %102 = vector.extract_strided_slice %40 {offsets = [7, 0], sizes = [1, 128], strides = [1, 1]} : vector<9x128xf32> to vector<1x128xf32>
    %103 = vector.shape_cast %102 : vector<1x128xf32> to vector<1x1x128xf32>
    %104 = vector.extract_strided_slice %40 {offsets = [8, 0], sizes = [1, 128], strides = [1, 1]} : vector<9x128xf32> to vector<1x128xf32>
    %105 = vector.shape_cast %104 : vector<1x128xf32> to vector<1x1x128xf32>
    %106 = vector.broadcast %101 : vector<1x1x128xf32> to vector<16x8x128xf32>
    %107 = arith.mulf %98, %106 : vector<16x8x128xf32>
    %108 = arith.addf %90, %107 : vector<16x8x128xf32>
    %109 = vector.broadcast %103 : vector<1x1x128xf32> to vector<16x8x128xf32>
    %110 = arith.mulf %91, %109 : vector<16x8x128xf32>
    %111 = arith.addf %108, %110 : vector<16x8x128xf32>
    %112 = vector.broadcast %105 : vector<1x1x128xf32> to vector<16x8x128xf32>
    %113 = arith.mulf %99, %112 : vector<16x8x128xf32>
    %114 = arith.addf %111, %113 : vector<16x8x128xf32>
    %115 = vector.shape_cast %114 : vector<16x8x128xf32> to vector<128x128xf32>
    %116 = arith.truncf %115 : vector<128x128xf32> to vector<128x128xbf16>
    %c0_24 = arith.constant 0 : index
    %c0_25 = arith.constant 0 : index
    %117 = vector.load %arg8[%c0_24, %c0_25] : memref<128x128xbf16, #tpu.memory_space<vmem>>, vector<128x128xbf16>
    %cst_26 = arith.constant dense<0.000000e+00> : vector<128x128xf32>
    %118 = tpu.matmul %116, %117, %cst_26 {dimension_numbers = #tpu.dot_dimension_numbers<[1], [0], [0], [1], [0, 0, 1, 1], [], []>} : vector<128x128xbf16>, vector<128x128xbf16>, vector<128x128xf32> -> vector<128x128xf32>
    %119 = vector.shape_cast %118 : vector<128x128xf32> to vector<16x8x128xf32>
    %120 = arith.truncf %119 : vector<16x8x128xf32> to vector<16x8x128xbf16>
    %c0_27 = arith.constant 0 : index
    %c0_28 = arith.constant 0 : index
    %c0_29 = arith.constant 0 : index
    %c0_30 = arith.constant 0 : index
    %121 = vector.load %arg9[%c0_27, %c0_28, %c0_29, %c0_30] : memref<1x16x8x128xbf16, #tpu.memory_space<vmem>>, vector<1x16x8x128xbf16>
    %122 = vector.shape_cast %121 : vector<1x16x8x128xbf16> to vector<16x8x128xbf16>
    %123 = vector.shape_cast %120 : vector<16x8x128xbf16> to vector<1x16x8x128xbf16>
    tpu.vector_store %arg9[%c0_27, %c0_28, %c0_29, %c0_30], %123 {strides = array<i32>} : memref<1x16x8x128xbf16, #tpu.memory_space<vmem>>, vector<1x16x8x128xbf16>,
    %cst_31 = arith.constant dense<0.000000e+00> : vector<128xf32>
    %124 = vector.multi_reduction <add>, %118, %cst_31 [0] : vector<128x128xf32> to vector<128xf32>
    %125 = vector.shape_cast %124 : vector<128xf32> to vector<1x128xf32>
    %126 = arith.mulf %118, %118 : vector<128x128xf32>
    %cst_32 = arith.constant dense<0.000000e+00> : vector<128xf32>
    %127 = vector.multi_reduction <add>, %126, %cst_32 [0] : vector<128x128xf32> to vector<128xf32>
    %128 = vector.shape_cast %127 : vector<128xf32> to vector<1x128xf32>
    %129 = tpu.concatenate %125, %128 in 0 : vector<1x128xf32>, vector<1x128xf32> -> vector<2x128xf32>
    %c0_33 = arith.constant 0 : index
    %c0_34 = arith.constant 0 : index
    %c0_35 = arith.constant 0 : index
    %c0_36 = arith.constant 0 : index
    %130 = vector.load %arg10[%c0_33, %c0_34, %c0_35, %c0_36] : memref<1x1x2x128xf32, #tpu.memory_space<vmem>>, vector<1x1x2x128xf32>
    %131 = vector.shape_cast %130 : vector<1x1x2x128xf32> to vector<2x128xf32>
    %132 = vector.shape_cast %129 : vector<2x128xf32> to vector<1x1x2x128xf32>
    tpu.vector_store %arg10[%c0_33, %c0_34, %c0_35, %c0_36], %132 {strides = array<i32>} : memref<1x1x2x128xf32, #tpu.memory_space<vmem>>, vector<1x1x2x128xf32>,
    return
  }
  func.func @transform_0(%arg0: i32, %arg1: i32) -> (i32, i32, i32, i32) {
    %c16_i32 = arith.constant 16 : i32
    %0 = arith.muli %arg1, %c16_i32 : i32
    %c1_i32 = arith.constant 1 : i32
    %1 = arith.subi %0, %c1_i32 : i32
    %c0_i32 = arith.constant 0 : i32
    %2 = arith.maxsi %1, %c0_i32 : i32
    %c0_i32_0 = arith.constant 0 : i32
    %c0_i32_1 = arith.constant 0 : i32
    %c0_i32_2 = arith.constant 0 : i32
    return %arg0, %2, %c0_i32_0, %c0_i32_1 : i32, i32, i32, i32
  }
  func.func @transform_1(%arg0: i32, %arg1: i32) -> (i32, i32, i32, i32) {
    %c0_i32 = arith.constant 0 : i32
    %c0_i32_0 = arith.constant 0 : i32
    %c0_i32_1 = arith.constant 0 : i32
    return %arg0, %arg1, %c0_i32, %c0_i32_0 : i32, i32, i32, i32
  }
  func.func @transform_2(%arg0: i32, %arg1: i32) -> (i32, i32, i32, i32) {
    %c16_i32 = arith.constant 16 : i32
    %0 = arith.muli %arg1, %c16_i32 : i32
    %c16_i32_0 = arith.constant 16 : i32
    %1 = arith.addi %0, %c16_i32_0 : i32
    %c15_i32 = arith.constant 15 : i32
    %2 = arith.minsi %1, %c15_i32 : i32
    %c0_i32 = arith.constant 0 : i32
    %c0_i32_1 = arith.constant 0 : i32
    %c0_i32_2 = arith.constant 0 : i32
    return %arg0, %2, %c0_i32, %c0_i32_1 : i32, i32, i32, i32
  }
  func.func @transform_3(%arg0: i32, %arg1: i32) -> (i32, i32) {
    %c0_i32 = arith.constant 0 : i32
    %c0_i32_0 = arith.constant 0 : i32
    %c0_i32_1 = arith.constant 0 : i32
    return %c0_i32, %c0_i32_0 : i32, i32
  }
  func.func @transform_4(%arg0: i32, %arg1: i32) -> (i32, i32) {
    %c0_i32 = arith.constant 0 : i32
    %c0_i32_0 = arith.constant 0 : i32
    %c0_i32_1 = arith.constant 0 : i32
    return %c0_i32, %c0_i32_0 : i32, i32
  }
  func.func @transform_5(%arg0: i32, %arg1: i32) -> (i32, i32) {
    %c0_i32 = arith.constant 0 : i32
    %c0_i32_0 = arith.constant 0 : i32
    %c0_i32_1 = arith.constant 0 : i32
    return %c0_i32, %c0_i32_0 : i32, i32
  }
  func.func @transform_6(%arg0: i32, %arg1: i32) -> (i32, i32) {
    %c0_i32 = arith.constant 0 : i32
    %c0_i32_0 = arith.constant 0 : i32
    %c0_i32_1 = arith.constant 0 : i32
    return %c0_i32, %c0_i32_0 : i32, i32
  }
  func.func @transform_7(%arg0: i32, %arg1: i32) -> (i32, i32, i32, i32) {
    %c0_i32 = arith.constant 0 : i32
    %c0_i32_0 = arith.constant 0 : i32
    %c0_i32_1 = arith.constant 0 : i32
    return %arg0, %arg1, %c0_i32, %c0_i32_0 : i32, i32, i32, i32
  }
  func.func @transform_8(%arg0: i32, %arg1: i32) -> (i32, i32, i32, i32) {
    %c0_i32 = arith.constant 0 : i32
    %c0_i32_0 = arith.constant 0 : i32
    %c0_i32_1 = arith.constant 0 : i32
    return %arg0, %arg1, %c0_i32, %c0_i32_0 : i32, i32, i32, i32
  }
}

module attributes {stable_mosaic.version = 11 : i64} {
  func.func @_affine_relu_kernel(%arg0: i32, %arg1: i32, %arg2: memref<1x16x8x128xbf16, #tpu.memory_space<vmem>>, %arg3: memref<1x128xf32, #tpu.memory_space<vmem>>, %arg4: memref<1x128xf32, #tpu.memory_space<vmem>>, %arg5: memref<1x16x8x128xf32, #tpu.memory_space<vmem>>) attributes {dimension_semantics = [#tpu.dimension_semantics<parallel>, #tpu.dimension_semantics<parallel>], iteration_bounds = array<i64: 2, 1>, scalar_prefetch = 0 : i64, scratch_operands = 0 : i64, tpu.core_type = #tpu.core_type<tc>, window_params = [{transform_indices = @transform_0, window_bounds = array<i64: 1, 16, 8, 128>}, {pipeline_mode = #tpu.pipeline_mode<synchronous>, transform_indices = @transform_1, window_bounds = array<i64: 1, 128>}, {pipeline_mode = #tpu.pipeline_mode<synchronous>, transform_indices = @transform_2, window_bounds = array<i64: 1, 128>}, {transform_indices = @transform_3, window_bounds = array<i64: 1, 16, 8, 128>}]} {
    %c0 = arith.constant 0 : index
    %c0_0 = arith.constant 0 : index
    %c0_1 = arith.constant 0 : index
    %c0_2 = arith.constant 0 : index
    %0 = vector.load %arg2[%c0, %c0_0, %c0_1, %c0_2] : memref<1x16x8x128xbf16, #tpu.memory_space<vmem>>, vector<1x16x8x128xbf16>
    %1 = arith.extf %0 : vector<1x16x8x128xbf16> to vector<1x16x8x128xf32>
    %c0_3 = arith.constant 0 : index
    %c0_4 = arith.constant 0 : index
    %2 = vector.load %arg3[%c0_3, %c0_4] : memref<1x128xf32, #tpu.memory_space<vmem>>, vector<1x128xf32>
    %3 = vector.shape_cast %2 : vector<1x128xf32> to vector<1x1x1x128xf32>
    %4 = vector.broadcast %3 : vector<1x1x1x128xf32> to vector<1x16x8x128xf32>
    %5 = arith.mulf %1, %4 : vector<1x16x8x128xf32>
    %c0_5 = arith.constant 0 : index
    %c0_6 = arith.constant 0 : index
    %6 = vector.load %arg4[%c0_5, %c0_6] : memref<1x128xf32, #tpu.memory_space<vmem>>, vector<1x128xf32>
    %7 = vector.shape_cast %6 : vector<1x128xf32> to vector<1x1x1x128xf32>
    %8 = vector.broadcast %7 : vector<1x1x1x128xf32> to vector<1x16x8x128xf32>
    %9 = arith.addf %5, %8 : vector<1x16x8x128xf32>
    %cst = arith.constant 0.000000e+00 : f32
    %10 = vector.broadcast %cst : f32 to vector<1x16x8x128xf32>
    %11 = arith.maximumf %9, %10 : vector<1x16x8x128xf32>
    %c0_7 = arith.constant 0 : index
    %c0_8 = arith.constant 0 : index
    %c0_9 = arith.constant 0 : index
    %c0_10 = arith.constant 0 : index
    %12 = vector.load %arg5[%c0_7, %c0_8, %c0_9, %c0_10] : memref<1x16x8x128xf32, #tpu.memory_space<vmem>>, vector<1x16x8x128xf32>
    tpu.vector_store %arg5[%c0_7, %c0_8, %c0_9, %c0_10], %11 {strides = array<i32>} : memref<1x16x8x128xf32, #tpu.memory_space<vmem>>, vector<1x16x8x128xf32>,
    return
  }
  func.func @transform_0(%arg0: i32, %arg1: i32) -> (i32, i32, i32, i32) {
    %c0_i32 = arith.constant 0 : i32
    %c0_i32_0 = arith.constant 0 : i32
    %c0_i32_1 = arith.constant 0 : i32
    return %arg0, %arg1, %c0_i32, %c0_i32_0 : i32, i32, i32, i32
  }
  func.func @transform_1(%arg0: i32, %arg1: i32) -> (i32, i32) {
    %c0_i32 = arith.constant 0 : i32
    %c0_i32_0 = arith.constant 0 : i32
    %c0_i32_1 = arith.constant 0 : i32
    return %c0_i32, %c0_i32_0 : i32, i32
  }
  func.func @transform_2(%arg0: i32, %arg1: i32) -> (i32, i32) {
    %c0_i32 = arith.constant 0 : i32
    %c0_i32_0 = arith.constant 0 : i32
    %c0_i32_1 = arith.constant 0 : i32
    return %c0_i32, %c0_i32_0 : i32, i32
  }
  func.func @transform_3(%arg0: i32, %arg1: i32) -> (i32, i32, i32, i32) {
    %c0_i32 = arith.constant 0 : i32
    %c0_i32_0 = arith.constant 0 : i32
    %c0_i32_1 = arith.constant 0 : i32
    return %arg0, %arg1, %c0_i32, %c0_i32_0 : i32, i32, i32, i32
  }
}

</mosaic_0001>

<llo_original>
// kernel: tile.14
$region0: #{tile.14}
  %s0 = inlined_call_operand.vmem [shape: f32[9,2,64], index: 0, kind: input, shape index: {}]
  %s1 = inlined_call_operand.vmem [shape: f32[9,128], index: 1, kind: output, shape index: {}]
  $region1: #{tile.14} parent=0
    #allocation0 [shape = 'u8[36864]{0}', space=vmem, size = 0x9000, scoped, tag = 'scoped mem for input reshape']
    %s3 = sshll.u32 1, 2
    %s4 = ssub.s32 %s3, 1
    %s5 = smul.addr 2, 8
    %s6 = scalar_lea.vmem %s0, %s5
    %v7 = vld [vmem:[%s6] sm:%s4]
    %s8 = scalar_lea.vmem [#allocation0], 64
    %9 = vst [vmem:[%s8] sm:%s4] %v7
    %s10 = smul.addr 2, 7
    %s11 = scalar_lea.vmem %s0, %s10
    %v12 = vld [vmem:[%s11] sm:%s4]
    %s13 = scalar_lea.vmem [#allocation0], 56
    %14 = vst [vmem:[%s13] sm:%s4] %v12
    %s15 = smul.addr 2, 6
    %s16 = scalar_lea.vmem %s0, %s15
    %v17 = vld [vmem:[%s16] sm:%s4]
    %s18 = scalar_lea.vmem [#allocation0], 48
    %19 = vst [vmem:[%s18] sm:%s4] %v17
    %s20 = smul.addr 2, 5
    %s21 = scalar_lea.vmem %s0, %s20
    %v22 = vld [vmem:[%s21] sm:%s4]
    %s23 = scalar_lea.vmem [#allocation0], 40
    %24 = vst [vmem:[%s23] sm:%s4] %v22
    %s25 = smul.addr 2, 4
    %s26 = scalar_lea.vmem %s0, %s25
    %v27 = vld [vmem:[%s26] sm:%s4]
    %s28 = scalar_lea.vmem [#allocation0], 32
    %29 = vst [vmem:[%s28] sm:%s4] %v27
    %s30 = smul.addr 2, 3
    %s31 = scalar_lea.vmem %s0, %s30
    %v32 = vld [vmem:[%s31] sm:%s4]
    %s33 = scalar_lea.vmem [#allocation0], 24
    %34 = vst [vmem:[%s33] sm:%s4] %v32
    %s35 = smul.addr 2, 2
    %s36 = scalar_lea.vmem %s0, %s35
    %v37 = vld [vmem:[%s36] sm:%s4]
    %s38 = scalar_lea.vmem [#allocation0], 16
    %39 = vst [vmem:[%s38] sm:%s4] %v37
    %s40 = scalar_lea.vmem %s0, 2
    %v41 = vld [vmem:[%s40] sm:%s4]
    %s42 = scalar_lea.vmem [#allocation0], 8
    %43 = vst [vmem:[%s42] sm:%s4] %v41
    %v44 = vld [vmem:[%s0] sm:%s4]
    %45 = vst [vmem:[#allocation0] sm:%s4] %v44
    %v46 = vld [vmem:[#allocation0] ss:$8 sm:$0xf]
    %v47 = vld [vmem:[#allocation0] ss:$8 sm:$0xf0]
    %vm48 = vcmask 1047556
    %v49 = vsel %vm48, %v47, %v46
    %vm50 = vcmask 523264
    %51 = vst.msk [vmem:[%s1] sm:$0xff] %vm50, %v49
    %s52 = scalar_lea.vmem [#allocation0], 64
    %v53 = vld [vmem:[%s52] sm:$0x1]
    %vm54 = vcmask 523264
    %s55 = scalar_lea.vmem %s1, 8
    %56 = vst.msk [vmem:[%s55] sm:$0x1] %vm54, %v53
    %s57 = scalar_lea.vmem [#allocation0], 1
    %v58 = vld [vmem:[%s57] ss:$8 sm:$0xf]
    %s59 = scalar_lea.vmem [#allocation0], 1
    %v60 = vld [vmem:[%s59] ss:$8 sm:$0xf0]
    %vm61 = vcmask 1047556
    %v62 = vsel %vm61, %v60, %v58
    %63 = vrot.lane.b32.xlu0 %v62, 64
    %v64 = vpop.permute.xlu0 %63
    %vm65 = vcmask 1048064
    %66 = vst.msk [vmem:[%s1] sm:$0xff] %vm65, %v64
    %s67 = scalar_lea.vmem [#allocation0], 65
    %v68 = vld [vmem:[%s67] sm:$0x1]
    %69 = vrot.lane.b32.xlu0 %v68, 64
    %v70 = vpop.permute.xlu0 %69
    %vm71 = vcmask 1048064
    %s72 = scalar_lea.vmem %s1, 8
    %73 = vst.msk [vmem:[%s72] sm:$0x1] %vm71, %v70

// kernel: up_forward.6
$region0: #{up_forward.6}
  #allocation0 [shape = 'u32[]', space=smem, size = 0x4, offset = 0x4, fixed_abs, tag = 'smem constant byte address 0x4 - core index']
  #allocation1 [shape = 'u32[144,128]{1,0:T(1,128)}', space=vmem, size = 0x12000, scoped, tag = 'internal scratch']
  %s0 = inlined_call_operand.vmem [shape: bf16[2,8,8,256], index: 0, kind: input, shape index: {}, may-alias: {0,1}]
  %s1 = inlined_call_operand.vmem [shape: bf16[2,8,8,256], index: 1, kind: input, shape index: {}, may-alias: {0,1}]
  %s2 = inlined_call_operand.vmem [shape: bf16[2,16,8,128], index: 2, kind: output, shape index: {}]
  %s3 = sld [smem:[#allocation0]]
  $region41: #{up_forward.6} parent=0
    _
  %s5 = ssub.s32 1, %s3
  %s6 = scalar_select 0, %s5, %s3
  loop: start=0, step=1, limit=4
  $region2: #{up_forward.6} parent=0 // loop_pre_header
    _
  $region3: #{up_forward.6} parent=0 // loop_header
    %s8 = sphi 0, %s12
    %p9 = scmp.ge.s32.totalorder %s8, 4
    %s15 = sphi 0, %s27
    %s16 = sphi 0, %s23
    %s17 = sphi 0, %s15
    %s18 = sphi 0, %s16
    %s19 = sphi 0, %s17
    %s20 = sphi 0, %s18
    %s40 = sphi 0, %s42
    %s43 = sphi 0, %s40
    %s44 = sphi 0, %s43
    %s60 = sphi 0, %s44
    %s68 = sphi 0, %s70
    %s71 = sphi 0, %s68
    %s72 = sphi 0, %s71
    %s88 = sphi 0, %s72
    %s96 = sphi 0, %s98
    %s99 = sphi 0, %s96
    %s100 = sphi 0, %s99
    %s116 = sphi 0, %s100
  $region4: #{up_forward.6} parent=0 // loop_header_branch
    %11 = sbr.rel (%p9) target = $region8
  $region5: #{up_forward.6} parent=0 // loop_body
    %s13 = ssub.s32 %s8, 1
    %s14 = ssub.s32 %s8, 2
    %s21 = sadd.s32 1, %s16
    %p22 = scmp.ge.s32.totalorder %s21, 1
    %s23 = scalar_select %p22, 0, %s21
    %s24 = sadd.s32 1, %s15
    %s25 = scalar_select %p22, %s24, %s15
    %p26 = scmp.ge.s32.totalorder %s25, 2
    %s27 = scalar_select %p26, 0, %s25
    %s28 = smul.u32 %s16, 8
    %s29 = ssub.s32 %s28, 1
    %p30 = scmp.gt.s32.totalorder %s29, 0
    %s31 = scalar_select %p30, %s29, 0
    %s32 = smul.u32 %s23, 8
    %s33 = ssub.s32 %s32, 1
    %p34 = scmp.gt.s32.totalorder %s33, 0
    %s35 = scalar_select %p34, %s33, 0
    %s36 = ssub.s32 %s15, %s27
    %s37 = ssub.s32 %s31, %s35
    %s38 = sor.u32 %s36, %s37
    %p39 = scmp.eq.s32.totalorder %s38, 0
    %s41 = sadd.s32 %s40, 1
    %s42 = scalar_select %p39, %s40, %s41
    %p45 = pneg %p39
    %p46 = scmp.eq.s32.totalorder %s8, 1
    %p47 = por %p45, %p46
    %p48 = scmp.ne.s32.totalorder %s40, %s43
    %p49 = scmp.eq.s32.totalorder %s8, 0
    %p50 = por %p48, %p49
    %p51 = scmp.ne.s32.totalorder %s40, %s43
    %p52 = scmp.eq.s32.totalorder %s13, 1
    %p53 = por %p51, %p52
    %p54 = scmp.ne.s32.totalorder %s43, %s44
    %p55 = scmp.eq.s32.totalorder %s13, 0
    %p56 = por %p54, %p55
    %p57 = scmp.ne.s32.totalorder %s43, %s44
    %p58 = scmp.eq.s32.totalorder %s14, 1
    %p59 = por %p57, %p58
    %p61 = scmp.ne.s32.totalorder %s44, %s60
    %p62 = scmp.eq.s32.totalorder %s14, 0
    %p63 = por %p61, %p62
    %s64 = ssub.s32 %s15, %s27
    %s65 = ssub.s32 %s16, %s23
    %s66 = sor.u32 %s64, %s65
    %p67 = scmp.eq.s32.totalorder %s66, 0
    %s69 = sadd.s32 %s68, 1
    %s70 = scalar_select %p67, %s68, %s69
    %p73 = pneg %p67
    %p74 = scmp.eq.s32.totalorder %s8, 1
    %p75 = por %p73, %p74
    %p76 = scmp.ne.s32.totalorder %s68, %s71
    %p77 = scmp.eq.s32.totalorder %s8, 0
    %p78 = por %p76, %p77
    %p79 = scmp.ne.s32.totalorder %s68, %s71
    %p80 = scmp.eq.s32.totalorder %s13, 1
    %p81 = por %p79, %p80
    %p82 = scmp.ne.s32.totalorder %s71, %s72
    %p83 = scmp.eq.s32.totalorder %s13, 0
    %p84 = por %p82, %p83
    %p85 = scmp.ne.s32.totalorder %s71, %s72
    %p86 = scmp.eq.s32.totalorder %s14, 1
    %p87 = por %p85, %p86
    %p89 = scmp.ne.s32.totalorder %s72, %s88
    %p90 = scmp.eq.s32.totalorder %s14, 0
    %p91 = por %p89, %p90
    %s92 = ssub.s32 %s15, %s27
    %s93 = ssub.s32 %s16, %s23
    %s94 = sor.u32 %s92, %s93
    %p95 = scmp.eq.s32.totalorder %s94, 0
    %s97 = sadd.s32 %s96, 1
    %s98 = scalar_select %p95, %s96, %s97
    %p101 = pneg %p95
    %p102 = scmp.eq.s32.totalorder %s8, 1
    %p103 = por %p101, %p102
    %p104 = scmp.ne.s32.totalorder %s96, %s99
    %p105 = scmp.eq.s32.totalorder %s8, 0
    %p106 = por %p104, %p105
    %p107 = scmp.ne.s32.totalorder %s96, %s99
    %p108 = scmp.eq.s32.totalorder %s13, 1
    %p109 = por %p107, %p108
    %p110 = scmp.ne.s32.totalorder %s99, %s100
    %p111 = scmp.eq.s32.totalorder %s13, 0
    %p112 = por %p110, %p111
    %p113 = scmp.ne.s32.totalorder %s99, %s100
    %p114 = scmp.eq.s32.totalorder %s14, 1
    %p115 = por %p113, %p114
    %p117 = scmp.ne.s32.totalorder %s100, %s116
    %p118 = scmp.eq.s32.totalorder %s14, 0
    %p119 = por %p117, %p118
    %p120 = scmp.le.s32.totalorder 1, %s8
    %p121 = scmp.lt.s32.totalorder %s8, 3
    %p122 = pnand %p120, %p121
    %p123 = pneg %p122
    // Predicated region
    $region9: #{up_forward.6} parent=5 // pred_check
      _
    $region10: #{up_forward.6} parent=5 // pred_check_branch
      %125 = sbr.rel (%p122) target = $region12
    $region11: #{up_forward.6} parent=5 // pred_region
      %s126 = ssub.s32 %s8, 1
    $region12: #{up_forward.6} parent=5 // pred_fallthru
      _
    %p127 = scmp.lt.s32.totalorder %s8, 2
    // Predicated region
    $region13: #{up_forward.6} parent=5 // pred_check
      %p128 = pneg %p127
    $region14: #{up_forward.6} parent=5 // pred_check_branch
      %130 = sbr.rel (%p128) target = $region16
    $region15: #{up_forward.6} parent=5 // pred_region
      // Predicated region
      $region17: #{up_forward.6} parent=15 // pred_check
        %p131 = pneg %p50
      $region18: #{up_forward.6} parent=15 // pred_check_branch
        %133 = sbr.rel (%p131) target = $region20
      $region19: #{up_forward.6} parent=15 // pred_region
        %s134 = smul.u32 %s16, 8
        %s135 = ssub.s32 %s134, 1
        %p136 = scmp.gt.s32.totalorder %s135, 0
        %s137 = scalar_select %p136, %s135, 0
        %p138 = scmp.lt.s32.totalorder %s15, 1
        %s139 = scalar_select %p138, %s15, 1
        %p140 = scmp.lt.s32.totalorder %s137, 7
        %s141 = scalar_select %p140, %s137, 7
        %s142 = smul.addr %s141, 2
        %s143 = smul.addr %s139, 16
        %s144 = sadd.s32 %s142, %s143
        %s145 = smul.addr %s144, 4
        %s146 = scalar_lea.vmem %s0, %s145
        %s147 = smul.u32 %s16, 8
        %s148 = ssub.s32 %s147, 1
        %p149 = scmp.gt.s32.totalorder %s148, 0
        %s150 = scalar_select %p149, %s148, 0
      $region20: #{up_forward.6} parent=15 // pred_fallthru
        _
      // Predicated region
      $region21: #{up_forward.6} parent=15 // pred_check
        %p151 = pneg %p78
      $region22: #{up_forward.6} parent=15 // pred_check_branch
        %153 = sbr.rel (%p151) target = $region24
      $region23: #{up_forward.6} parent=15 // pred_region
        %s154 = smul.u32 8, %s16
        %p155 = scmp.lt.s32.totalorder %s15, 1
        %s156 = scalar_select %p155, %s15, 1
        %p157 = scmp.lt.s32.totalorder %s154, 7
        %s158 = scalar_select %p157, %s154, 7
        %s159 = smul.addr %s158, 2
        %s160 = smul.addr %s156, 16
        %s161 = sadd.s32 %s159, %s160
        %s162 = smul.addr %s161, 4
        %s163 = scalar_lea.vmem %s1, %s162
        %s164 = smul.u32 8, %s16
      $region24: #{up_forward.6} parent=15 // pred_fallthru
        _
    $region16: #{up_forward.6} parent=5 // pred_fallthru
      _
    %p165 = scmp.le.s32.totalorder 1, %s8
    %p166 = scmp.lt.s32.totalorder %s8, 3
    %p167 = pnand %p165, %p166
    %p168 = pneg %p167
    // Predicated region
    $region25: #{up_forward.6} parent=5 // pred_check
      _
    $region26: #{up_forward.6} parent=5 // pred_check_branch
      %170 = sbr.rel (%p167) target = $region28
    $region27: #{up_forward.6} parent=5 // pred_region
      %s171 = ssub.s32 %s8, 1
      %s172 = smul.u32 %s18, 8
      %s173 = ssub.s32 %s172, 1
      %p174 = scmp.gt.s32.totalorder %s173, 0
      %s175 = scalar_select %p174, %s173, 0
      %p176 = scmp.lt.s32.totalorder %s17, 1
      %s177 = scalar_select %p176, %s17, 1
      %p178 = scmp.lt.s32.totalorder %s175, 7
      %s179 = scalar_select %p178, %s175, 7
      %s180 = smul.addr %s179, 2
      %s181 = smul.addr %s177, 16
      %s182 = sadd.s32 %s180, %s181
      %s183 = smul.addr %s182, 4
      %s184 = scalar_lea.vmem %s0, %s183
      %p185 = pneg %p56
      %p186 = pneg %p53
      %s187 = smul.u32 8, %s18
      %p188 = scmp.lt.s32.totalorder %s17, 1
      %s189 = scalar_select %p188, %s17, 1
      %p190 = scmp.lt.s32.totalorder %s187, 7
      %s191 = scalar_select %p190, %s187, 7
      %s192 = smul.addr %s191, 2
      %s193 = smul.addr %s189, 16
      %s194 = sadd.s32 %s192, %s193
      %s195 = smul.addr %s194, 4
      %s196 = scalar_lea.vmem %s1, %s195
      %p197 = pneg %p84
      %p198 = pneg %p81
      %p199 = pneg %p112
      %p200 = pneg %p109
      %s201 = smul.u32 16, %s18
      %p202 = scmp.lt.s32.totalorder %s17, 1
      %s203 = scalar_select %p202, %s17, 1
      %p204 = scmp.lt.s32.totalorder %s201, 15
      %s205 = scalar_select %p204, %s201, 15
      %s206 = smul.addr %s203, 16
      %s207 = sadd.s32 %s205, %s206
      %s208 = smul.addr %s207, 4
      %s209 = scalar_lea.vmem %s2, %s208
      %s210 = smul.u32 %s18, 8
      %s211 = ssub.s32 %s210, 1
      %p212 = scmp.gt.s32.totalorder %s211, 0
      %s213 = scalar_select %p212, %s211, 0
      %p214 = scmp.lt.s32.totalorder %s17, 1
      %s215 = scalar_select %p214, %s17, 1
      %p216 = scmp.lt.s32.totalorder %s213, 7
      %s217 = scalar_select %p216, %s213, 7
      %s218 = smul.addr %s217, 2
      %s219 = smul.addr %s215, 16
      %s220 = sadd.s32 %s218, %s219
      %s221 = smul.addr %s220, 4
      %s222 = scalar_lea.vmem %s0, %s221
      %s223 = smul.u32 %s18, 8
      %s224 = ssub.s32 %s223, 1
      %p225 = scmp.gt.s32.totalorder %s224, 0
      %s226 = scalar_select %p225, %s224, 0
      %s227 = smul.u32 8, %s18
      %p228 = scmp.lt.s32.totalorder %s17, 1
      %s229 = scalar_select %p228, %s17, 1
      %p230 = scmp.lt.s32.totalorder %s227, 7
      %s231 = scalar_select %p230, %s227, 7
      %s232 = smul.addr %s231, 2
      %s233 = smul.addr %s229, 16
      %s234 = sadd.s32 %s232, %s233
      %s235 = smul.addr %s234, 4
      %s236 = scalar_lea.vmem %s1, %s235
      %s237 = smul.u32 8, %s18
      %s238 = smul.u32 16, %s18
      %p239 = scmp.lt.s32.totalorder %s17, 1
      %s240 = scalar_select %p239, %s17, 1
      %p241 = scmp.lt.s32.totalorder %s238, 15
      %s242 = scalar_select %p241, %s238, 15
      %s243 = smul.addr %s240, 16
      %s244 = sadd.s32 %s242, %s243
      %s245 = smul.addr %s244, 4
      %s246 = scalar_lea.vmem %s2, %s245
      %s247 = smul.u32 16, %s18
      %v248 = vld [vmem:[%s236] sm:$0xff]
      %v249 = vld [vmem:[%s236 + $0x8] sm:$0xff]
      %v250 = vld [vmem:[%s236 + $0x10] sm:$0xff]
      %v251 = vld [vmem:[%s236 + $0x18] sm:$0xff]
      %v252 = vld [vmem:[%s236 + $0x20] sm:$0xff]
      %v253 = vld [vmem:[%s236 + $0x28] sm:$0xff]
      %v254 = vld [vmem:[%s236 + $0x30] sm:$0xff]
      %v255 = vld [vmem:[%s236 + $0x38] sm:$0xff]
      %v256 = vunpack.c.l.bf16 %v248
      %v257 = vunpack.c.h.bf16 %v248
      %v258 = vunpack.c.l.bf16 %v249
      %v259 = vunpack.c.h.bf16 %v249
      %v260 = vunpack.c.l.bf16 %v250
      %v261 = vunpack.c.h.bf16 %v250
      %v262 = vunpack.c.l.bf16 %v251
      %v263 = vunpack.c.h.bf16 %v251
      %v264 = vunpack.c.l.bf16 %v252
      %v265 = vunpack.c.h.bf16 %v252
      %v266 = vunpack.c.l.bf16 %v253
      %v267 = vunpack.c.h.bf16 %v253
      %v268 = vunpack.c.l.bf16 %v254
      %v269 = vunpack.c.h.bf16 %v254
      %v270 = vunpack.c.l.bf16 %v255
      %v271 = vunpack.c.h.bf16 %v255
      %v272 = vld [vmem:[%s222] sm:$0xff]
      %v273 = vunpack.c.h.bf16 %v272
      %s274 = smul.u32 %s18, 8
      %v275 = vstv %s274
      %v276 = vadd.s32 %v275, 1
      %v277 = vadd.s32 %v275, 2
      %v278 = vadd.s32 %v275, 3
      %v279 = vadd.s32 %v275, 4
      %v280 = vadd.s32 %v275, 5
      %v281 = vadd.s32 %v275, 6
      %v282 = vadd.s32 %v275, 7
      %vm283 = vcmp.eq.s32.totalorder %v275, 0
      %vm284 = vcmp.eq.s32.totalorder %v276, 0
      %vm285 = vcmp.eq.s32.totalorder %v277, 0
      %vm286 = vcmp.eq.s32.totalorder %v278, 0
      %vm287 = vcmp.eq.s32.totalorder %v279, 0
      %vm288 = vcmp.eq.s32.totalorder %v280, 0
      %vm289 = vcmp.eq.s32.totalorder %v281, 0
      %vm290 = vcmp.eq.s32.totalorder %v282, 0
      %v291 = vsel %vm283, 1, 0
      %v292 = vsel %vm284, 1, 0
      %v293 = vsel %vm285, 1, 0
      %v294 = vsel %vm286, 1, 0
      %v295 = vsel %vm287, 1, 0
      %v296 = vsel %vm288, 1, 0
      %v297 = vsel %vm289, 1, 0
      %v298 = vsel %vm290, 1, 0
      %vm299 = vcmp.eq.s32.totalorder %v291, 1
      %vm300 = vcmp.eq.s32.totalorder %v292, 1
      %vm301 = vcmp.eq.s32.totalorder %v293, 1
      %vm302 = vcmp.eq.s32.totalorder %v294, 1
      %vm303 = vcmp.eq.s32.totalorder %v295, 1
      %vm304 = vcmp.eq.s32.totalorder %v296, 1
      %vm305 = vcmp.eq.s32.totalorder %v297, 1
      %vm306 = vcmp.eq.s32.totalorder %v298, 1
      %v307 = vsel %vm299, %v256, %v273
      %v308 = vsel %vm300, %v258, %v257
      %v309 = vsel %vm301, %v260, %v259
      %v310 = vsel %vm302, %v262, %v261
      %v311 = vsel %vm303, %v264, %v263
      %v312 = vsel %vm304, %v266, %v265
      %v313 = vsel %vm305, %v268, %v267
      %v314 = vsel %vm306, %v270, %v269
      %v323 = vrot.slane %v307, 7
      %v324 = vrot.slane %v308, 7
      %v325 = vrot.slane %v309, 7
      %v326 = vrot.slane %v310, 7
      %v327 = vrot.slane %v311, 7
      %v328 = vrot.slane %v312, 7
      %v329 = vrot.slane %v313, 7
      %v330 = vrot.slane %v314, 7
      %331 = vrot.lane.b32.xlu0 %v323, 64
      %v332 = vpop.permute.xlu0 %331
      %333 = vrot.lane.b32.xlu0 %v324, 64
      %v334 = vpop.permute.xlu0 %333
      %335 = vrot.lane.b32.xlu0 %v325, 64
      %v336 = vpop.permute.xlu0 %335
      %337 = vrot.lane.b32.xlu0 %v326, 64
      %v338 = vpop.permute.xlu0 %337
      %339 = vrot.lane.b32.xlu0 %v327, 64
      %v340 = vpop.permute.xlu0 %339
      %341 = vrot.lane.b32.xlu0 %v328, 64
      %v342 = vpop.permute.xlu0 %341
      %343 = vrot.lane.b32.xlu0 %v329, 64
      %v344 = vpop.permute.xlu0 %343
      %345 = vrot.lane.b32.xlu0 %v330, 64
      %v346 = vpop.permute.xlu0 %345
      %vm355 = vcmask 1040384
      %v356 = vsel %vm355, %v307, %v332
      %v357 = vsel %vm355, %v308, %v334
      %v358 = vsel %vm355, %v309, %v336
      %v359 = vsel %vm355, %v310, %v338
      %v360 = vsel %vm355, %v311, %v340
      %v361 = vsel %vm355, %v312, %v342
      %v362 = vsel %vm355, %v313, %v344
      %v363 = vsel %vm355, %v314, %v346
      %v372 = vrot.slane %v256, 7
      %v373 = vrot.slane %v258, 7
      %v374 = vrot.slane %v260, 7
      %v375 = vrot.slane %v262, 7
      %v376 = vrot.slane %v264, 7
      %v377 = vrot.slane %v266, 7
      %v378 = vrot.slane %v268, 7
      %v379 = vrot.slane %v270, 7
      %380 = vrot.lane.b32.xlu0 %v372, 64
      %v381 = vpop.permute.xlu0 %380
      %382 = vrot.lane.b32.xlu0 %v373, 64
      %v383 = vpop.permute.xlu0 %382
      %384 = vrot.lane.b32.xlu0 %v374, 64
      %v385 = vpop.permute.xlu0 %384
      %386 = vrot.lane.b32.xlu0 %v375, 64
      %v387 = vpop.permute.xlu0 %386
      %388 = vrot.lane.b32.xlu0 %v376, 64
      %v389 = vpop.permute.xlu0 %388
      %390 = vrot.lane.b32.xlu0 %v377, 64
      %v391 = vpop.permute.xlu0 %390
      %392 = vrot.lane.b32.xlu0 %v378, 64
      %v393 = vpop.permute.xlu0 %392
      %394 = vrot.lane.b32.xlu0 %v379, 64
      %v395 = vpop.permute.xlu0 %394
      %v404 = vsel %vm355, %v256, %v381
      %v405 = vsel %vm355, %v258, %v383
      %v406 = vsel %vm355, %v260, %v385
      %v407 = vsel %vm355, %v262, %v387
      %v408 = vsel %vm355, %v264, %v389
      %v409 = vsel %vm355, %v266, %v391
      %v410 = vsel %vm355, %v268, %v393
      %v411 = vsel %vm355, %v270, %v395
      %v420 = vrot.slane %v257, 7
      %v421 = vrot.slane %v259, 7
      %v422 = vrot.slane %v261, 7
      %v423 = vrot.slane %v263, 7
      %v424 = vrot.slane %v265, 7
      %v425 = vrot.slane %v267, 7
      %v426 = vrot.slane %v269, 7
      %v427 = vrot.slane %v271, 7
      %428 = vrot.lane.b32.xlu0 %v420, 64
      %v429 = vpop.permute.xlu0 %428
      %430 = vrot.lane.b32.xlu0 %v421, 64
      %v431 = vpop.permute.xlu0 %430
      %432 = vrot.lane.b32.xlu0 %v422, 64
      %v433 = vpop.permute.xlu0 %432
      %434 = vrot.lane.b32.xlu0 %v423, 64
      %v435 = vpop.permute.xlu0 %434
      %436 = vrot.lane.b32.xlu0 %v424, 64
      %v437 = vpop.permute.xlu0 %436
      %438 = vrot.lane.b32.xlu0 %v425, 64
      %v439 = vpop.permute.xlu0 %438
      %440 = vrot.lane.b32.xlu0 %v426, 64
      %v441 = vpop.permute.xlu0 %440
      %442 = vrot.lane.b32.xlu0 %v427, 64
      %v443 = vpop.permute.xlu0 %442
      %v452 = vsel %vm355, %v257, %v429
      %v453 = vsel %vm355, %v259, %v431
      %v454 = vsel %vm355, %v261, %v433
      %v455 = vsel %vm355, %v263, %v435
      %v456 = vsel %vm355, %v265, %v437
      %v457 = vsel %vm355, %v267, %v439
      %v458 = vsel %vm355, %v269, %v441
      %v459 = vsel %vm355, %v271, %v443
      %v460 = vadd.f32 %v356, %v307
      %v461 = vadd.f32 %v357, %v308
      %v462 = vadd.f32 %v358, %v309
      %v463 = vadd.f32 %v359, %v310
      %v464 = vadd.f32 %v360, %v311
      %v465 = vadd.f32 %v361, %v312
      %v466 = vadd.f32 %v362, %v313
      %v467 = vadd.f32 %v363, %v314
      %v468 = vadd.f32 %v460, %v404
      %v469 = vadd.f32 %v461, %v405
      %v470 = vadd.f32 %v462, %v406
      %v471 = vadd.f32 %v463, %v407
      %v472 = vadd.f32 %v464, %v408
      %v473 = vadd.f32 %v465, %v409
      %v474 = vadd.f32 %v466, %v410
      %v475 = vadd.f32 %v467, %v411
      %v476 = vadd.f32 %v468, %v256
      %v477 = vadd.f32 %v469, %v258
      %v478 = vadd.f32 %v470, %v260
      %v479 = vadd.f32 %v471, %v262
      %v480 = vadd.f32 %v472, %v264
      %v481 = vadd.f32 %v473, %v266
      %v482 = vadd.f32 %v474, %v268
      %v483 = vadd.f32 %v475, %v270
      %v484 = vmul.f32 %v476, 0.25
      %v485 = vmul.f32 %v477, 0.25
      %v486 = vmul.f32 %v478, 0.25
      %v487 = vmul.f32 %v479, 0.25
      %v488 = vmul.f32 %v480, 0.25
      %v489 = vmul.f32 %v481, 0.25
      %v490 = vmul.f32 %v482, 0.25
      %v491 = vmul.f32 %v483, 0.25
      %492 = vrot.lane.b32.xlu0 %v307, 64
      %v493 = vpop.permute.xlu0 %492
      %494 = vrot.lane.b32.xlu0 %v308, 64
      %v495 = vpop.permute.xlu0 %494
      %496 = vrot.lane.b32.xlu0 %v309, 64
      %v497 = vpop.permute.xlu0 %496
      %498 = vrot.lane.b32.xlu0 %v310, 64
      %v499 = vpop.permute.xlu0 %498
      %500 = vrot.lane.b32.xlu0 %v311, 64
      %v501 = vpop.permute.xlu0 %500
      %502 = vrot.lane.b32.xlu0 %v312, 64
      %v503 = vpop.permute.xlu0 %502
      %504 = vrot.lane.b32.xlu0 %v313, 64
      %v505 = vpop.permute.xlu0 %504
      %506 = vrot.lane.b32.xlu0 %v314, 64
      %v507 = vpop.permute.xlu0 %506
      %v516 = vadd.f32 %v307, %v493
      %v517 = vadd.f32 %v308, %v495
      %v518 = vadd.f32 %v309, %v497
      %v519 = vadd.f32 %v310, %v499
      %v520 = vadd.f32 %v311, %v501
      %v521 = vadd.f32 %v312, %v503
      %v522 = vadd.f32 %v313, %v505
      %v523 = vadd.f32 %v314, %v507
      %v524 = vadd.f32 %v516, %v256
      %v525 = vadd.f32 %v517, %v258
      %v526 = vadd.f32 %v518, %v260
      %v527 = vadd.f32 %v519, %v262
      %v528 = vadd.f32 %v520, %v264
      %v529 = vadd.f32 %v521, %v266
      %v530 = vadd.f32 %v522, %v268
      %v531 = vadd.f32 %v523, %v270
      %532 = vrot.lane.b32.xlu0 %v256, 64
      %v533 = vpop.permute.xlu0 %532
      %534 = vrot.lane.b32.xlu0 %v258, 64
      %v535 = vpop.permute.xlu0 %534
      %536 = vrot.lane.b32.xlu0 %v260, 64
      %v537 = vpop.permute.xlu0 %536
      %538 = vrot.lane.b32.xlu0 %v262, 64
      %v539 = vpop.permute.xlu0 %538
      %540 = vrot.lane.b32.xlu0 %v264, 64
      %v541 = vpop.permute.xlu0 %540
      %542 = vrot.lane.b32.xlu0 %v266, 64
      %v543 = vpop.permute.xlu0 %542
      %544 = vrot.lane.b32.xlu0 %v268, 64
      %v545 = vpop.permute.xlu0 %544
      %546 = vrot.lane.b32.xlu0 %v270, 64
      %v547 = vpop.permute.xlu0 %546
      %v556 = vadd.f32 %v524, %v533
      %v557 = vadd.f32 %v525, %v535
      %v558 = vadd.f32 %v526, %v537
      %v559 = vadd.f32 %v527, %v539
      %v560 = vadd.f32 %v528, %v541
      %v561 = vadd.f32 %v529, %v543
      %v562 = vadd.f32 %v530, %v545
      %v563 = vadd.f32 %v531, %v547
      %v564 = vmul.f32 %v556, 0.25
      %v565 = vmul.f32 %v557, 0.25
      %v566 = vmul.f32 %v558, 0.25
      %v567 = vmul.f32 %v559, 0.25
      %v568 = vmul.f32 %v560, 0.25
      %v569 = vmul.f32 %v561, 0.25
      %v570 = vmul.f32 %v562, 0.25
      %v571 = vmul.f32 %v563, 0.25
      %v572 = vadd.f32 %v404, %v256
      %v573 = vadd.f32 %v405, %v258
      %v574 = vadd.f32 %v406, %v260
      %v575 = vadd.f32 %v407, %v262
      %v576 = vadd.f32 %v408, %v264
      %v577 = vadd.f32 %v409, %v266
      %v578 = vadd.f32 %v410, %v268
      %v579 = vadd.f32 %v411, %v270
      %v580 = vadd.f32 %v572, %v452
      %v581 = vadd.f32 %v573, %v453
      %v582 = vadd.f32 %v574, %v454
      %v583 = vadd.f32 %v575, %v455
      %v584 = vadd.f32 %v576, %v456
      %v585 = vadd.f32 %v577, %v457
      %v586 = vadd.f32 %v578, %v458
      %v587 = vadd.f32 %v579, %v459
      %v588 = vadd.f32 %v580, %v257
      %v589 = vadd.f32 %v581, %v259
      %v590 = vadd.f32 %v582, %v261
      %v591 = vadd.f32 %v583, %v263
      %v592 = vadd.f32 %v584, %v265
      %v593 = vadd.f32 %v585, %v267
      %v594 = vadd.f32 %v586, %v269
      %v595 = vadd.f32 %v587, %v271
      %v596 = vmul.f32 %v588, 0.25
      %v597 = vmul.f32 %v589, 0.25
      %v598 = vmul.f32 %v590, 0.25
      %v599 = vmul.f32 %v591, 0.25
      %v600 = vmul.f32 %v592, 0.25
      %v601 = vmul.f32 %v593, 0.25
      %v602 = vmul.f32 %v594, 0.25
      %v603 = vmul.f32 %v595, 0.25
      %v604 = vadd.f32 %v256, %v533
      %v605 = vadd.f32 %v258, %v535
      %v606 = vadd.f32 %v260, %v537
      %v607 = vadd.f32 %v262, %v539
      %v608 = vadd.f32 %v264, %v541
      %v609 = vadd.f32 %v266, %v543
      %v610 = vadd.f32 %v268, %v545
      %v611 = vadd.f32 %v270, %v547
      %v612 = vadd.f32 %v604, %v257
      %v613 = vadd.f32 %v605, %v259
      %v614 = vadd.f32 %v606, %v261
      %v615 = vadd.f32 %v607, %v263
      %v616 = vadd.f32 %v608, %v265
      %v617 = vadd.f32 %v609, %v267
      %v618 = vadd.f32 %v610, %v269
      %v619 = vadd.f32 %v611, %v271
      %620 = vrot.lane.b32.xlu0 %v257, 64
      %v621 = vpop.permute.xlu0 %620
      %622 = vrot.lane.b32.xlu0 %v259, 64
      %v623 = vpop.permute.xlu0 %622
      %624 = vrot.lane.b32.xlu0 %v261, 64
      %v625 = vpop.permute.xlu0 %624
      %626 = vrot.lane.b32.xlu0 %v263, 64
      %v627 = vpop.permute.xlu0 %626
      %628 = vrot.lane.b32.xlu0 %v265, 64
      %v629 = vpop.permute.xlu0 %628
      %630 = vrot.lane.b32.xlu0 %v267, 64
      %v631 = vpop.permute.xlu0 %630
      %632 = vrot.lane.b32.xlu0 %v269, 64
      %v633 = vpop.permute.xlu0 %632
      %634 = vrot.lane.b32.xlu0 %v271, 64
      %v635 = vpop.permute.xlu0 %634
      %v644 = vadd.f32 %v612, %v621
      %v645 = vadd.f32 %v613, %v623
      %v646 = vadd.f32 %v614, %v625
      %v647 = vadd.f32 %v615, %v627
      %v648 = vadd.f32 %v616, %v629
      %v649 = vadd.f32 %v617, %v631
      %v650 = vadd.f32 %v618, %v633
      %v651 = vadd.f32 %v619, %v635
      %v652 = vmul.f32 %v644, 0.25
      %v653 = vmul.f32 %v645, 0.25
      %v654 = vmul.f32 %v646, 0.25
      %v655 = vmul.f32 %v647, 0.25
      %v656 = vmul.f32 %v648, 0.25
      %v657 = vmul.f32 %v649, 0.25
      %v658 = vmul.f32 %v650, 0.25
      %v659 = vmul.f32 %v651, 0.25
      %668 = vrot.lane.b32.xlu0 %v564, 64
      %v669 = vpop.permute.xlu0 %668
      %670 = vrot.lane.b32.xlu0 %v565, 64
      %v671 = vpop.permute.xlu0 %670
      %672 = vrot.lane.b32.xlu0 %v566, 64
      %v673 = vpop.permute.xlu0 %672
      %674 = vrot.lane.b32.xlu0 %v567, 64
      %v675 = vpop.permute.xlu0 %674
      %676 = vrot.lane.b32.xlu0 %v568, 64
      %v677 = vpop.permute.xlu0 %676
      %678 = vrot.lane.b32.xlu0 %v569, 64
      %v679 = vpop.permute.xlu0 %678
      %680 = vrot.lane.b32.xlu0 %v570, 64
      %v681 = vpop.permute.xlu0 %680
      %682 = vrot.lane.b32.xlu0 %v571, 64
      %v683 = vpop.permute.xlu0 %682
      %vm692 = vcmask 523264
      %v693 = vsel %vm692, %v484, %v669
      %v694 = vsel %vm692, %v485, %v671
      %v695 = vsel %vm692, %v486, %v673
      %v696 = vsel %vm692, %v487, %v675
      %v697 = vsel %vm692, %v488, %v677
      %v698 = vsel %vm692, %v489, %v679
      %v699 = vsel %vm692, %v490, %v681
      %v700 = vsel %vm692, %v491, %v683
      %709 = vrot.lane.b32.xlu0 %v652, 64
      %v710 = vpop.permute.xlu0 %709
      %711 = vrot.lane.b32.xlu0 %v653, 64
      %v712 = vpop.permute.xlu0 %711
      %713 = vrot.lane.b32.xlu0 %v654, 64
      %v714 = vpop.permute.xlu0 %713
      %715 = vrot.lane.b32.xlu0 %v655, 64
      %v716 = vpop.permute.xlu0 %715
      %717 = vrot.lane.b32.xlu0 %v656, 64
      %v718 = vpop.permute.xlu0 %717
      %719 = vrot.lane.b32.xlu0 %v657, 64
      %v720 = vpop.permute.xlu0 %719
      %721 = vrot.lane.b32.xlu0 %v658, 64
      %v722 = vpop.permute.xlu0 %721
      %723 = vrot.lane.b32.xlu0 %v659, 64
      %v724 = vpop.permute.xlu0 %723
      %v733 = vsel %vm692, %v596, %v710
      %v734 = vsel %vm692, %v597, %v712
      %v735 = vsel %vm692, %v598, %v714
      %v736 = vsel %vm692, %v599, %v716
      %v737 = vsel %vm692, %v600, %v718
      %v738 = vsel %vm692, %v601, %v720
      %v739 = vsel %vm692, %v602, %v722
      %v740 = vsel %vm692, %v603, %v724
      %v741 = vpack.c.bf16 %v693, %v693
      %742 = vst [vmem:[%s246] sm:$0xf] %v741
      %v743 = vpack.c.bf16 %v733, %v733
      %s744 = scalar_lea.vmem %s246, 4
      %745 = vst [vmem:[%s744] sm:$0xf] %v743
      %v746 = vpack.c.bf16 %v694, %v694
      %s747 = scalar_lea.vmem %s246, 8
      %748 = vst [vmem:[%s747] sm:$0xf] %v746
      %v749 = vpack.c.bf16 %v734, %v734
      %s750 = scalar_lea.vmem %s246, 12
      %751 = vst [vmem:[%s750] sm:$0xf] %v749
      %v752 = vpack.c.bf16 %v695, %v695
      %s753 = scalar_lea.vmem %s246, 16
      %754 = vst [vmem:[%s753] sm:$0xf] %v752
      %v755 = vpack.c.bf16 %v735, %v735
      %s756 = scalar_lea.vmem %s246, 20
      %757 = vst [vmem:[%s756] sm:$0xf] %v755
      %v758 = vpack.c.bf16 %v696, %v696
      %s759 = scalar_lea.vmem %s246, 24
      %760 = vst [vmem:[%s759] sm:$0xf] %v758
      %v761 = vpack.c.bf16 %v736, %v736
      %s762 = scalar_lea.vmem %s246, 28
      %763 = vst [vmem:[%s762] sm:$0xf] %v761
      %v764 = vpack.c.bf16 %v697, %v697
      %s765 = scalar_lea.vmem %s246, 32
      %766 = vst [vmem:[%s765] sm:$0xf] %v764
      %v767 = vpack.c.bf16 %v737, %v737
      %s768 = scalar_lea.vmem %s246, 36
      %769 = vst [vmem:[%s768] sm:$0xf] %v767
      %v770 = vpack.c.bf16 %v698, %v698
      %s771 = scalar_lea.vmem %s246, 40
      %772 = vst [vmem:[%s771] sm:$0xf] %v770
      %v773 = vpack.c.bf16 %v738, %v738
      %s774 = scalar_lea.vmem %s246, 44
      %775 = vst [vmem:[%s774] sm:$0xf] %v773
      %v776 = vpack.c.bf16 %v699, %v699
      %s777 = scalar_lea.vmem %s246, 48
      %778 = vst [vmem:[%s777] sm:$0xf] %v776
      %v779 = vpack.c.bf16 %v739, %v739
      %s780 = scalar_lea.vmem %s246, 52
      %781 = vst [vmem:[%s780] sm:$0xf] %v779
      %v782 = vpack.c.bf16 %v700, %v700
      %s783 = scalar_lea.vmem %s246, 56
      %784 = vst [vmem:[%s783] sm:$0xf] %v782
      %v785 = vpack.c.bf16 %v740, %v740
      %s786 = scalar_lea.vmem %s246, 60
      %787 = vst [vmem:[%s786] sm:$0xf] %v785
      %s788 = smul.u32 16, %s18
      %p789 = scmp.lt.s32.totalorder %s17, 1
      %s790 = scalar_select %p789, %s17, 1
      %p791 = scmp.lt.s32.totalorder %s788, 15
      %s792 = scalar_select %p791, %s788, 15
      %s793 = smul.addr %s790, 16
      %s794 = sadd.s32 %s792, %s793
      %s795 = smul.addr %s794, 4
      %s796 = scalar_lea.vmem %s2, %s795
      // Predicated region
      $region29: #{up_forward.6} parent=27 // pred_check
        %p797 = pneg %p109
      $region30: #{up_forward.6} parent=27 // pred_check_branch
        %799 = sbr.rel (%p797) target = $region32
      $region31: #{up_forward.6} parent=27 // pred_region
        %s800 = smul.u32 16, %s18
      $region32: #{up_forward.6} parent=27 // pred_fallthru
        _
    $region28: #{up_forward.6} parent=5 // pred_fallthru
      _
    %p801 = scmp.le.s32.totalorder 2, %s8
    // Predicated region
    $region33: #{up_forward.6} parent=5 // pred_check
      %p802 = pneg %p801
    $region34: #{up_forward.6} parent=5 // pred_check_branch
      %804 = sbr.rel (%p802) target = $region36
    $region35: #{up_forward.6} parent=5 // pred_region
      %s805 = ssub.s32 %s8, 2
      // Predicated region
      $region37: #{up_forward.6} parent=35 // pred_check
        %p806 = pneg %p115
      $region38: #{up_forward.6} parent=35 // pred_check_branch
        %808 = sbr.rel (%p806) target = $region40
      $region39: #{up_forward.6} parent=35 // pred_region
        %s809 = smul.u32 16, %s20
        %p810 = scmp.lt.s32.totalorder %s19, 1
        %s811 = scalar_select %p810, %s19, 1
        %p812 = scmp.lt.s32.totalorder %s809, 15
        %s813 = scalar_select %p812, %s809, 15
        %s814 = smul.addr %s811, 16
        %s815 = sadd.s32 %s813, %s814
        %s816 = smul.addr %s815, 4
        %s817 = scalar_lea.vmem %s2, %s816
      $region40: #{up_forward.6} parent=35 // pred_fallthru
        _
    $region36: #{up_forward.6} parent=5 // pred_fallthru
      _
  $region6: #{up_forward.6} parent=0 // loop_footer
    %s12 = sadd.s32 1, %s8
  $region7: #{up_forward.6} parent=0 // loop_footer_branch
    %7 = sbr.rel target = $region3
  $region8: #{up_forward.6} parent=0 // loop_exit
    _

// kernel: up_forward.5
$region0: #{up_forward.5}
  #allocation0 [shape = 'u32[]', space=smem, size = 0x4, offset = 0x4, fixed_abs, tag = 'smem constant byte address 0x4 - core index']
  #allocation1 [shape = 'u32[144,128]{1,0:T(1,128)}', space=vmem, size = 0x12000, scoped, tag = 'internal scratch']
  #allocation2 [shape = 'f32[64,256]{1,0:T(8,128)}', space=vmem, size = 0x10000, scoped, tag = 'scratch operand']
  %s0 = inlined_call_operand.vmem [shape: bf16[128,64], index: 0, kind: input, shape index: {}]
  %s1 = inlined_call_operand.vmem [shape: bf16[64,256], index: 1, kind: input, shape index: {}]
  %s2 = inlined_call_operand.vmem [shape: f32[1,256], index: 2, kind: input, shape index: {}]
  %s3 = inlined_call_operand.vmem [shape: bf16[128,256], index: 3, kind: output, shape index: {}]
  %s4 = sld [smem:[#allocation0]]
  $region53: #{up_forward.5} parent=0
    _
  %s6 = ssub.s32 1, %s4
  %s7 = scalar_select 0, %s6, %s4
  loop: start=0, step=1, limit=4
  $region2: #{up_forward.5} parent=0 // loop_pre_header
    _
  $region3: #{up_forward.5} parent=0 // loop_header
    %s9 = sphi 0, %s13
    %p10 = scmp.ge.s32.totalorder %s9, 4
    %s16 = sphi 0, %s28
    %s17 = sphi 0, %s24
    %s18 = sphi 0, %s16
    %s19 = sphi 0, %s17
    %s20 = sphi 0, %s18
    %s21 = sphi 0, %s19
    %s33 = sphi 0, %s35
    %s36 = sphi 0, %s33
    %s37 = sphi 0, %s36
    %s53 = sphi 0, %s37
    %s59 = sphi 0, %s61
    %s62 = sphi 0, %s59
    %s63 = sphi 0, %s62
    %s79 = sphi 0, %s63
    %s83 = sphi 0, %s83
    %s85 = sphi 0, %s83
    %s86 = sphi 0, %s85
    %s100 = sphi 0, %s86
    %s106 = sphi 0, %s108
    %s109 = sphi 0, %s106
    %s110 = sphi 0, %s109
    %s126 = sphi 0, %s110
  $region4: #{up_forward.5} parent=0 // loop_header_branch
    %12 = sbr.rel (%p10) target = $region8
  $region5: #{up_forward.5} parent=0 // loop_body
    %s14 = ssub.s32 %s9, 1
    %s15 = ssub.s32 %s9, 2
    %s22 = sadd.s32 1, %s17
    %p23 = scmp.ge.s32.totalorder %s22, 1
    %s24 = scalar_select %p23, 0, %s22
    %s25 = sadd.s32 1, %s16
    %s26 = scalar_select %p23, %s25, %s16
    %p27 = scmp.ge.s32.totalorder %s26, 2
    %s28 = scalar_select %p27, 0, %s26
    %s29 = ssub.s32 %s16, %s28
    %s30 = ssub.s32 %s17, %s24
    %s31 = sor.u32 %s29, %s30
    %p32 = scmp.eq.s32.totalorder %s31, 0
    %s34 = sadd.s32 %s33, 1
    %s35 = scalar_select %p32, %s33, %s34
    %p38 = pneg %p32
    %p39 = scmp.eq.s32.totalorder %s9, 1
    %p40 = por %p38, %p39
    %p41 = scmp.ne.s32.totalorder %s33, %s36
    %p42 = scmp.eq.s32.totalorder %s9, 0
    %p43 = por %p41, %p42
    %p44 = scmp.ne.s32.totalorder %s33, %s36
    %p45 = scmp.eq.s32.totalorder %s14, 1
    %p46 = por %p44, %p45
    %p47 = scmp.ne.s32.totalorder %s36, %s37
    %p48 = scmp.eq.s32.totalorder %s14, 0
    %p49 = por %p47, %p48
    %p50 = scmp.ne.s32.totalorder %s36, %s37
    %p51 = scmp.eq.s32.totalorder %s15, 1
    %p52 = por %p50, %p51
    %p54 = scmp.ne.s32.totalorder %s37, %s53
    %p55 = scmp.eq.s32.totalorder %s15, 0
    %p56 = por %p54, %p55
    %s57 = ssub.s32 %s17, %s24
    %p58 = scmp.eq.s32.totalorder %s57, 0
    %s60 = sadd.s32 %s59, 1
    %s61 = scalar_select %p58, %s59, %s60
    %p64 = pneg %p58
    %p65 = scmp.eq.s32.totalorder %s9, 1
    %p66 = por %p64, %p65
    %p67 = scmp.ne.s32.totalorder %s59, %s62
    %p68 = scmp.eq.s32.totalorder %s9, 0
    %p69 = por %p67, %p68
    %p70 = scmp.ne.s32.totalorder %s59, %s62
    %p71 = scmp.eq.s32.totalorder %s14, 1
    %p72 = por %p70, %p71
    %p73 = scmp.ne.s32.totalorder %s62, %s63
    %p74 = scmp.eq.s32.totalorder %s14, 0
    %p75 = por %p73, %p74
    %p76 = scmp.ne.s32.totalorder %s62, %s63
    %p77 = scmp.eq.s32.totalorder %s15, 1
    %p78 = por %p76, %p77
    %p80 = scmp.ne.s32.totalorder %s63, %s79
    %p81 = scmp.eq.s32.totalorder %s15, 0
    %p82 = por %p80, %p81
    %s84 = sadd.s32 %s83, 1
    %p87 = scmp.eq.s32.totalorder %s9, 1
    %p88 = scmp.ne.s32.totalorder %s83, %s85
    %p89 = scmp.eq.s32.totalorder %s9, 0
    %p90 = por %p88, %p89
    %p91 = scmp.ne.s32.totalorder %s83, %s85
    %p92 = scmp.eq.s32.totalorder %s14, 1
    %p93 = por %p91, %p92
    %p94 = scmp.ne.s32.totalorder %s85, %s86
    %p95 = scmp.eq.s32.totalorder %s14, 0
    %p96 = por %p94, %p95
    %p97 = scmp.ne.s32.totalorder %s85, %s86
    %p98 = scmp.eq.s32.totalorder %s15, 1
    %p99 = por %p97, %p98
    %p101 = scmp.ne.s32.totalorder %s86, %s100
    %p102 = scmp.eq.s32.totalorder %s15, 0
    %p103 = por %p101, %p102
    %s104 = ssub.s32 %s16, %s28
    %p105 = scmp.eq.s32.totalorder %s104, 0
    %s107 = sadd.s32 %s106, 1
    %s108 = scalar_select %p105, %s106, %s107
    %p111 = pneg %p105
    %p112 = scmp.eq.s32.totalorder %s9, 1
    %p113 = por %p111, %p112
    %p114 = scmp.ne.s32.totalorder %s106, %s109
    %p115 = scmp.eq.s32.totalorder %s9, 0
    %p116 = por %p114, %p115
    %p117 = scmp.ne.s32.totalorder %s106, %s109
    %p118 = scmp.eq.s32.totalorder %s14, 1
    %p119 = por %p117, %p118
    %p120 = scmp.ne.s32.totalorder %s109, %s110
    %p121 = scmp.eq.s32.totalorder %s14, 0
    %p122 = por %p120, %p121
    %p123 = scmp.ne.s32.totalorder %s109, %s110
    %p124 = scmp.eq.s32.totalorder %s15, 1
    %p125 = por %p123, %p124
    %p127 = scmp.ne.s32.totalorder %s110, %s126
    %p128 = scmp.eq.s32.totalorder %s15, 0
    %p129 = por %p127, %p128
    %p130 = scmp.le.s32.totalorder 1, %s9
    %p131 = scmp.lt.s32.totalorder %s9, 3
    %p132 = pnand %p130, %p131
    %p133 = pneg %p132
    // Predicated region
    $region9: #{up_forward.5} parent=5 // pred_check
      _
    $region10: #{up_forward.5} parent=5 // pred_check_branch
      %135 = sbr.rel (%p132) target = $region12
    $region11: #{up_forward.5} parent=5 // pred_region
      %s136 = ssub.s32 %s9, 1
      // Predicated region
      $region13: #{up_forward.5} parent=11 // pred_check
        %p137 = pneg %p75
      $region14: #{up_forward.5} parent=11 // pred_check_branch
        %139 = sbr.rel (%p137) target = $region16
      $region15: #{up_forward.5} parent=11 // pred_region
        %s140 = smul.u32 8, %s19
        %p141 = scmp.lt.s32.totalorder %s140, 7
        %s142 = scalar_select %p141, %s140, 7
        %s143 = smul.addr %s142, 2
        %s144 = smul.addr %s143, 4
        %s145 = scalar_lea.vmem %s1, %s144
        %s146 = smul.u32 8, %s19
      $region16: #{up_forward.5} parent=11 // pred_fallthru
        _
      // Predicated region
      $region17: #{up_forward.5} parent=11 // pred_check
        %p147 = pneg %p96
      $region18: #{up_forward.5} parent=11 // pred_check_branch
        %149 = sbr.rel (%p147) target = $region20
      $region19: #{up_forward.5} parent=11 // pred_region
        _
      $region20: #{up_forward.5} parent=11 // pred_fallthru
        _
    $region12: #{up_forward.5} parent=5 // pred_fallthru
      _
    %p150 = scmp.lt.s32.totalorder %s9, 2
    // Predicated region
    $region21: #{up_forward.5} parent=5 // pred_check
      %p151 = pneg %p150
    $region22: #{up_forward.5} parent=5 // pred_check_branch
      %153 = sbr.rel (%p151) target = $region24
    $region23: #{up_forward.5} parent=5 // pred_region
      // Predicated region
      $region25: #{up_forward.5} parent=23 // pred_check
        %p154 = pneg %p43
      $region26: #{up_forward.5} parent=23 // pred_check_branch
        %156 = sbr.rel (%p154) target = $region28
      $region27: #{up_forward.5} parent=23 // pred_region
        %s157 = smul.u32 8, %s16
        %p158 = scmp.lt.s32.totalorder %s157, 15
        %s159 = scalar_select %p158, %s157, 15
        %p160 = scmp.lt.s32.totalorder %s17, 0
        %s161 = scalar_select %p160, %s17, 0
        %s162 = sadd.s32 %s161, %s159
        %s163 = smul.addr %s162, 4
        %s164 = scalar_lea.vmem %s0, %s163
        %s165 = smul.u32 8, %s16
      $region28: #{up_forward.5} parent=23 // pred_fallthru
        _
    $region24: #{up_forward.5} parent=5 // pred_fallthru
      _
    %p166 = scmp.le.s32.totalorder 1, %s9
    %p167 = scmp.lt.s32.totalorder %s9, 3
    %p168 = pnand %p166, %p167
    %p169 = pneg %p168
    // Predicated region
    $region29: #{up_forward.5} parent=5 // pred_check
      _
    $region30: #{up_forward.5} parent=5 // pred_check_branch
      %171 = sbr.rel (%p168) target = $region32
    $region31: #{up_forward.5} parent=5 // pred_region
      %s172 = ssub.s32 %s9, 1
      %s173 = smul.u32 8, %s18
      %p174 = scmp.lt.s32.totalorder %s173, 15
      %s175 = scalar_select %p174, %s173, 15
      %p176 = scmp.lt.s32.totalorder %s19, 0
      %s177 = scalar_select %p176, %s19, 0
      %s178 = sadd.s32 %s177, %s175
      %s179 = smul.addr %s178, 4
      %s180 = scalar_lea.vmem %s0, %s179
      %p181 = pneg %p49
      %p182 = pneg %p46
      %s183 = smul.u32 8, %s19
      %p184 = scmp.lt.s32.totalorder %s183, 7
      %s185 = scalar_select %p184, %s183, 7
      %s186 = smul.addr %s185, 2
      %s187 = smul.addr %s186, 4
      %s188 = scalar_lea.vmem %s1, %s187
      %p189 = pneg %p75
      %p190 = pneg %p72
      %p191 = pneg %p96
      %p192 = pneg %p93
      %p193 = pneg %p122
      %p194 = pneg %p119
      %s195 = smul.u32 8, %s18
      %p196 = scmp.lt.s32.totalorder %s195, 15
      %s197 = scalar_select %p196, %s195, 15
      %s198 = smul.addr %s197, 2
      %s199 = smul.addr %s198, 4
      %s200 = scalar_lea.vmem %s3, %s199
      %s201 = smul.u32 8, %s18
      %p202 = scmp.lt.s32.totalorder %s201, 15
      %s203 = scalar_select %p202, %s201, 15
      %p204 = scmp.lt.s32.totalorder %s19, 0
      %s205 = scalar_select %p204, %s19, 0
      %s206 = sadd.s32 %s205, %s203
      %s207 = smul.addr %s206, 4
      %s208 = scalar_lea.vmem %s0, %s207
      %s209 = smul.u32 8, %s18
      %s210 = smul.u32 8, %s19
      %p211 = scmp.lt.s32.totalorder %s210, 7
      %s212 = scalar_select %p211, %s210, 7
      %s213 = smul.addr %s212, 2
      %s214 = smul.addr %s213, 4
      %s215 = scalar_lea.vmem %s1, %s214
      %s216 = smul.u32 8, %s19
      %s217 = smul.u32 8, %s18
      %p218 = scmp.lt.s32.totalorder %s217, 15
      %s219 = scalar_select %p218, %s217, 15
      %s220 = smul.addr %s219, 2
      %s221 = smul.addr %s220, 4
      %s222 = scalar_lea.vmem %s3, %s221
      %s223 = smul.u32 8, %s18
      %p225 = scmp.eq.s32.totalorder %s19, 0
      // Predicated region
      $region33: #{up_forward.5} parent=31 // pred_check
        %p226 = pneg %p225
      $region34: #{up_forward.5} parent=31 // pred_check_branch
        %228 = sbr.rel (%p226) target = $region36
      $region35: #{up_forward.5} parent=31 // pred_region
        %229 = vst [vmem:[#allocation2] sm:$0xff] 0.0
        %230 = vst [vmem:[#allocation2 + $0x8] sm:$0xff] 0.0
        %231 = vst [vmem:[#allocation2 + $0x10] sm:$0xff] 0.0
        %232 = vst [vmem:[#allocation2 + $0x18] sm:$0xff] 0.0
        %233 = vst [vmem:[#allocation2 + $0x20] sm:$0xff] 0.0
        %234 = vst [vmem:[#allocation2 + $0x28] sm:$0xff] 0.0
        %235 = vst [vmem:[#allocation2 + $0x30] sm:$0xff] 0.0
        %236 = vst [vmem:[#allocation2 + $0x38] sm:$0xff] 0.0
        %237 = vst [vmem:[#allocation2 + $0x40] sm:$0xff] 0.0
        %238 = vst [vmem:[#allocation2 + $0x48] sm:$0xff] 0.0
        %239 = vst [vmem:[#allocation2 + $0x50] sm:$0xff] 0.0
        %240 = vst [vmem:[#allocation2 + $0x58] sm:$0xff] 0.0
        %241 = vst [vmem:[#allocation2 + $0x60] sm:$0xff] 0.0
        %242 = vst [vmem:[#allocation2 + $0x68] sm:$0xff] 0.0
        %243 = vst [vmem:[#allocation2 + $0x70] sm:$0xff] 0.0
        %244 = vst [vmem:[#allocation2 + $0x78] sm:$0xff] 0.0
      $region36: #{up_forward.5} parent=31 // pred_fallthru
        _
      %v245 = vld [vmem:[#allocation2] sm:$0xff]
      %v246 = vld [vmem:[#allocation2 + $0x8] sm:$0xff]
      %v247 = vld [vmem:[#allocation2 + $0x10] sm:$0xff]
      %v248 = vld [vmem:[#allocation2 + $0x18] sm:$0xff]
      %v249 = vld [vmem:[#allocation2 + $0x20] sm:$0xff]
      %v250 = vld [vmem:[#allocation2 + $0x28] sm:$0xff]
      %v251 = vld [vmem:[#allocation2 + $0x30] sm:$0xff]
      %v252 = vld [vmem:[#allocation2 + $0x38] sm:$0xff]
      %v253 = vld [vmem:[#allocation2 + $0x40] sm:$0xff]
      %v254 = vld [vmem:[#allocation2 + $0x48] sm:$0xff]
      %v255 = vld [vmem:[#allocation2 + $0x50] sm:$0xff]
      %v256 = vld [vmem:[#allocation2 + $0x58] sm:$0xff]
      %v257 = vld [vmem:[#allocation2 + $0x60] sm:$0xff]
      %v258 = vld [vmem:[#allocation2 + $0x68] sm:$0xff]
      %v259 = vld [vmem:[#allocation2 + $0x70] sm:$0xff]
      %v260 = vld [vmem:[#allocation2 + $0x78] sm:$0xff]
      %v261 = vld [vmem:[%s208] sm:$0xf]
      %v262 = vld [vmem:[%s208 + $0x4] sm:$0xf]
      %v263 = vld [vmem:[%s208 + $0x8] sm:$0xf]
      %v264 = vld [vmem:[%s208 + $0xc] sm:$0xf]
      %v265 = vld [vmem:[%s208 + $0x10] sm:$0xf]
      %v266 = vld [vmem:[%s208 + $0x14] sm:$0xf]
      %v267 = vld [vmem:[%s208 + $0x18] sm:$0xf]
      %v268 = vld [vmem:[%s208 + $0x1c] sm:$0xf]
      %v269 = vld [vmem:[%s215] sm:$0xff]
      %v270 = vld [vmem:[%s215 + $0x8] sm:$0xff]
      %v271 = vld [vmem:[%s215 + $0x10] sm:$0xff]
      %v272 = vld [vmem:[%s215 + $0x18] sm:$0xff]
      %v273 = vld [vmem:[%s215 + $0x20] sm:$0xff]
      %v274 = vld [vmem:[%s215 + $0x28] sm:$0xff]
      %v275 = vld [vmem:[%s215 + $0x30] sm:$0xff]
      %v276 = vld [vmem:[%s215 + $0x38] sm:$0xff]
      %v285 = vunpack.c.l.b16 %v261
      %v286 = vunpack.c.l.b16 %v262
      %v287 = vunpack.c.l.b16 %v263
      %v288 = vunpack.c.l.b16 %v264
      %v289 = vunpack.c.l.b16 %v265
      %v290 = vunpack.c.l.b16 %v266
      %v291 = vunpack.c.l.b16 %v267
      %v292 = vunpack.c.l.b16 %v268
      %v293 = vpack.c.b16 %v286, %v285
      %v294 = vpack.c.b16 %v288, %v287
      %v295 = vpack.c.b16 %v290, %v289
      %v296 = vpack.c.b16 %v292, %v291
      %v305 = vunpack.c.l.b16 %v269
      %v306 = vunpack.c.h.b16 %v269
      %v307 = vunpack.c.l.b16 %v270
      %v308 = vunpack.c.h.b16 %v270
      %v309 = vunpack.c.l.b16 %v271
      %v310 = vunpack.c.h.b16 %v271
      %v311 = vunpack.c.l.b16 %v272
      %v312 = vunpack.c.h.b16 %v272
      %v313 = vunpack.c.l.b16 %v273
      %v314 = vunpack.c.h.b16 %v273
      %v315 = vunpack.c.l.b16 %v274
      %v316 = vunpack.c.h.b16 %v274
      %v317 = vunpack.c.l.b16 %v275
      %v318 = vunpack.c.h.b16 %v275
      %v319 = vunpack.c.l.b16 %v276
      %v320 = vunpack.c.h.b16 %v276
      %v321 = vpack.c.b16 %v307, %v305
      %v322 = vpack.c.b16 %v308, %v306
      %v323 = vpack.c.b16 %v311, %v309
      %v324 = vpack.c.b16 %v312, %v310
      %v325 = vpack.c.b16 %v315, %v313
      %v326 = vpack.c.b16 %v316, %v314
      %v327 = vpack.c.b16 %v319, %v317
      %v328 = vpack.c.b16 %v320, %v318
      %vm337 = vcmask 523264
      %v339 = vsel %vm337, %v293, 0
      %v342 = vsel %vm337, %v294, 0
      %v345 = vsel %vm337, %v295, 0
      %v348 = vsel %vm337, %v296, 0
      %350 = vmatprep.subr.bf16.mxu0 0
      %351 = vmatpush1.bf16.msra.mxu0 0
      %352 = vmatprep.subr.bf16.mxu0 0
      %353 = vmatpush1.bf16.msra.mxu0 0
      %354 = vmatprep.subr.bf16.mxu0 0
      %355 = vmatpush1.bf16.msra.mxu0 0
      %356 = vmatprep.subr.bf16.mxu0 0
      %357 = vmatpush1.bf16.msra.mxu0 0
      %358 = vmatprep.subr.bf16.mxu0 %v328
      %359 = vmatpush1.bf16.msra.mxu0 %v327
      %360 = vmatprep.subr.bf16.mxu0 %v326
      %361 = vmatpush1.bf16.msra.mxu0 %v325
      %362 = vmatprep.subr.bf16.mxu0 %v324
      %363 = vmatpush1.bf16.msra.mxu0 %v323
      %364 = vmatprep.subr.bf16.mxu0 %v322
      %365 = vmatpush1.bf16.msra.mxu0 %v321
      %366 = vmatprep.subr.bf16.mxu0 0
      %367 = vmatpush2.bf16.msra.mxu0 0
      %368 = vmatprep.subr.bf16.mxu0 0
      %369 = vmatpush2.bf16.msra.mxu0 0
      %370 = vmatprep.subr.bf16.mxu0 0
      %371 = vmatpush2.bf16.msra.mxu0 0
      %372 = vmatprep.subr.bf16.mxu0 0
      %373 = vmatpush2.bf16.msra.mxu0 0
      %374 = vmatprep.subr.bf16.mxu0 0
      %375 = vmatpush2.bf16.msra.mxu0 0
      %376 = vmatprep.subr.bf16.mxu0 0
      %377 = vmatpush2.bf16.msra.mxu0 0
      %378 = vmatprep.subr.bf16.mxu0 0
      %379 = vmatpush2.bf16.msra.mxu0 0
      %380 = vmatprep.subr.bf16.mxu0 0
      %381 = vmatpush2.bf16.msra.mxu0 0
      %382 = vmatprep.mubr.bf16.mxu0 0
      %383 = vmatmul.mubr.bf16.gmra.mxu0 %v339
      %v384 = vpop.f32.mrf.mxu0
      %v385 = vadd.f32 0.0, %v384
      %v386 = vpop.f32.mrf.mxu0
      %v387 = vadd.f32 0.0, %v386
      %v388 = vpop.f32.mrf.mxu0
      %v389 = vadd.f32 0.0, %v388
      %v390 = vpop.f32.mrf.mxu0
      %v391 = vadd.f32 0.0, %v390
      %392 = vmatprep.mubr.bf16.mxu0 0
      %393 = vmatmul.mubr.bf16.gmra.mxu0 %v342
      %v394 = vpop.f32.mrf.mxu0
      %v395 = vadd.f32 0.0, %v394
      %v396 = vpop.f32.mrf.mxu0
      %v397 = vadd.f32 0.0, %v396
      %v398 = vpop.f32.mrf.mxu0
      %v399 = vadd.f32 0.0, %v398
      %v400 = vpop.f32.mrf.mxu0
      %v401 = vadd.f32 0.0, %v400
      %402 = vmatprep.mubr.bf16.mxu0 0
      %403 = vmatmul.mubr.bf16.gmra.mxu0 %v345
      %v404 = vpop.f32.mrf.mxu0
      %v405 = vadd.f32 0.0, %v404
      %v406 = vpop.f32.mrf.mxu0
      %v407 = vadd.f32 0.0, %v406
      %v408 = vpop.f32.mrf.mxu0
      %v409 = vadd.f32 0.0, %v408
      %v410 = vpop.f32.mrf.mxu0
      %v411 = vadd.f32 0.0, %v410
      %412 = vmatprep.mubr.bf16.mxu0 0
      %413 = vmatmul.mubr.bf16.gmra.mxu0 %v348
      %v414 = vpop.f32.mrf.mxu0
      %v415 = vadd.f32 0.0, %v414
      %v416 = vpop.f32.mrf.mxu0
      %v417 = vadd.f32 0.0, %v416
      %v418 = vpop.f32.mrf.mxu0
      %v419 = vadd.f32 0.0, %v418
      %v420 = vpop.f32.mrf.mxu0
      %v421 = vadd.f32 0.0, %v420
      %422 = vdwg.mxu0
      %v423 = vadd.f32 %v245, %v385
      %v424 = vadd.f32 %v246, %v387
      %v425 = vadd.f32 %v247, %v389
      %v426 = vadd.f32 %v248, %v391
      %v427 = vadd.f32 %v249, %v395
      %v428 = vadd.f32 %v250, %v397
      %v429 = vadd.f32 %v251, %v399
      %v430 = vadd.f32 %v252, %v401
      %v431 = vadd.f32 %v253, %v405
      %v432 = vadd.f32 %v254, %v407
      %v433 = vadd.f32 %v255, %v409
      %v434 = vadd.f32 %v256, %v411
      %v435 = vadd.f32 %v257, %v415
      %v436 = vadd.f32 %v258, %v417
      %v437 = vadd.f32 %v259, %v419
      %v438 = vadd.f32 %v260, %v421
      %439 = vst [vmem:[#allocation2] sm:$0xff] %v423
      %440 = vst [vmem:[#allocation2 + $0x8] sm:$0xff] %v424
      %441 = vst [vmem:[#allocation2 + $0x10] sm:$0xff] %v425
      %442 = vst [vmem:[#allocation2 + $0x18] sm:$0xff] %v426
      %443 = vst [vmem:[#allocation2 + $0x20] sm:$0xff] %v427
      %444 = vst [vmem:[#allocation2 + $0x28] sm:$0xff] %v428
      %445 = vst [vmem:[#allocation2 + $0x30] sm:$0xff] %v429
      %446 = vst [vmem:[#allocation2 + $0x38] sm:$0xff] %v430
      %447 = vst [vmem:[#allocation2 + $0x40] sm:$0xff] %v431
      %448 = vst [vmem:[#allocation2 + $0x48] sm:$0xff] %v432
      %449 = vst [vmem:[#allocation2 + $0x50] sm:$0xff] %v433
      %450 = vst [vmem:[#allocation2 + $0x58] sm:$0xff] %v434
      %451 = vst [vmem:[#allocation2 + $0x60] sm:$0xff] %v435
      %452 = vst [vmem:[#allocation2 + $0x68] sm:$0xff] %v436
      %453 = vst [vmem:[#allocation2 + $0x70] sm:$0xff] %v437
      %454 = vst [vmem:[#allocation2 + $0x78] sm:$0xff] %v438
      // Predicated region
      $region37: #{up_forward.5} parent=31 // pred_check
        %p455 = pneg %p225
      $region38: #{up_forward.5} parent=31 // pred_check_branch
        %457 = sbr.rel (%p455) target = $region40
      $region39: #{up_forward.5} parent=31 // pred_region
        %v458 = vld [vmem:[#allocation2] sm:$0xff]
        %v459 = vld [vmem:[#allocation2 + $0x8] sm:$0xff]
        %v460 = vld [vmem:[#allocation2 + $0x10] sm:$0xff]
        %v461 = vld [vmem:[#allocation2 + $0x18] sm:$0xff]
        %v462 = vld [vmem:[#allocation2 + $0x20] sm:$0xff]
        %v463 = vld [vmem:[#allocation2 + $0x28] sm:$0xff]
        %v464 = vld [vmem:[#allocation2 + $0x30] sm:$0xff]
        %v465 = vld [vmem:[#allocation2 + $0x38] sm:$0xff]
        %v466 = vld [vmem:[#allocation2 + $0x40] sm:$0xff]
        %v467 = vld [vmem:[#allocation2 + $0x48] sm:$0xff]
        %v468 = vld [vmem:[#allocation2 + $0x50] sm:$0xff]
        %v469 = vld [vmem:[#allocation2 + $0x58] sm:$0xff]
        %v470 = vld [vmem:[#allocation2 + $0x60] sm:$0xff]
        %v471 = vld [vmem:[#allocation2 + $0x68] sm:$0xff]
        %v472 = vld [vmem:[#allocation2 + $0x70] sm:$0xff]
        %v473 = vld [vmem:[#allocation2 + $0x78] sm:$0xff]
        %v474 = vld [vmem:[%s2] sm:$0x3]
        %v476 = vlaneseq
        %v477 = vshrl.u32 %v476, 7
        %v478 = vsub.s32 0, %v477
        %v479 = vrot.slane %v474, %v478
        %v480 = vlaneseq
        %v481 = vshrl.u32 %v480, 7
        %v482 = vsub.s32 1, %v481
        %v483 = vrot.slane %v474, %v482
        %v486 = vadd.f32 %v458, %v479
        %v487 = vadd.f32 %v459, %v483
        %v488 = vadd.f32 %v460, %v479
        %v489 = vadd.f32 %v461, %v483
        %v490 = vadd.f32 %v462, %v479
        %v491 = vadd.f32 %v463, %v483
        %v492 = vadd.f32 %v464, %v479
        %v493 = vadd.f32 %v465, %v483
        %v494 = vadd.f32 %v466, %v479
        %v495 = vadd.f32 %v467, %v483
        %v496 = vadd.f32 %v468, %v479
        %v497 = vadd.f32 %v469, %v483
        %v498 = vadd.f32 %v470, %v479
        %v499 = vadd.f32 %v471, %v483
        %v500 = vadd.f32 %v472, %v479
        %v501 = vadd.f32 %v473, %v483
        %v502 = vmax.f32 %v486, 0.0
        %v503 = vmax.f32 %v487, 0.0
        %v504 = vmax.f32 %v488, 0.0
        %v505 = vmax.f32 %v489, 0.0
        %v506 = vmax.f32 %v490, 0.0
        %v507 = vmax.f32 %v491, 0.0
        %v508 = vmax.f32 %v492, 0.0
        %v509 = vmax.f32 %v493, 0.0
        %v510 = vmax.f32 %v494, 0.0
        %v511 = vmax.f32 %v495, 0.0
        %v512 = vmax.f32 %v496, 0.0
        %v513 = vmax.f32 %v497, 0.0
        %v514 = vmax.f32 %v498, 0.0
        %v515 = vmax.f32 %v499, 0.0
        %v516 = vmax.f32 %v500, 0.0
        %v517 = vmax.f32 %v501, 0.0
        %v518 = vpack.c.bf16 %v504, %v502
        %v519 = vpack.c.bf16 %v505, %v503
        %v520 = vpack.c.bf16 %v508, %v506
        %v521 = vpack.c.bf16 %v509, %v507
        %v522 = vpack.c.bf16 %v512, %v510
        %v523 = vpack.c.bf16 %v513, %v511
        %v524 = vpack.c.bf16 %v516, %v514
        %v525 = vpack.c.bf16 %v517, %v515
        %v534 = vunpack.c.l.b16 %v518
        %v535 = vunpack.c.l.b16 %v519
        %v536 = vunpack.c.h.b16 %v518
        %v537 = vunpack.c.h.b16 %v519
        %v538 = vunpack.c.l.b16 %v520
        %v539 = vunpack.c.l.b16 %v521
        %v540 = vunpack.c.h.b16 %v520
        %v541 = vunpack.c.h.b16 %v521
        %v542 = vunpack.c.l.b16 %v522
        %v543 = vunpack.c.l.b16 %v523
        %v544 = vunpack.c.h.b16 %v522
        %v545 = vunpack.c.h.b16 %v523
        %v546 = vunpack.c.l.b16 %v524
        %v547 = vunpack.c.l.b16 %v525
        %v548 = vunpack.c.h.b16 %v524
        %v549 = vunpack.c.h.b16 %v525
        %v550 = vpack.c.b16 %v535, %v534
        %v551 = vpack.c.b16 %v537, %v536
        %v552 = vpack.c.b16 %v539, %v538
        %v553 = vpack.c.b16 %v541, %v540
        %v554 = vpack.c.b16 %v543, %v542
        %v555 = vpack.c.b16 %v545, %v544
        %v556 = vpack.c.b16 %v547, %v546
        %v557 = vpack.c.b16 %v549, %v548
        %566 = vst [vmem:[%s222] sm:$0xff] %v550
        %567 = vst [vmem:[%s222 + $0x8] sm:$0xff] %v551
        %568 = vst [vmem:[%s222 + $0x10] sm:$0xff] %v552
        %569 = vst [vmem:[%s222 + $0x18] sm:$0xff] %v553
        %570 = vst [vmem:[%s222 + $0x20] sm:$0xff] %v554
        %571 = vst [vmem:[%s222 + $0x28] sm:$0xff] %v555
        %572 = vst [vmem:[%s222 + $0x30] sm:$0xff] %v556
        %573 = vst [vmem:[%s222 + $0x38] sm:$0xff] %v557
      $region40: #{up_forward.5} parent=31 // pred_fallthru
        _
      %s574 = smul.u32 8, %s18
      %p575 = scmp.lt.s32.totalorder %s574, 15
      %s576 = scalar_select %p575, %s574, 15
      %s577 = smul.addr %s576, 2
      %s578 = smul.addr %s577, 4
      %s579 = scalar_lea.vmem %s3, %s578
      // Predicated region
      $region41: #{up_forward.5} parent=31 // pred_check
        %p580 = pneg %p119
      $region42: #{up_forward.5} parent=31 // pred_check_branch
        %582 = sbr.rel (%p580) target = $region44
      $region43: #{up_forward.5} parent=31 // pred_region
        %s583 = smul.u32 8, %s18
      $region44: #{up_forward.5} parent=31 // pred_fallthru
        _
    $region32: #{up_forward.5} parent=5 // pred_fallthru
      _
    %p584 = scmp.le.s32.totalorder 2, %s9
    // Predicated region
    $region45: #{up_forward.5} parent=5 // pred_check
      %p585 = pneg %p584
    $region46: #{up_forward.5} parent=5 // pred_check_branch
      %587 = sbr.rel (%p585) target = $region48
    $region47: #{up_forward.5} parent=5 // pred_region
      %s588 = ssub.s32 %s9, 2
      // Predicated region
      $region49: #{up_forward.5} parent=47 // pred_check
        %p589 = pneg %p125
      $region50: #{up_forward.5} parent=47 // pred_check_branch
        %591 = sbr.rel (%p589) target = $region52
      $region51: #{up_forward.5} parent=47 // pred_region
        %s592 = smul.u32 8, %s20
        %p593 = scmp.lt.s32.totalorder %s592, 15
        %s594 = scalar_select %p593, %s592, 15
        %s595 = smul.addr %s594, 2
        %s596 = smul.addr %s595, 4
        %s597 = scalar_lea.vmem %s3, %s596
      $region52: #{up_forward.5} parent=47 // pred_fallthru
        _
    $region48: #{up_forward.5} parent=5 // pred_fallthru
      _
  $region6: #{up_forward.5} parent=0 // loop_footer
    %s13 = sadd.s32 1, %s9
  $region7: #{up_forward.5} parent=0 // loop_footer_branch
    %8 = sbr.rel target = $region3
  $region8: #{up_forward.5} parent=0 // loop_exit
    _

// kernel: up_forward.7
$region0: #{up_forward.7}
  #allocation0 [shape = 'u32[]', space=smem, size = 0x4, offset = 0x4, fixed_abs, tag = 'smem constant byte address 0x4 - core index']
  #allocation1 [shape = 'u32[144,128]{1,0:T(1,128)}', space=vmem, size = 0x12000, scoped, tag = 'internal scratch']
  %s0 = inlined_call_operand.vmem [shape: f32[2,16,8,128], index: 0, kind: input, shape index: {}, may-alias: {0,1,2}]
  %s1 = inlined_call_operand.vmem [shape: f32[2,16,8,128], index: 1, kind: input, shape index: {}, may-alias: {0,1,2}]
  %s2 = inlined_call_operand.vmem [shape: f32[2,16,8,128], index: 2, kind: input, shape index: {}, may-alias: {0,1,2}]
  %s3 = inlined_call_operand.vmem [shape: bf16[2,16,8,128], index: 3, kind: input, shape index: {}, may-alias: {3,4,5}]
  %s4 = inlined_call_operand.vmem [shape: bf16[2,16,8,128], index: 4, kind: input, shape index: {}, may-alias: {3,4,5}]
  %s5 = inlined_call_operand.vmem [shape: bf16[2,16,8,128], index: 5, kind: input, shape index: {}, may-alias: {3,4,5}]
  %s6 = inlined_call_operand.vmem [shape: f32[9,128], index: 6, kind: input, shape index: {}]
  %s7 = inlined_call_operand.vmem [shape: bf16[128,128], index: 7, kind: input, shape index: {}]
  %s8 = inlined_call_operand.vmem [shape: bf16[2,16,8,128], index: 8, kind: output, shape index: {0}]
  %s9 = inlined_call_operand.vmem [shape: f32[2,1,2,128], index: 9, kind: output, shape index: {1}]
  %10 = xla_tuple %s8, %s9
  %s11 = sld [smem:[#allocation0]]
  $region73: #{up_forward.7} parent=0
    _
  %s13 = ssub.s32 1, %s11
  %s14 = scalar_select 0, %s13, %s11
  loop: start=0, step=1, limit=4
  $region2: #{up_forward.7} parent=0 // loop_pre_header
    _
  $region3: #{up_forward.7} parent=0 // loop_header
    %s16 = sphi 0, %s20
    %p17 = scmp.ge.s32.totalorder %s16, 4
    %s23 = sphi 0, %s35
    %s24 = sphi 0, %s31
    %s25 = sphi 0, %s23
    %s26 = sphi 0, %s24
    %s27 = sphi 0, %s25
    %s28 = sphi 0, %s26
    %s48 = sphi 0, %s50
    %s51 = sphi 0, %s48
    %s52 = sphi 0, %s51
    %s68 = sphi 0, %s52
    %s76 = sphi 0, %s78
    %s79 = sphi 0, %s76
    %s80 = sphi 0, %s79
    %s96 = sphi 0, %s80
    %s112 = sphi 0, %s114
    %s115 = sphi 0, %s112
    %s116 = sphi 0, %s115
    %s132 = sphi 0, %s116
    %s148 = sphi 0, %s150
    %s151 = sphi 0, %s148
    %s152 = sphi 0, %s151
    %s168 = sphi 0, %s152
    %s176 = sphi 0, %s178
    %s179 = sphi 0, %s176
    %s180 = sphi 0, %s179
    %s196 = sphi 0, %s180
    %s212 = sphi 0, %s214
    %s215 = sphi 0, %s212
    %s216 = sphi 0, %s215
    %s232 = sphi 0, %s216
    %s236 = sphi 0, %s236
    %s238 = sphi 0, %s236
    %s239 = sphi 0, %s238
    %s253 = sphi 0, %s239
    %s257 = sphi 0, %s257
    %s259 = sphi 0, %s257
    %s260 = sphi 0, %s259
    %s274 = sphi 0, %s260
    %s282 = sphi 0, %s284
    %s285 = sphi 0, %s282
    %s286 = sphi 0, %s285
    %s302 = sphi 0, %s286
    %s310 = sphi 0, %s312
    %s313 = sphi 0, %s310
    %s314 = sphi 0, %s313
    %s330 = sphi 0, %s314
  $region4: #{up_forward.7} parent=0 // loop_header_branch
    %19 = sbr.rel (%p17) target = $region8
  $region5: #{up_forward.7} parent=0 // loop_body
    %s21 = ssub.s32 %s16, 1
    %s22 = ssub.s32 %s16, 2
    %s29 = sadd.s32 1, %s24
    %p30 = scmp.ge.s32.totalorder %s29, 1
    %s31 = scalar_select %p30, 0, %s29
    %s32 = sadd.s32 1, %s23
    %s33 = scalar_select %p30, %s32, %s23
    %p34 = scmp.ge.s32.totalorder %s33, 2
    %s35 = scalar_select %p34, 0, %s33
    %s36 = smul.u32 %s24, 16
    %s37 = ssub.s32 %s36, 1
    %p38 = scmp.gt.s32.totalorder %s37, 0
    %s39 = scalar_select %p38, %s37, 0
    %s40 = smul.u32 %s31, 16
    %s41 = ssub.s32 %s40, 1
    %p42 = scmp.gt.s32.totalorder %s41, 0
    %s43 = scalar_select %p42, %s41, 0
    %s44 = ssub.s32 %s23, %s35
    %s45 = ssub.s32 %s39, %s43
    %s46 = sor.u32 %s44, %s45
    %p47 = scmp.eq.s32.totalorder %s46, 0
    %s49 = sadd.s32 %s48, 1
    %s50 = scalar_select %p47, %s48, %s49
    %p53 = pneg %p47
    %p54 = scmp.eq.s32.totalorder %s16, 1
    %p55 = por %p53, %p54
    %p56 = scmp.ne.s32.totalorder %s48, %s51
    %p57 = scmp.eq.s32.totalorder %s16, 0
    %p58 = por %p56, %p57
    %p59 = scmp.ne.s32.totalorder %s48, %s51
    %p60 = scmp.eq.s32.totalorder %s21, 1
    %p61 = por %p59, %p60
    %p62 = scmp.ne.s32.totalorder %s51, %s52
    %p63 = scmp.eq.s32.totalorder %s21, 0
    %p64 = por %p62, %p63
    %p65 = scmp.ne.s32.totalorder %s51, %s52
    %p66 = scmp.eq.s32.totalorder %s22, 1
    %p67 = por %p65, %p66
    %p69 = scmp.ne.s32.totalorder %s52, %s68
    %p70 = scmp.eq.s32.totalorder %s22, 0
    %p71 = por %p69, %p70
    %s72 = ssub.s32 %s23, %s35
    %s73 = ssub.s32 %s24, %s31
    %s74 = sor.u32 %s72, %s73
    %p75 = scmp.eq.s32.totalorder %s74, 0
    %s77 = sadd.s32 %s76, 1
    %s78 = scalar_select %p75, %s76, %s77
    %p81 = pneg %p75
    %p82 = scmp.eq.s32.totalorder %s16, 1
    %p83 = por %p81, %p82
    %p84 = scmp.ne.s32.totalorder %s76, %s79
    %p85 = scmp.eq.s32.totalorder %s16, 0
    %p86 = por %p84, %p85
    %p87 = scmp.ne.s32.totalorder %s76, %s79
    %p88 = scmp.eq.s32.totalorder %s21, 1
    %p89 = por %p87, %p88
    %p90 = scmp.ne.s32.totalorder %s79, %s80
    %p91 = scmp.eq.s32.totalorder %s21, 0
    %p92 = por %p90, %p91
    %p93 = scmp.ne.s32.totalorder %s79, %s80
    %p94 = scmp.eq.s32.totalorder %s22, 1
    %p95 = por %p93, %p94
    %p97 = scmp.ne.s32.totalorder %s80, %s96
    %p98 = scmp.eq.s32.totalorder %s22, 0
    %p99 = por %p97, %p98
    %s100 = smul.u32 %s24, 16
    %s101 = sadd.s32 %s100, 16
    %p102 = scmp.lt.s32.totalorder %s101, 15
    %s103 = scalar_select %p102, %s101, 15
    %s104 = smul.u32 %s31, 16
    %s105 = sadd.s32 %s104, 16
    %p106 = scmp.lt.s32.totalorder %s105, 15
    %s107 = scalar_select %p106, %s105, 15
    %s108 = ssub.s32 %s23, %s35
    %s109 = ssub.s32 %s103, %s107
    %s110 = sor.u32 %s108, %s109
    %p111 = scmp.eq.s32.totalorder %s110, 0
    %s113 = sadd.s32 %s112, 1
    %s114 = scalar_select %p111, %s112, %s113
    %p117 = pneg %p111
    %p118 = scmp.eq.s32.totalorder %s16, 1
    %p119 = por %p117, %p118
    %p120 = scmp.ne.s32.totalorder %s112, %s115
    %p121 = scmp.eq.s32.totalorder %s16, 0
    %p122 = por %p120, %p121
    %p123 = scmp.ne.s32.totalorder %s112, %s115
    %p124 = scmp.eq.s32.totalorder %s21, 1
    %p125 = por %p123, %p124
    %p126 = scmp.ne.s32.totalorder %s115, %s116
    %p127 = scmp.eq.s32.totalorder %s21, 0
    %p128 = por %p126, %p127
    %p129 = scmp.ne.s32.totalorder %s115, %s116
    %p130 = scmp.eq.s32.totalorder %s22, 1
    %p131 = por %p129, %p130
    %p133 = scmp.ne.s32.totalorder %s116, %s132
    %p134 = scmp.eq.s32.totalorder %s22, 0
    %p135 = por %p133, %p134
    %s136 = smul.u32 %s24, 16
    %s137 = ssub.s32 %s136, 1
    %p138 = scmp.gt.s32.totalorder %s137, 0
    %s139 = scalar_select %p138, %s137, 0
    %s140 = smul.u32 %s31, 16
    %s141 = ssub.s32 %s140, 1
    %p142 = scmp.gt.s32.totalorder %s141, 0
    %s143 = scalar_select %p142, %s141, 0
    %s144 = ssub.s32 %s23, %s35
    %s145 = ssub.s32 %s139, %s143
    %s146 = sor.u32 %s144, %s145
    %p147 = scmp.eq.s32.totalorder %s146, 0
    %s149 = sadd.s32 %s148, 1
    %s150 = scalar_select %p147, %s148, %s149
    %p153 = pneg %p147
    %p154 = scmp.eq.s32.totalorder %s16, 1
    %p155 = por %p153, %p154
    %p156 = scmp.ne.s32.totalorder %s148, %s151
    %p157 = scmp.eq.s32.totalorder %s16, 0
    %p158 = por %p156, %p157
    %p159 = scmp.ne.s32.totalorder %s148, %s151
    %p160 = scmp.eq.s32.totalorder %s21, 1
    %p161 = por %p159, %p160
    %p162 = scmp.ne.s32.totalorder %s151, %s152
    %p163 = scmp.eq.s32.totalorder %s21, 0
    %p164 = por %p162, %p163
    %p165 = scmp.ne.s32.totalorder %s151, %s152
    %p166 = scmp.eq.s32.totalorder %s22, 1
    %p167 = por %p165, %p166
    %p169 = scmp.ne.s32.totalorder %s152, %s168
    %p170 = scmp.eq.s32.totalorder %s22, 0
    %p171 = por %p169, %p170
    %s172 = ssub.s32 %s23, %s35
    %s173 = ssub.s32 %s24, %s31
    %s174 = sor.u32 %s172, %s173
    %p175 = scmp.eq.s32.totalorder %s174, 0
    %s177 = sadd.s32 %s176, 1
    %s178 = scalar_select %p175, %s176, %s177
    %p181 = pneg %p175
    %p182 = scmp.eq.s32.totalorder %s16, 1
    %p183 = por %p181, %p182
    %p184 = scmp.ne.s32.totalorder %s176, %s179
    %p185 = scmp.eq.s32.totalorder %s16, 0
    %p186 = por %p184, %p185
    %p187 = scmp.ne.s32.totalorder %s176, %s179
    %p188 = scmp.eq.s32.totalorder %s21, 1
    %p189 = por %p187, %p188
    %p190 = scmp.ne.s32.totalorder %s179, %s180
    %p191 = scmp.eq.s32.totalorder %s21, 0
    %p192 = por %p190, %p191
    %p193 = scmp.ne.s32.totalorder %s179, %s180
    %p194 = scmp.eq.s32.totalorder %s22, 1
    %p195 = por %p193, %p194
    %p197 = scmp.ne.s32.totalorder %s180, %s196
    %p198 = scmp.eq.s32.totalorder %s22, 0
    %p199 = por %p197, %p198
    %s200 = smul.u32 %s24, 16
    %s201 = sadd.s32 %s200, 16
    %p202 = scmp.lt.s32.totalorder %s201, 15
    %s203 = scalar_select %p202, %s201, 15
    %s204 = smul.u32 %s31, 16
    %s205 = sadd.s32 %s204, 16
    %p206 = scmp.lt.s32.totalorder %s205, 15
    %s207 = scalar_select %p206, %s205, 15
    %s208 = ssub.s32 %s23, %s35
    %s209 = ssub.s32 %s203, %s207
    %s210 = sor.u32 %s208, %s209
    %p211 = scmp.eq.s32.totalorder %s210, 0
    %s213 = sadd.s32 %s212, 1
    %s214 = scalar_select %p211, %s212, %s213
    %p217 = pneg %p211
    %p218 = scmp.eq.s32.totalorder %s16, 1
    %p219 = por %p217, %p218
    %p220 = scmp.ne.s32.totalorder %s212, %s215
    %p221 = scmp.eq.s32.totalorder %s16, 0
    %p222 = por %p220, %p221
    %p223 = scmp.ne.s32.totalorder %s212, %s215
    %p224 = scmp.eq.s32.totalorder %s21, 1
    %p225 = por %p223, %p224
    %p226 = scmp.ne.s32.totalorder %s215, %s216
    %p227 = scmp.eq.s32.totalorder %s21, 0
    %p228 = por %p226, %p227
    %p229 = scmp.ne.s32.totalorder %s215, %s216
    %p230 = scmp.eq.s32.totalorder %s22, 1
    %p231 = por %p229, %p230
    %p233 = scmp.ne.s32.totalorder %s216, %s232
    %p234 = scmp.eq.s32.totalorder %s22, 0
    %p235 = por %p233, %p234
    %s237 = sadd.s32 %s236, 1
    %p240 = scmp.eq.s32.totalorder %s16, 1
    %p241 = scmp.ne.s32.totalorder %s236, %s238
    %p242 = scmp.eq.s32.totalorder %s16, 0
    %p243 = por %p241, %p242
    %p244 = scmp.ne.s32.totalorder %s236, %s238
    %p245 = scmp.eq.s32.totalorder %s21, 1
    %p246 = por %p244, %p245
    %p247 = scmp.ne.s32.totalorder %s238, %s239
    %p248 = scmp.eq.s32.totalorder %s21, 0
    %p249 = por %p247, %p248
    %p250 = scmp.ne.s32.totalorder %s238, %s239
    %p251 = scmp.eq.s32.totalorder %s22, 1
    %p252 = por %p250, %p251
    %p254 = scmp.ne.s32.totalorder %s239, %s253
    %p255 = scmp.eq.s32.totalorder %s22, 0
    %p256 = por %p254, %p255
    %s258 = sadd.s32 %s257, 1
    %p261 = scmp.eq.s32.totalorder %s16, 1
    %p262 = scmp.ne.s32.totalorder %s257, %s259
    %p263 = scmp.eq.s32.totalorder %s16, 0
    %p264 = por %p262, %p263
    %p265 = scmp.ne.s32.totalorder %s257, %s259
    %p266 = scmp.eq.s32.totalorder %s21, 1
    %p267 = por %p265, %p266
    %p268 = scmp.ne.s32.totalorder %s259, %s260
    %p269 = scmp.eq.s32.totalorder %s21, 0
    %p270 = por %p268, %p269
    %p271 = scmp.ne.s32.totalorder %s259, %s260
    %p272 = scmp.eq.s32.totalorder %s22, 1
    %p273 = por %p271, %p272
    %p275 = scmp.ne.s32.totalorder %s260, %s274
    %p276 = scmp.eq.s32.totalorder %s22, 0
    %p277 = por %p275, %p276
    %s278 = ssub.s32 %s23, %s35
    %s279 = ssub.s32 %s24, %s31
    %s280 = sor.u32 %s278, %s279
    %p281 = scmp.eq.s32.totalorder %s280, 0
    %s283 = sadd.s32 %s282, 1
    %s284 = scalar_select %p281, %s282, %s283
    %p287 = pneg %p281
    %p288 = scmp.eq.s32.totalorder %s16, 1
    %p289 = por %p287, %p288
    %p290 = scmp.ne.s32.totalorder %s282, %s285
    %p291 = scmp.eq.s32.totalorder %s16, 0
    %p292 = por %p290, %p291
    %p293 = scmp.ne.s32.totalorder %s282, %s285
    %p294 = scmp.eq.s32.totalorder %s21, 1
    %p295 = por %p293, %p294
    %p296 = scmp.ne.s32.totalorder %s285, %s286
    %p297 = scmp.eq.s32.totalorder %s21, 0
    %p298 = por %p296, %p297
    %p299 = scmp.ne.s32.totalorder %s285, %s286
    %p300 = scmp.eq.s32.totalorder %s22, 1
    %p301 = por %p299, %p300
    %p303 = scmp.ne.s32.totalorder %s286, %s302
    %p304 = scmp.eq.s32.totalorder %s22, 0
    %p305 = por %p303, %p304
    %s306 = ssub.s32 %s23, %s35
    %s307 = ssub.s32 %s24, %s31
    %s308 = sor.u32 %s306, %s307
    %p309 = scmp.eq.s32.totalorder %s308, 0
    %s311 = sadd.s32 %s310, 1
    %s312 = scalar_select %p309, %s310, %s311
    %p315 = pneg %p309
    %p316 = scmp.eq.s32.totalorder %s16, 1
    %p317 = por %p315, %p316
    %p318 = scmp.ne.s32.totalorder %s310, %s313
    %p319 = scmp.eq.s32.totalorder %s16, 0
    %p320 = por %p318, %p319
    %p321 = scmp.ne.s32.totalorder %s310, %s313
    %p322 = scmp.eq.s32.totalorder %s21, 1
    %p323 = por %p321, %p322
    %p324 = scmp.ne.s32.totalorder %s313, %s314
    %p325 = scmp.eq.s32.totalorder %s21, 0
    %p326 = por %p324, %p325
    %p327 = scmp.ne.s32.totalorder %s313, %s314
    %p328 = scmp.eq.s32.totalorder %s22, 1
    %p329 = por %p327, %p328
    %p331 = scmp.ne.s32.totalorder %s314, %s330
    %p332 = scmp.eq.s32.totalorder %s22, 0
    %p333 = por %p331, %p332
    %p334 = scmp.le.s32.totalorder 1, %s16
    %p335 = scmp.lt.s32.totalorder %s16, 3
    %p336 = pnand %p334, %p335
    %p337 = pneg %p336
    // Predicated region
    $region9: #{up_forward.7} parent=5 // pred_check
      _
    $region10: #{up_forward.7} parent=5 // pred_check_branch
      %339 = sbr.rel (%p336) target = $region12
    $region11: #{up_forward.7} parent=5 // pred_region
      %s340 = ssub.s32 %s16, 1
      // Predicated region
      $region13: #{up_forward.7} parent=11 // pred_check
        %p341 = pneg %p249
      $region14: #{up_forward.7} parent=11 // pred_check_branch
        %343 = sbr.rel (%p341) target = $region16
      $region15: #{up_forward.7} parent=11 // pred_region
        _
      $region16: #{up_forward.7} parent=11 // pred_fallthru
        _
      // Predicated region
      $region17: #{up_forward.7} parent=11 // pred_check
        %p344 = pneg %p270
      $region18: #{up_forward.7} parent=11 // pred_check_branch
        %346 = sbr.rel (%p344) target = $region20
      $region19: #{up_forward.7} parent=11 // pred_region
        _
      $region20: #{up_forward.7} parent=11 // pred_fallthru
        _
    $region12: #{up_forward.7} parent=5 // pred_fallthru
      _
    %p347 = scmp.lt.s32.totalorder %s16, 2
    // Predicated region
    $region21: #{up_forward.7} parent=5 // pred_check
      %p348 = pneg %p347
    $region22: #{up_forward.7} parent=5 // pred_check_branch
      %350 = sbr.rel (%p348) target = $region24
    $region23: #{up_forward.7} parent=5 // pred_region
      // Predicated region
      $region25: #{up_forward.7} parent=23 // pred_check
        %p351 = pneg %p58
      $region26: #{up_forward.7} parent=23 // pred_check_branch
        %353 = sbr.rel (%p351) target = $region28
      $region27: #{up_forward.7} parent=23 // pred_region
        %s354 = smul.u32 %s24, 16
        %s355 = ssub.s32 %s354, 1
        %p356 = scmp.gt.s32.totalorder %s355, 0
        %s357 = scalar_select %p356, %s355, 0
        %p358 = scmp.lt.s32.totalorder %s23, 1
        %s359 = scalar_select %p358, %s23, 1
        %p360 = scmp.lt.s32.totalorder %s357, 15
        %s361 = scalar_select %p360, %s357, 15
        %s362 = smul.addr %s359, 16
        %s363 = sadd.s32 %s361, %s362
        %s364 = smul.addr %s363, 8
        %s365 = scalar_lea.vmem %s0, %s364
        %s366 = smul.u32 %s24, 16
        %s367 = ssub.s32 %s366, 1
        %p368 = scmp.gt.s32.totalorder %s367, 0
        %s369 = scalar_select %p368, %s367, 0
      $region28: #{up_forward.7} parent=23 // pred_fallthru
        _
      // Predicated region
      $region29: #{up_forward.7} parent=23 // pred_check
        %p370 = pneg %p86
      $region30: #{up_forward.7} parent=23 // pred_check_branch
        %372 = sbr.rel (%p370) target = $region32
      $region31: #{up_forward.7} parent=23 // pred_region
        %s373 = smul.u32 16, %s24
        %p374 = scmp.lt.s32.totalorder %s23, 1
        %s375 = scalar_select %p374, %s23, 1
        %p376 = scmp.lt.s32.totalorder %s373, 15
        %s377 = scalar_select %p376, %s373, 15
        %s378 = smul.addr %s375, 16
        %s379 = sadd.s32 %s377, %s378
        %s380 = smul.addr %s379, 8
        %s381 = scalar_lea.vmem %s1, %s380
        %s382 = smul.u32 16, %s24
      $region32: #{up_forward.7} parent=23 // pred_fallthru
        _
      // Predicated region
      $region33: #{up_forward.7} parent=23 // pred_check
        %p383 = pneg %p122
      $region34: #{up_forward.7} parent=23 // pred_check_branch
        %385 = sbr.rel (%p383) target = $region36
      $region35: #{up_forward.7} parent=23 // pred_region
        %s386 = smul.u32 %s24, 16
        %s387 = sadd.s32 %s386, 16
        %p388 = scmp.lt.s32.totalorder %s387, 15
        %s389 = scalar_select %p388, %s387, 15
        %p390 = scmp.lt.s32.totalorder %s23, 1
        %s391 = scalar_select %p390, %s23, 1
        %p392 = scmp.lt.s32.totalorder %s389, 15
        %s393 = scalar_select %p392, %s389, 15
        %s394 = smul.addr %s391, 16
        %s395 = sadd.s32 %s393, %s394
        %s396 = smul.addr %s395, 8
        %s397 = scalar_lea.vmem %s2, %s396
        %s398 = smul.u32 %s24, 16
        %s399 = sadd.s32 %s398, 16
        %p400 = scmp.lt.s32.totalorder %s399, 15
        %s401 = scalar_select %p400, %s399, 15
      $region36: #{up_forward.7} parent=23 // pred_fallthru
        _
      // Predicated region
      $region37: #{up_forward.7} parent=23 // pred_check
        %p402 = pneg %p158
      $region38: #{up_forward.7} parent=23 // pred_check_branch
        %404 = sbr.rel (%p402) target = $region40
      $region39: #{up_forward.7} parent=23 // pred_region
        %s405 = smul.u32 %s24, 16
        %s406 = ssub.s32 %s405, 1
        %p407 = scmp.gt.s32.totalorder %s406, 0
        %s408 = scalar_select %p407, %s406, 0
        %p409 = scmp.lt.s32.totalorder %s23, 1
        %s410 = scalar_select %p409, %s23, 1
        %p411 = scmp.lt.s32.totalorder %s408, 15
        %s412 = scalar_select %p411, %s408, 15
        %s413 = smul.addr %s410, 16
        %s414 = sadd.s32 %s412, %s413
        %s415 = smul.addr %s414, 4
        %s416 = scalar_lea.vmem %s3, %s415
        %s417 = smul.u32 %s24, 16
        %s418 = ssub.s32 %s417, 1
        %p419 = scmp.gt.s32.totalorder %s418, 0
        %s420 = scalar_select %p419, %s418, 0
      $region40: #{up_forward.7} parent=23 // pred_fallthru
        _
      // Predicated region
      $region41: #{up_forward.7} parent=23 // pred_check
        %p421 = pneg %p186
      $region42: #{up_forward.7} parent=23 // pred_check_branch
        %423 = sbr.rel (%p421) target = $region44
      $region43: #{up_forward.7} parent=23 // pred_region
        %s424 = smul.u32 16, %s24
        %p425 = scmp.lt.s32.totalorder %s23, 1
        %s426 = scalar_select %p425, %s23, 1
        %p427 = scmp.lt.s32.totalorder %s424, 15
        %s428 = scalar_select %p427, %s424, 15
        %s429 = smul.addr %s426, 16
        %s430 = sadd.s32 %s428, %s429
        %s431 = smul.addr %s430, 4
        %s432 = scalar_lea.vmem %s4, %s431
        %s433 = smul.u32 16, %s24
      $region44: #{up_forward.7} parent=23 // pred_fallthru
        _
      // Predicated region
      $region45: #{up_forward.7} parent=23 // pred_check
        %p434 = pneg %p222
      $region46: #{up_forward.7} parent=23 // pred_check_branch
        %436 = sbr.rel (%p434) target = $region48
      $region47: #{up_forward.7} parent=23 // pred_region
        %s437 = smul.u32 %s24, 16
        %s438 = sadd.s32 %s437, 16
        %p439 = scmp.lt.s32.totalorder %s438, 15
        %s440 = scalar_select %p439, %s438, 15
        %p441 = scmp.lt.s32.totalorder %s23, 1
        %s442 = scalar_select %p441, %s23, 1
        %p443 = scmp.lt.s32.totalorder %s440, 15
        %s444 = scalar_select %p443, %s440, 15
        %s445 = smul.addr %s442, 16
        %s446 = sadd.s32 %s444, %s445
        %s447 = smul.addr %s446, 4
        %s448 = scalar_lea.vmem %s5, %s447
        %s449 = smul.u32 %s24, 16
        %s450 = sadd.s32 %s449, 16
        %p451 = scmp.lt.s32.totalorder %s450, 15
        %s452 = scalar_select %p451, %s450, 15
      $region48: #{up_forward.7} parent=23 // pred_fallthru
        _
    $region24: #{up_forward.7} parent=5 // pred_fallthru
      _
    %p453 = scmp.le.s32.totalorder 1, %s16
    %p454 = scmp.lt.s32.totalorder %s16, 3
    %p455 = pnand %p453, %p454
    %p456 = pneg %p455
    // Predicated region
    $region49: #{up_forward.7} parent=5 // pred_check
      _
    $region50: #{up_forward.7} parent=5 // pred_check_branch
      %458 = sbr.rel (%p455) target = $region52
    $region51: #{up_forward.7} parent=5 // pred_region
      %s459 = ssub.s32 %s16, 1
      %s460 = smul.u32 %s26, 16
      %s461 = ssub.s32 %s460, 1
      %p462 = scmp.gt.s32.totalorder %s461, 0
      %s463 = scalar_select %p462, %s461, 0
      %p464 = scmp.lt.s32.totalorder %s25, 1
      %s465 = scalar_select %p464, %s25, 1
      %p466 = scmp.lt.s32.totalorder %s463, 15
      %s467 = scalar_select %p466, %s463, 15
      %s468 = smul.addr %s465, 16
      %s469 = sadd.s32 %s467, %s468
      %s470 = smul.addr %s469, 8
      %s471 = scalar_lea.vmem %s0, %s470
      %p472 = pneg %p64
      %p473 = pneg %p61
      %s474 = smul.u32 16, %s26
      %p475 = scmp.lt.s32.totalorder %s25, 1
      %s476 = scalar_select %p475, %s25, 1
      %p477 = scmp.lt.s32.totalorder %s474, 15
      %s478 = scalar_select %p477, %s474, 15
      %s479 = smul.addr %s476, 16
      %s480 = sadd.s32 %s478, %s479
      %s481 = smul.addr %s480, 8
      %s482 = scalar_lea.vmem %s1, %s481
      %p483 = pneg %p92
      %p484 = pneg %p89
      %s485 = smul.u32 %s26, 16
      %s486 = sadd.s32 %s485, 16
      %p487 = scmp.lt.s32.totalorder %s486, 15
      %s488 = scalar_select %p487, %s486, 15
      %p489 = scmp.lt.s32.totalorder %s25, 1
      %s490 = scalar_select %p489, %s25, 1
      %p491 = scmp.lt.s32.totalorder %s488, 15
      %s492 = scalar_select %p491, %s488, 15
      %s493 = smul.addr %s490, 16
      %s494 = sadd.s32 %s492, %s493
      %s495 = smul.addr %s494, 8
      %s496 = scalar_lea.vmem %s2, %s495
      %p497 = pneg %p128
      %p498 = pneg %p125
      %s499 = smul.u32 %s26, 16
      %s500 = ssub.s32 %s499, 1
      %p501 = scmp.gt.s32.totalorder %s500, 0
      %s502 = scalar_select %p501, %s500, 0
      %p503 = scmp.lt.s32.totalorder %s25, 1
      %s504 = scalar_select %p503, %s25, 1
      %p505 = scmp.lt.s32.totalorder %s502, 15
      %s506 = scalar_select %p505, %s502, 15
      %s507 = smul.addr %s504, 16
      %s508 = sadd.s32 %s506, %s507
      %s509 = smul.addr %s508, 4
      %s510 = scalar_lea.vmem %s3, %s509
      %p511 = pneg %p164
      %p512 = pneg %p161
      %s513 = smul.u32 16, %s26
      %p514 = scmp.lt.s32.totalorder %s25, 1
      %s515 = scalar_select %p514, %s25, 1
      %p516 = scmp.lt.s32.totalorder %s513, 15
      %s517 = scalar_select %p516, %s513, 15
      %s518 = smul.addr %s515, 16
      %s519 = sadd.s32 %s517, %s518
      %s520 = smul.addr %s519, 4
      %s521 = scalar_lea.vmem %s4, %s520
      %p522 = pneg %p192
      %p523 = pneg %p189
      %s524 = smul.u32 %s26, 16
      %s525 = sadd.s32 %s524, 16
      %p526 = scmp.lt.s32.totalorder %s525, 15
      %s527 = scalar_select %p526, %s525, 15
      %p528 = scmp.lt.s32.totalorder %s25, 1
      %s529 = scalar_select %p528, %s25, 1
      %p530 = scmp.lt.s32.totalorder %s527, 15
      %s531 = scalar_select %p530, %s527, 15
      %s532 = smul.addr %s529, 16
      %s533 = sadd.s32 %s531, %s532
      %s534 = smul.addr %s533, 4
      %s535 = scalar_lea.vmem %s5, %s534
      %p536 = pneg %p228
      %p537 = pneg %p225
      %p538 = pneg %p249
      %p539 = pneg %p246
      %p540 = pneg %p270
      %p541 = pneg %p267
      %p542 = pneg %p298
      %p543 = pneg %p295
      %s544 = smul.u32 16, %s26
      %p545 = scmp.lt.s32.totalorder %s25, 1
      %s546 = scalar_select %p545, %s25, 1
      %p547 = scmp.lt.s32.totalorder %s544, 15
      %s548 = scalar_select %p547, %s544, 15
      %s549 = smul.addr %s546, 16
      %s550 = sadd.s32 %s548, %s549
      %s551 = smul.addr %s550, 4
      %s552 = scalar_lea.vmem %s8, %s551
      %p553 = pneg %p326
      %p554 = pneg %p323
      %p555 = scmp.lt.s32.totalorder %s25, 1
      %s556 = scalar_select %p555, %s25, 1
      %p557 = scmp.lt.s32.totalorder %s26, 0
      %s558 = scalar_select %p557, %s26, 0
      %s559 = sadd.s32 %s558, %s556
      %s560 = smul.addr %s559, 2
      %s561 = scalar_lea.vmem %s9, %s560
      %s562 = smul.u32 %s26, 16
      %s563 = ssub.s32 %s562, 1
      %p564 = scmp.gt.s32.totalorder %s563, 0
      %s565 = scalar_select %p564, %s563, 0
      %p566 = scmp.lt.s32.totalorder %s25, 1
      %s567 = scalar_select %p566, %s25, 1
      %p568 = scmp.lt.s32.totalorder %s565, 15
      %s569 = scalar_select %p568, %s565, 15
      %s570 = smul.addr %s567, 16
      %s571 = sadd.s32 %s569, %s570
      %s572 = smul.addr %s571, 8
      %s573 = scalar_lea.vmem %s0, %s572
      %s574 = smul.u32 %s26, 16
      %s575 = ssub.s32 %s574, 1
      %p576 = scmp.gt.s32.totalorder %s575, 0
      %s577 = scalar_select %p576, %s575, 0
      %s578 = smul.u32 16, %s26
      %p579 = scmp.lt.s32.totalorder %s25, 1
      %s580 = scalar_select %p579, %s25, 1
      %p581 = scmp.lt.s32.totalorder %s578, 15
      %s582 = scalar_select %p581, %s578, 15
      %s583 = smul.addr %s580, 16
      %s584 = sadd.s32 %s582, %s583
      %s585 = smul.addr %s584, 8
      %s586 = scalar_lea.vmem %s1, %s585
      %s587 = smul.u32 16, %s26
      %s588 = smul.u32 %s26, 16
      %s589 = sadd.s32 %s588, 16
      %p590 = scmp.lt.s32.totalorder %s589, 15
      %s591 = scalar_select %p590, %s589, 15
      %p592 = scmp.lt.s32.totalorder %s25, 1
      %s593 = scalar_select %p592, %s25, 1
      %p594 = scmp.lt.s32.totalorder %s591, 15
      %s595 = scalar_select %p594, %s591, 15
      %s596 = smul.addr %s593, 16
      %s597 = sadd.s32 %s595, %s596
      %s598 = smul.addr %s597, 8
      %s599 = scalar_lea.vmem %s2, %s598
      %s600 = smul.u32 %s26, 16
      %s601 = sadd.s32 %s600, 16
      %p602 = scmp.lt.s32.totalorder %s601, 15
      %s603 = scalar_select %p602, %s601, 15
      %s604 = smul.u32 %s26, 16
      %s605 = ssub.s32 %s604, 1
      %p606 = scmp.gt.s32.totalorder %s605, 0
      %s607 = scalar_select %p606, %s605, 0
      %p608 = scmp.lt.s32.totalorder %s25, 1
      %s609 = scalar_select %p608, %s25, 1
      %p610 = scmp.lt.s32.totalorder %s607, 15
      %s611 = scalar_select %p610, %s607, 15
      %s612 = smul.addr %s609, 16
      %s613 = sadd.s32 %s611, %s612
      %s614 = smul.addr %s613, 4
      %s615 = scalar_lea.vmem %s3, %s614
      %s616 = smul.u32 %s26, 16
      %s617 = ssub.s32 %s616, 1
      %p618 = scmp.gt.s32.totalorder %s617, 0
      %s619 = scalar_select %p618, %s617, 0
      %s620 = smul.u32 16, %s26
      %p621 = scmp.lt.s32.totalorder %s25, 1
      %s622 = scalar_select %p621, %s25, 1
      %p623 = scmp.lt.s32.totalorder %s620, 15
      %s624 = scalar_select %p623, %s620, 15
      %s625 = smul.addr %s622, 16
      %s626 = sadd.s32 %s624, %s625
      %s627 = smul.addr %s626, 4
      %s628 = scalar_lea.vmem %s4, %s627
      %s629 = smul.u32 16, %s26
      %s630 = smul.u32 %s26, 16
      %s631 = sadd.s32 %s630, 16
      %p632 = scmp.lt.s32.totalorder %s631, 15
      %s633 = scalar_select %p632, %s631, 15
      %p634 = scmp.lt.s32.totalorder %s25, 1
      %s635 = scalar_select %p634, %s25, 1
      %p636 = scmp.lt.s32.totalorder %s633, 15
      %s637 = scalar_select %p636, %s633, 15
      %s638 = smul.addr %s635, 16
      %s639 = sadd.s32 %s637, %s638
      %s640 = smul.addr %s639, 4
      %s641 = scalar_lea.vmem %s5, %s640
      %s642 = smul.u32 %s26, 16
      %s643 = sadd.s32 %s642, 16
      %p644 = scmp.lt.s32.totalorder %s643, 15
      %s645 = scalar_select %p644, %s643, 15
      %s646 = smul.u32 16, %s26
      %p647 = scmp.lt.s32.totalorder %s25, 1
      %s648 = scalar_select %p647, %s25, 1
      %p649 = scmp.lt.s32.totalorder %s646, 15
      %s650 = scalar_select %p649, %s646, 15
      %s651 = smul.addr %s648, 16
      %s652 = sadd.s32 %s650, %s651
      %s653 = smul.addr %s652, 4
      %s654 = scalar_lea.vmem %s8, %s653
      %s655 = smul.u32 16, %s26
      %p656 = scmp.lt.s32.totalorder %s25, 1
      %s657 = scalar_select %p656, %s25, 1
      %p658 = scmp.lt.s32.totalorder %s26, 0
      %s659 = scalar_select %p658, %s26, 0
      %s660 = sadd.s32 %s659, %s657
      %s661 = smul.addr %s660, 2
      %s662 = scalar_lea.vmem %s9, %s661
      %v664 = vld [vmem:[%s573] sm:$0xff]
      %v665 = vld [vmem:[%s615] sm:$0xf]
      %v666 = vunpack.c.l.bf16 %v665
      %v667 = vsub.f32 %v664, %v666
      %v668 = vld [vmem:[%s599] sm:$0xff]
      %v669 = vld [vmem:[%s641] sm:$0xf]
      %v670 = vunpack.c.l.bf16 %v669
      %v671 = vsub.f32 %v668, %v670
      %v672 = vld [vmem:[%s586] sm:$0xff]
      %v673 = vld [vmem:[%s586 + $0x8] sm:$0xff]
      %v674 = vld [vmem:[%s586 + $0x10] sm:$0xff]
      %v675 = vld [vmem:[%s586 + $0x18] sm:$0xff]
      %v676 = vld [vmem:[%s586 + $0x20] sm:$0xff]
      %v677 = vld [vmem:[%s586 + $0x28] sm:$0xff]
      %v678 = vld [vmem:[%s586 + $0x30] sm:$0xff]
      %v679 = vld [vmem:[%s586 + $0x38] sm:$0xff]
      %v680 = vld [vmem:[%s586 + $0x40] sm:$0xff]
      %v681 = vld [vmem:[%s586 + $0x48] sm:$0xff]
      %v682 = vld [vmem:[%s586 + $0x50] sm:$0xff]
      %v683 = vld [vmem:[%s586 + $0x58] sm:$0xff]
      %v684 = vld [vmem:[%s586 + $0x60] sm:$0xff]
      %v685 = vld [vmem:[%s586 + $0x68] sm:$0xff]
      %v686 = vld [vmem:[%s586 + $0x70] sm:$0xff]
      %v687 = vld [vmem:[%s586 + $0x78] sm:$0xff]
      %v688 = vld [vmem:[%s628] sm:$0xf]
      %v689 = vld [vmem:[%s628 + $0x4] sm:$0xf]
      %v690 = vld [vmem:[%s628 + $0x8] sm:$0xf]
      %v691 = vld [vmem:[%s628 + $0xc] sm:$0xf]
      %v692 = vld [vmem:[%s628 + $0x10] sm:$0xf]
      %v693 = vld [vmem:[%s628 + $0x14] sm:$0xf]
      %v694 = vld [vmem:[%s628 + $0x18] sm:$0xf]
      %v695 = vld [vmem:[%s628 + $0x1c] sm:$0xf]
      %v696 = vld [vmem:[%s628 + $0x20] sm:$0xf]
      %v697 = vld [vmem:[%s628 + $0x24] sm:$0xf]
      %v698 = vld [vmem:[%s628 + $0x28] sm:$0xf]
      %v699 = vld [vmem:[%s628 + $0x2c] sm:$0xf]
      %v700 = vld [vmem:[%s628 + $0x30] sm:$0xf]
      %v701 = vld [vmem:[%s628 + $0x34] sm:$0xf]
      %v702 = vld [vmem:[%s628 + $0x38] sm:$0xf]
      %v703 = vld [vmem:[%s628 + $0x3c] sm:$0xf]
      %v704 = vunpack.c.l.bf16 %v688
      %v705 = vunpack.c.l.bf16 %v689
      %v706 = vunpack.c.l.bf16 %v690
      %v707 = vunpack.c.l.bf16 %v691
      %v708 = vunpack.c.l.bf16 %v692
      %v709 = vunpack.c.l.bf16 %v693
      %v710 = vunpack.c.l.bf16 %v694
      %v711 = vunpack.c.l.bf16 %v695
      %v712 = vunpack.c.l.bf16 %v696
      %v713 = vunpack.c.l.bf16 %v697
      %v714 = vunpack.c.l.bf16 %v698
      %v715 = vunpack.c.l.bf16 %v699
      %v716 = vunpack.c.l.bf16 %v700
      %v717 = vunpack.c.l.bf16 %v701
      %v718 = vunpack.c.l.bf16 %v702
      %v719 = vunpack.c.l.bf16 %v703
      %v720 = vsub.f32 %v672, %v704
      %v721 = vsub.f32 %v673, %v705
      %v722 = vsub.f32 %v674, %v706
      %v723 = vsub.f32 %v675, %v707
      %v724 = vsub.f32 %v676, %v708
      %v725 = vsub.f32 %v677, %v709
      %v726 = vsub.f32 %v678, %v710
      %v727 = vsub.f32 %v679, %v711
      %v728 = vsub.f32 %v680, %v712
      %v729 = vsub.f32 %v681, %v713
      %v730 = vsub.f32 %v682, %v714
      %v731 = vsub.f32 %v683, %v715
      %v732 = vsub.f32 %v684, %v716
      %v733 = vsub.f32 %v685, %v717
      %v734 = vsub.f32 %v686, %v718
      %v735 = vsub.f32 %v687, %v719
      %p736 = scmp.eq.s32.totalorder %s26, 0
      %s737 = scalar_select %p736, 1, 0
      %v738 = vstv %s737
      %vm739 = vcmp.eq.s32.totalorder %v738, 1
      %v740 = vsel %vm739, 0.0, %v667
      %v741 = vsel %vm739, 0.0, %v671
      %v742 = vld [vmem:[%s6] sm:$0xff]
      %v743 = vld [vmem:[%s6 + $0x8] sm:$0x1]
      %v760 = vrot.slane %v740, 7
      %v761 = vrot.slane %v720, 7
      %v762 = vrot.slane %v721, 7
      %v763 = vrot.slane %v722, 7
      %v764 = vrot.slane %v723, 7
      %v765 = vrot.slane %v724, 7
      %v766 = vrot.slane %v725, 7
      %v767 = vrot.slane %v726, 7
      %v768 = vrot.slane %v727, 7
      %v769 = vrot.slane %v728, 7
      %v770 = vrot.slane %v729, 7
      %v771 = vrot.slane %v730, 7
      %v772 = vrot.slane %v731, 7
      %v773 = vrot.slane %v732, 7
      %v774 = vrot.slane %v733, 7
      %v775 = vrot.slane %v734, 7
      %776 = vrot.lane.b32.xlu0 %v760, 64
      %v777 = vpop.permute.xlu0 %776
      %778 = vrot.lane.b32.xlu0 %v761, 64
      %v779 = vpop.permute.xlu0 %778
      %780 = vrot.lane.b32.xlu0 %v762, 64
      %v781 = vpop.permute.xlu0 %780
      %782 = vrot.lane.b32.xlu0 %v763, 64
      %v783 = vpop.permute.xlu0 %782
      %784 = vrot.lane.b32.xlu0 %v764, 64
      %v785 = vpop.permute.xlu0 %784
      %786 = vrot.lane.b32.xlu0 %v765, 64
      %v787 = vpop.permute.xlu0 %786
      %788 = vrot.lane.b32.xlu0 %v766, 64
      %v789 = vpop.permute.xlu0 %788
      %790 = vrot.lane.b32.xlu0 %v767, 64
      %v791 = vpop.permute.xlu0 %790
      %792 = vrot.lane.b32.xlu0 %v768, 64
      %v793 = vpop.permute.xlu0 %792
      %794 = vrot.lane.b32.xlu0 %v769, 64
      %v795 = vpop.permute.xlu0 %794
      %796 = vrot.lane.b32.xlu0 %v770, 64
      %v797 = vpop.permute.xlu0 %796
      %798 = vrot.lane.b32.xlu0 %v771, 64
      %v799 = vpop.permute.xlu0 %798
      %800 = vrot.lane.b32.xlu0 %v772, 64
      %v801 = vpop.permute.xlu0 %800
      %802 = vrot.lane.b32.xlu0 %v773, 64
      %v803 = vpop.permute.xlu0 %802
      %804 = vrot.lane.b32.xlu0 %v774, 64
      %v805 = vpop.permute.xlu0 %804
      %806 = vrot.lane.b32.xlu0 %v775, 64
      %v807 = vpop.permute.xlu0 %806
      %vm824 = vcmask 1040384
      %v825 = vsel %vm824, 0.0, %v777
      %v826 = vsel %vm824, 0.0, %v779
      %v827 = vsel %vm824, 0.0, %v781
      %v828 = vsel %vm824, 0.0, %v783
      %v829 = vsel %vm824, 0.0, %v785
      %v830 = vsel %vm824, 0.0, %v787
      %v831 = vsel %vm824, 0.0, %v789
      %v832 = vsel %vm824, 0.0, %v791
      %v833 = vsel %vm824, 0.0, %v793
      %v834 = vsel %vm824, 0.0, %v795
      %v835 = vsel %vm824, 0.0, %v797
      %v836 = vsel %vm824, 0.0, %v799
      %v837 = vsel %vm824, 0.0, %v801
      %v838 = vsel %vm824, 0.0, %v803
      %v839 = vsel %vm824, 0.0, %v805
      %v840 = vsel %vm824, 0.0, %v807
      %v841 = vrot.slane %v740, 1
      %v842 = vrot.slane %v720, 1
      %v843 = vrot.slane %v721, 1
      %v844 = vrot.slane %v722, 1
      %v845 = vrot.slane %v723, 1
      %v846 = vrot.slane %v724, 1
      %v847 = vrot.slane %v725, 1
      %v848 = vrot.slane %v726, 1
      %v849 = vrot.slane %v727, 1
      %v850 = vrot.slane %v728, 1
      %v851 = vrot.slane %v729, 1
      %v852 = vrot.slane %v730, 1
      %v853 = vrot.slane %v731, 1
      %v854 = vrot.slane %v732, 1
      %v855 = vrot.slane %v733, 1
      %v856 = vrot.slane %v734, 1
      %vm873 = vcmask 1046528
      %v874 = vsel %vm873, %v841, 0.0
      %v875 = vsel %vm873, %v842, 0.0
      %v876 = vsel %vm873, %v843, 0.0
      %v877 = vsel %vm873, %v844, 0.0
      %v878 = vsel %vm873, %v845, 0.0
      %v879 = vsel %vm873, %v846, 0.0
      %v880 = vsel %vm873, %v847, 0.0
      %v881 = vsel %vm873, %v848, 0.0
      %v882 = vsel %vm873, %v849, 0.0
      %v883 = vsel %vm873, %v850, 0.0
      %v884 = vsel %vm873, %v851, 0.0
      %v885 = vsel %vm873, %v852, 0.0
      %v886 = vsel %vm873, %v853, 0.0
      %v887 = vsel %vm873, %v854, 0.0
      %v888 = vsel %vm873, %v855, 0.0
      %v889 = vsel %vm873, %v856, 0.0
      %890 = vrot.lane.b32.xlu0 %v740, 64
      %v891 = vpop.permute.xlu0 %890
      %892 = vrot.lane.b32.xlu0 %v720, 64
      %v893 = vpop.permute.xlu0 %892
      %894 = vrot.lane.b32.xlu0 %v721, 64
      %v895 = vpop.permute.xlu0 %894
      %896 = vrot.lane.b32.xlu0 %v722, 64
      %v897 = vpop.permute.xlu0 %896
      %898 = vrot.lane.b32.xlu0 %v723, 64
      %v899 = vpop.permute.xlu0 %898
      %900 = vrot.lane.b32.xlu0 %v724, 64
      %v901 = vpop.permute.xlu0 %900
      %902 = vrot.lane.b32.xlu0 %v725, 64
      %v903 = vpop.permute.xlu0 %902
      %904 = vrot.lane.b32.xlu0 %v726, 64
      %v905 = vpop.permute.xlu0 %904
      %906 = vrot.lane.b32.xlu0 %v727, 64
      %v907 = vpop.permute.xlu0 %906
      %908 = vrot.lane.b32.xlu0 %v728, 64
      %v909 = vpop.permute.xlu0 %908
      %910 = vrot.lane.b32.xlu0 %v729, 64
      %v911 = vpop.permute.xlu0 %910
      %912 = vrot.lane.b32.xlu0 %v730, 64
      %v913 = vpop.permute.xlu0 %912
      %914 = vrot.lane.b32.xlu0 %v731, 64
      %v915 = vpop.permute.xlu0 %914
      %916 = vrot.lane.b32.xlu0 %v732, 64
      %v917 = vpop.permute.xlu0 %916
      %918 = vrot.lane.b32.xlu0 %v733, 64
      %v919 = vpop.permute.xlu0 %918
      %920 = vrot.lane.b32.xlu0 %v734, 64
      %v921 = vpop.permute.xlu0 %920
      %vm938 = vcmask 523264
      %v939 = vsel %vm938, %v825, %v891
      %v940 = vsel %vm938, %v826, %v893
      %v941 = vsel %vm938, %v827, %v895
      %v942 = vsel %vm938, %v828, %v897
      %v943 = vsel %vm938, %v829, %v899
      %v944 = vsel %vm938, %v830, %v901
      %v945 = vsel %vm938, %v831, %v903
      %v946 = vsel %vm938, %v832, %v905
      %v947 = vsel %vm938, %v833, %v907
      %v948 = vsel %vm938, %v834, %v909
      %v949 = vsel %vm938, %v835, %v911
      %v950 = vsel %vm938, %v836, %v913
      %v951 = vsel %vm938, %v837, %v915
      %v952 = vsel %vm938, %v838, %v917
      %v953 = vsel %vm938, %v839, %v919
      %v954 = vsel %vm938, %v840, %v921
      %971 = vrot.lane.b32.xlu0 %v874, 64
      %v972 = vpop.permute.xlu0 %971
      %973 = vrot.lane.b32.xlu0 %v875, 64
      %v974 = vpop.permute.xlu0 %973
      %975 = vrot.lane.b32.xlu0 %v876, 64
      %v976 = vpop.permute.xlu0 %975
      %977 = vrot.lane.b32.xlu0 %v877, 64
      %v978 = vpop.permute.xlu0 %977
      %979 = vrot.lane.b32.xlu0 %v878, 64
      %v980 = vpop.permute.xlu0 %979
      %981 = vrot.lane.b32.xlu0 %v879, 64
      %v982 = vpop.permute.xlu0 %981
      %983 = vrot.lane.b32.xlu0 %v880, 64
      %v984 = vpop.permute.xlu0 %983
      %985 = vrot.lane.b32.xlu0 %v881, 64
      %v986 = vpop.permute.xlu0 %985
      %987 = vrot.lane.b32.xlu0 %v882, 64
      %v988 = vpop.permute.xlu0 %987
      %989 = vrot.lane.b32.xlu0 %v883, 64
      %v990 = vpop.permute.xlu0 %989
      %991 = vrot.lane.b32.xlu0 %v884, 64
      %v992 = vpop.permute.xlu0 %991
      %993 = vrot.lane.b32.xlu0 %v885, 64
      %v994 = vpop.permute.xlu0 %993
      %995 = vrot.lane.b32.xlu0 %v886, 64
      %v996 = vpop.permute.xlu0 %995
      %997 = vrot.lane.b32.xlu0 %v887, 64
      %v998 = vpop.permute.xlu0 %997
      %999 = vrot.lane.b32.xlu0 %v888, 64
      %v1000 = vpop.permute.xlu0 %999
      %1001 = vrot.lane.b32.xlu0 %v889, 64
      %v1002 = vpop.permute.xlu0 %1001
      %v1019 = vsel %vm938, %v891, %v972
      %v1020 = vsel %vm938, %v893, %v974
      %v1021 = vsel %vm938, %v895, %v976
      %v1022 = vsel %vm938, %v897, %v978
      %v1023 = vsel %vm938, %v899, %v980
      %v1024 = vsel %vm938, %v901, %v982
      %v1025 = vsel %vm938, %v903, %v984
      %v1026 = vsel %vm938, %v905, %v986
      %v1027 = vsel %vm938, %v907, %v988
      %v1028 = vsel %vm938, %v909, %v990
      %v1029 = vsel %vm938, %v911, %v992
      %v1030 = vsel %vm938, %v913, %v994
      %v1031 = vsel %vm938, %v915, %v996
      %v1032 = vsel %vm938, %v917, %v998
      %v1033 = vsel %vm938, %v919, %v1000
      %v1034 = vsel %vm938, %v921, %v1002
      %v1035 = vlaneseq
      %v1036 = vshrl.u32 %v1035, 7
      %v1037 = vsub.s32 0, %v1036
      %v1038 = vrot.slane %v742, %v1037
      %v1039 = vmul.f32 %v939, %v1038
      %v1040 = vmul.f32 %v940, %v1038
      %v1041 = vmul.f32 %v941, %v1038
      %v1042 = vmul.f32 %v942, %v1038
      %v1043 = vmul.f32 %v943, %v1038
      %v1044 = vmul.f32 %v944, %v1038
      %v1045 = vmul.f32 %v945, %v1038
      %v1046 = vmul.f32 %v946, %v1038
      %v1047 = vmul.f32 %v947, %v1038
      %v1048 = vmul.f32 %v948, %v1038
      %v1049 = vmul.f32 %v949, %v1038
      %v1050 = vmul.f32 %v950, %v1038
      %v1051 = vmul.f32 %v951, %v1038
      %v1052 = vmul.f32 %v952, %v1038
      %v1053 = vmul.f32 %v953, %v1038
      %v1054 = vmul.f32 %v954, %v1038
      %v1055 = vadd.f32 %v1039, 0.0
      %v1056 = vadd.f32 %v1040, 0.0
      %v1057 = vadd.f32 %v1041, 0.0
      %v1058 = vadd.f32 %v1042, 0.0
      %v1059 = vadd.f32 %v1043, 0.0
      %v1060 = vadd.f32 %v1044, 0.0
      %v1061 = vadd.f32 %v1045, 0.0
      %v1062 = vadd.f32 %v1046, 0.0
      %v1063 = vadd.f32 %v1047, 0.0
      %v1064 = vadd.f32 %v1048, 0.0
      %v1065 = vadd.f32 %v1049, 0.0
      %v1066 = vadd.f32 %v1050, 0.0
      %v1067 = vadd.f32 %v1051, 0.0
      %v1068 = vadd.f32 %v1052, 0.0
      %v1069 = vadd.f32 %v1053, 0.0
      %v1070 = vadd.f32 %v1054, 0.0
      %v1071 = vlaneseq
      %v1072 = vshrl.u32 %v1071, 7
      %v1073 = vsub.s32 1, %v1072
      %v1074 = vrot.slane %v742, %v1073
      %v1075 = vmul.f32 %v740, %v1074
      %v1076 = vmul.f32 %v720, %v1074
      %v1077 = vmul.f32 %v721, %v1074
      %v1078 = vmul.f32 %v722, %v1074
      %v1079 = vmul.f32 %v723, %v1074
      %v1080 = vmul.f32 %v724, %v1074
      %v1081 = vmul.f32 %v725, %v1074
      %v1082 = vmul.f32 %v726, %v1074
      %v1083 = vmul.f32 %v727, %v1074
      %v1084 = vmul.f32 %v728, %v1074
      %v1085 = vmul.f32 %v729, %v1074
      %v1086 = vmul.f32 %v730, %v1074
      %v1087 = vmul.f32 %v731, %v1074
      %v1088 = vmul.f32 %v732, %v1074
      %v1089 = vmul.f32 %v733, %v1074
      %v1090 = vmul.f32 %v734, %v1074
      %v1091 = vadd.f32 %v1055, %v1075
      %v1092 = vadd.f32 %v1056, %v1076
      %v1093 = vadd.f32 %v1057, %v1077
      %v1094 = vadd.f32 %v1058, %v1078
      %v1095 = vadd.f32 %v1059, %v1079
      %v1096 = vadd.f32 %v1060, %v1080
      %v1097 = vadd.f32 %v1061, %v1081
      %v1098 = vadd.f32 %v1062, %v1082
      %v1099 = vadd.f32 %v1063, %v1083
      %v1100 = vadd.f32 %v1064, %v1084
      %v1101 = vadd.f32 %v1065, %v1085
      %v1102 = vadd.f32 %v1066, %v1086
      %v1103 = vadd.f32 %v1067, %v1087
      %v1104 = vadd.f32 %v1068, %v1088
      %v1105 = vadd.f32 %v1069, %v1089
      %v1106 = vadd.f32 %v1070, %v1090
      %v1107 = vlaneseq
      %v1108 = vshrl.u32 %v1107, 7
      %v1109 = vsub.s32 2, %v1108
      %v1110 = vrot.slane %v742, %v1109
      %v1111 = vmul.f32 %v1019, %v1110
      %v1112 = vmul.f32 %v1020, %v1110
      %v1113 = vmul.f32 %v1021, %v1110
      %v1114 = vmul.f32 %v1022, %v1110
      %v1115 = vmul.f32 %v1023, %v1110
      %v1116 = vmul.f32 %v1024, %v1110
      %v1117 = vmul.f32 %v1025, %v1110
      %v1118 = vmul.f32 %v1026, %v1110
      %v1119 = vmul.f32 %v1027, %v1110
      %v1120 = vmul.f32 %v1028, %v1110
      %v1121 = vmul.f32 %v1029, %v1110
      %v1122 = vmul.f32 %v1030, %v1110
      %v1123 = vmul.f32 %v1031, %v1110
      %v1124 = vmul.f32 %v1032, %v1110
      %v1125 = vmul.f32 %v1033, %v1110
      %v1126 = vmul.f32 %v1034, %v1110
      %v1127 = vadd.f32 %v1091, %v1111
      %v1128 = vadd.f32 %v1092, %v1112
      %v1129 = vadd.f32 %v1093, %v1113
      %v1130 = vadd.f32 %v1094, %v1114
      %v1131 = vadd.f32 %v1095, %v1115
      %v1132 = vadd.f32 %v1096, %v1116
      %v1133 = vadd.f32 %v1097, %v1117
      %v1134 = vadd.f32 %v1098, %v1118
      %v1135 = vadd.f32 %v1099, %v1119
      %v1136 = vadd.f32 %v1100, %v1120
      %v1137 = vadd.f32 %v1101, %v1121
      %v1138 = vadd.f32 %v1102, %v1122
      %v1139 = vadd.f32 %v1103, %v1123
      %v1140 = vadd.f32 %v1104, %v1124
      %v1141 = vadd.f32 %v1105, %v1125
      %v1142 = vadd.f32 %v1106, %v1126
      %v1144 = vrot.slane %v735, 7
      %1145 = vrot.lane.b32.xlu0 %v1144, 64
      %v1146 = vpop.permute.xlu0 %1145
      %v1148 = vsel %vm824, 0.0, %v1146
      %v1149 = vrot.slane %v735, 1
      %v1151 = vsel %vm873, %v1149, 0.0
      %1152 = vrot.lane.b32.xlu0 %v735, 64
      %v1153 = vpop.permute.xlu0 %1152
      %v1155 = vsel %vm938, %v1148, %v1153
      %1157 = vrot.lane.b32.xlu0 %v1151, 64
      %v1158 = vpop.permute.xlu0 %1157
      %v1160 = vsel %vm938, %v1153, %v1158
      %v1161 = vlaneseq
      %v1162 = vshrl.u32 %v1161, 7
      %v1163 = vsub.s32 3, %v1162
      %v1164 = vrot.slane %v742, %v1163
      %v1165 = vmul.f32 %v940, %v1164
      %v1166 = vmul.f32 %v941, %v1164
      %v1167 = vmul.f32 %v942, %v1164
      %v1168 = vmul.f32 %v943, %v1164
      %v1169 = vmul.f32 %v944, %v1164
      %v1170 = vmul.f32 %v945, %v1164
      %v1171 = vmul.f32 %v946, %v1164
      %v1172 = vmul.f32 %v947, %v1164
      %v1173 = vmul.f32 %v948, %v1164
      %v1174 = vmul.f32 %v949, %v1164
      %v1175 = vmul.f32 %v950, %v1164
      %v1176 = vmul.f32 %v951, %v1164
      %v1177 = vmul.f32 %v952, %v1164
      %v1178 = vmul.f32 %v953, %v1164
      %v1179 = vmul.f32 %v954, %v1164
      %v1180 = vmul.f32 %v1155, %v1164
      %v1181 = vadd.f32 %v1127, %v1165
      %v1182 = vadd.f32 %v1128, %v1166
      %v1183 = vadd.f32 %v1129, %v1167
      %v1184 = vadd.f32 %v1130, %v1168
      %v1185 = vadd.f32 %v1131, %v1169
      %v1186 = vadd.f32 %v1132, %v1170
      %v1187 = vadd.f32 %v1133, %v1171
      %v1188 = vadd.f32 %v1134, %v1172
      %v1189 = vadd.f32 %v1135, %v1173
      %v1190 = vadd.f32 %v1136, %v1174
      %v1191 = vadd.f32 %v1137, %v1175
      %v1192 = vadd.f32 %v1138, %v1176
      %v1193 = vadd.f32 %v1139, %v1177
      %v1194 = vadd.f32 %v1140, %v1178
      %v1195 = vadd.f32 %v1141, %v1179
      %v1196 = vadd.f32 %v1142, %v1180
      %v1197 = vlaneseq
      %v1198 = vshrl.u32 %v1197, 7
      %v1199 = vsub.s32 4, %v1198
      %v1200 = vrot.slane %v742, %v1199
      %v1201 = vmul.f32 %v720, %v1200
      %v1202 = vmul.f32 %v721, %v1200
      %v1203 = vmul.f32 %v722, %v1200
      %v1204 = vmul.f32 %v723, %v1200
      %v1205 = vmul.f32 %v724, %v1200
      %v1206 = vmul.f32 %v725, %v1200
      %v1207 = vmul.f32 %v726, %v1200
      %v1208 = vmul.f32 %v727, %v1200
      %v1209 = vmul.f32 %v728, %v1200
      %v1210 = vmul.f32 %v729, %v1200
      %v1211 = vmul.f32 %v730, %v1200
      %v1212 = vmul.f32 %v731, %v1200
      %v1213 = vmul.f32 %v732, %v1200
      %v1214 = vmul.f32 %v733, %v1200
      %v1215 = vmul.f32 %v734, %v1200
      %v1216 = vmul.f32 %v735, %v1200
      %v1217 = vadd.f32 %v1181, %v1201
      %v1218 = vadd.f32 %v1182, %v1202
      %v1219 = vadd.f32 %v1183, %v1203
      %v1220 = vadd.f32 %v1184, %v1204
      %v1221 = vadd.f32 %v1185, %v1205
      %v1222 = vadd.f32 %v1186, %v1206
      %v1223 = vadd.f32 %v1187, %v1207
      %v1224 = vadd.f32 %v1188, %v1208
      %v1225 = vadd.f32 %v1189, %v1209
      %v1226 = vadd.f32 %v1190, %v1210
      %v1227 = vadd.f32 %v1191, %v1211
      %v1228 = vadd.f32 %v1192, %v1212
      %v1229 = vadd.f32 %v1193, %v1213
      %v1230 = vadd.f32 %v1194, %v1214
      %v1231 = vadd.f32 %v1195, %v1215
      %v1232 = vadd.f32 %v1196, %v1216
      %v1233 = vlaneseq
      %v1234 = vshrl.u32 %v1233, 7
      %v1235 = vsub.s32 5, %v1234
      %v1236 = vrot.slane %v742, %v1235
      %v1237 = vmul.f32 %v1020, %v1236
      %v1238 = vmul.f32 %v1021, %v1236
      %v1239 = vmul.f32 %v1022, %v1236
      %v1240 = vmul.f32 %v1023, %v1236
      %v1241 = vmul.f32 %v1024, %v1236
      %v1242 = vmul.f32 %v1025, %v1236
      %v1243 = vmul.f32 %v1026, %v1236
      %v1244 = vmul.f32 %v1027, %v1236
      %v1245 = vmul.f32 %v1028, %v1236
      %v1246 = vmul.f32 %v1029, %v1236
      %v1247 = vmul.f32 %v1030, %v1236
      %v1248 = vmul.f32 %v1031, %v1236
      %v1249 = vmul.f32 %v1032, %v1236
      %v1250 = vmul.f32 %v1033, %v1236
      %v1251 = vmul.f32 %v1034, %v1236
      %v1252 = vmul.f32 %v1160, %v1236
      %v1253 = vadd.f32 %v1217, %v1237
      %v1254 = vadd.f32 %v1218, %v1238
      %v1255 = vadd.f32 %v1219, %v1239
      %v1256 = vadd.f32 %v1220, %v1240
      %v1257 = vadd.f32 %v1221, %v1241
      %v1258 = vadd.f32 %v1222, %v1242
      %v1259 = vadd.f32 %v1223, %v1243
      %v1260 = vadd.f32 %v1224, %v1244
      %v1261 = vadd.f32 %v1225, %v1245
      %v1262 = vadd.f32 %v1226, %v1246
      %v1263 = vadd.f32 %v1227, %v1247
      %v1264 = vadd.f32 %v1228, %v1248
      %v1265 = vadd.f32 %v1229, %v1249
      %v1266 = vadd.f32 %v1230, %v1250
      %v1267 = vadd.f32 %v1231, %v1251
      %v1268 = vadd.f32 %v1232, %v1252
      %v1270 = vrot.slane %v741, 7
      %1271 = vrot.lane.b32.xlu0 %v1270, 64
      %v1272 = vpop.permute.xlu0 %1271
      %v1274 = vsel %vm824, 0.0, %v1272
      %v1275 = vrot.slane %v741, 1
      %v1277 = vsel %vm873, %v1275, 0.0
      %1278 = vrot.lane.b32.xlu0 %v741, 64
      %v1279 = vpop.permute.xlu0 %1278
      %v1281 = vsel %vm938, %v1274, %v1279
      %1283 = vrot.lane.b32.xlu0 %v1277, 64
      %v1284 = vpop.permute.xlu0 %1283
      %v1286 = vsel %vm938, %v1279, %v1284
      %v1287 = vlaneseq
      %v1288 = vshrl.u32 %v1287, 7
      %v1289 = vsub.s32 6, %v1288
      %v1290 = vrot.slane %v742, %v1289
      %v1291 = vmul.f32 %v941, %v1290
      %v1292 = vmul.f32 %v942, %v1290
      %v1293 = vmul.f32 %v943, %v1290
      %v1294 = vmul.f32 %v944, %v1290
      %v1295 = vmul.f32 %v945, %v1290
      %v1296 = vmul.f32 %v946, %v1290
      %v1297 = vmul.f32 %v947, %v1290
      %v1298 = vmul.f32 %v948, %v1290
      %v1299 = vmul.f32 %v949, %v1290
      %v1300 = vmul.f32 %v950, %v1290
      %v1301 = vmul.f32 %v951, %v1290
      %v1302 = vmul.f32 %v952, %v1290
      %v1303 = vmul.f32 %v953, %v1290
      %v1304 = vmul.f32 %v954, %v1290
      %v1305 = vmul.f32 %v1155, %v1290
      %v1306 = vmul.f32 %v1281, %v1290
      %v1307 = vadd.f32 %v1253, %v1291
      %v1308 = vadd.f32 %v1254, %v1292
      %v1309 = vadd.f32 %v1255, %v1293
      %v1310 = vadd.f32 %v1256, %v1294
      %v1311 = vadd.f32 %v1257, %v1295
      %v1312 = vadd.f32 %v1258, %v1296
      %v1313 = vadd.f32 %v1259, %v1297
      %v1314 = vadd.f32 %v1260, %v1298
      %v1315 = vadd.f32 %v1261, %v1299
      %v1316 = vadd.f32 %v1262, %v1300
      %v1317 = vadd.f32 %v1263, %v1301
      %v1318 = vadd.f32 %v1264, %v1302
      %v1319 = vadd.f32 %v1265, %v1303
      %v1320 = vadd.f32 %v1266, %v1304
      %v1321 = vadd.f32 %v1267, %v1305
      %v1322 = vadd.f32 %v1268, %v1306
      %v1323 = vlaneseq
      %v1324 = vshrl.u32 %v1323, 7
      %v1325 = vsub.s32 7, %v1324
      %v1326 = vrot.slane %v742, %v1325
      %v1327 = vmul.f32 %v721, %v1326
      %v1328 = vmul.f32 %v722, %v1326
      %v1329 = vmul.f32 %v723, %v1326
      %v1330 = vmul.f32 %v724, %v1326
      %v1331 = vmul.f32 %v725, %v1326
      %v1332 = vmul.f32 %v726, %v1326
      %v1333 = vmul.f32 %v727, %v1326
      %v1334 = vmul.f32 %v728, %v1326
      %v1335 = vmul.f32 %v729, %v1326
      %v1336 = vmul.f32 %v730, %v1326
      %v1337 = vmul.f32 %v731, %v1326
      %v1338 = vmul.f32 %v732, %v1326
      %v1339 = vmul.f32 %v733, %v1326
      %v1340 = vmul.f32 %v734, %v1326
      %v1341 = vmul.f32 %v735, %v1326
      %v1342 = vmul.f32 %v741, %v1326
      %v1343 = vadd.f32 %v1307, %v1327
      %v1344 = vadd.f32 %v1308, %v1328
      %v1345 = vadd.f32 %v1309, %v1329
      %v1346 = vadd.f32 %v1310, %v1330
      %v1347 = vadd.f32 %v1311, %v1331
      %v1348 = vadd.f32 %v1312, %v1332
      %v1349 = vadd.f32 %v1313, %v1333
      %v1350 = vadd.f32 %v1314, %v1334
      %v1351 = vadd.f32 %v1315, %v1335
      %v1352 = vadd.f32 %v1316, %v1336
      %v1353 = vadd.f32 %v1317, %v1337
      %v1354 = vadd.f32 %v1318, %v1338
      %v1355 = vadd.f32 %v1319, %v1339
      %v1356 = vadd.f32 %v1320, %v1340
      %v1357 = vadd.f32 %v1321, %v1341
      %v1358 = vadd.f32 %v1322, %v1342
      %v1359 = vlaneseq
      %v1360 = vshrl.u32 %v1359, 7
      %v1361 = vsub.s32 0, %v1360
      %v1362 = vrot.slane %v743, %v1361
      %v1363 = vmul.f32 %v1021, %v1362
      %v1364 = vmul.f32 %v1022, %v1362
      %v1365 = vmul.f32 %v1023, %v1362
      %v1366 = vmul.f32 %v1024, %v1362
      %v1367 = vmul.f32 %v1025, %v1362
      %v1368 = vmul.f32 %v1026, %v1362
      %v1369 = vmul.f32 %v1027, %v1362
      %v1370 = vmul.f32 %v1028, %v1362
      %v1371 = vmul.f32 %v1029, %v1362
      %v1372 = vmul.f32 %v1030, %v1362
      %v1373 = vmul.f32 %v1031, %v1362
      %v1374 = vmul.f32 %v1032, %v1362
      %v1375 = vmul.f32 %v1033, %v1362
      %v1376 = vmul.f32 %v1034, %v1362
      %v1377 = vmul.f32 %v1160, %v1362
      %v1378 = vmul.f32 %v1286, %v1362
      %v1379 = vadd.f32 %v1343, %v1363
      %v1380 = vadd.f32 %v1344, %v1364
      %v1381 = vadd.f32 %v1345, %v1365
      %v1382 = vadd.f32 %v1346, %v1366
      %v1383 = vadd.f32 %v1347, %v1367
      %v1384 = vadd.f32 %v1348, %v1368
      %v1385 = vadd.f32 %v1349, %v1369
      %v1386 = vadd.f32 %v1350, %v1370
      %v1387 = vadd.f32 %v1351, %v1371
      %v1388 = vadd.f32 %v1352, %v1372
      %v1389 = vadd.f32 %v1353, %v1373
      %v1390 = vadd.f32 %v1354, %v1374
      %v1391 = vadd.f32 %v1355, %v1375
      %v1392 = vadd.f32 %v1356, %v1376
      %v1393 = vadd.f32 %v1357, %v1377
      %v1394 = vadd.f32 %v1358, %v1378
      %v1395 = vpack.c.bf16 %v1380, %v1379
      %v1396 = vpack.c.bf16 %v1382, %v1381
      %v1397 = vpack.c.bf16 %v1384, %v1383
      %v1398 = vpack.c.bf16 %v1386, %v1385
      %v1399 = vpack.c.bf16 %v1388, %v1387
      %v1400 = vpack.c.bf16 %v1390, %v1389
      %v1401 = vpack.c.bf16 %v1392, %v1391
      %v1402 = vpack.c.bf16 %v1394, %v1393
      %v1403 = vld [vmem:[%s7] sm:$0xf]
      %v1404 = vld [vmem:[%s7 + $0x4] sm:$0xf]
      %v1405 = vld [vmem:[%s7 + $0x8] sm:$0xf]
      %v1406 = vld [vmem:[%s7 + $0xc] sm:$0xf]
      %v1407 = vld [vmem:[%s7 + $0x10] sm:$0xf]
      %v1408 = vld [vmem:[%s7 + $0x14] sm:$0xf]
      %v1409 = vld [vmem:[%s7 + $0x18] sm:$0xf]
      %v1410 = vld [vmem:[%s7 + $0x1c] sm:$0xf]
      %v1411 = vld [vmem:[%s7 + $0x20] sm:$0xf]
      %v1412 = vld [vmem:[%s7 + $0x24] sm:$0xf]
      %v1413 = vld [vmem:[%s7 + $0x28] sm:$0xf]
      %v1414 = vld [vmem:[%s7 + $0x2c] sm:$0xf]
      %v1415 = vld [vmem:[%s7 + $0x30] sm:$0xf]
      %v1416 = vld [vmem:[%s7 + $0x34] sm:$0xf]
      %v1417 = vld [vmem:[%s7 + $0x38] sm:$0xf]
      %v1418 = vld [vmem:[%s7 + $0x3c] sm:$0xf]
      %v1435 = vunpack.c.l.b16 %v1403
      %v1436 = vunpack.c.l.b16 %v1404
      %v1437 = vunpack.c.l.b16 %v1405
      %v1438 = vunpack.c.l.b16 %v1406
      %v1439 = vunpack.c.l.b16 %v1407
      %v1440 = vunpack.c.l.b16 %v1408
      %v1441 = vunpack.c.l.b16 %v1409
      %v1442 = vunpack.c.l.b16 %v1410
      %v1443 = vunpack.c.l.b16 %v1411
      %v1444 = vunpack.c.l.b16 %v1412
      %v1445 = vunpack.c.l.b16 %v1413
      %v1446 = vunpack.c.l.b16 %v1414
      %v1447 = vunpack.c.l.b16 %v1415
      %v1448 = vunpack.c.l.b16 %v1416
      %v1449 = vunpack.c.l.b16 %v1417
      %v1450 = vunpack.c.l.b16 %v1418
      %v1451 = vpack.c.b16 %v1436, %v1435
      %v1452 = vpack.c.b16 %v1438, %v1437
      %v1453 = vpack.c.b16 %v1440, %v1439
      %v1454 = vpack.c.b16 %v1442, %v1441
      %v1455 = vpack.c.b16 %v1444, %v1443
      %v1456 = vpack.c.b16 %v1446, %v1445
      %v1457 = vpack.c.b16 %v1448, %v1447
      %v1458 = vpack.c.b16 %v1450, %v1449
      %1467 = vmatprep.subr.bf16.mxu0 0
      %1468 = vmatpush1.bf16.msra.mxu0 %v1458
      %1469 = vmatprep.subr.bf16.mxu0 0
      %1470 = vmatpush1.bf16.msra.mxu0 %v1457
      %1471 = vmatprep.subr.bf16.mxu0 0
      %1472 = vmatpush1.bf16.msra.mxu0 %v1456
      %1473 = vmatprep.subr.bf16.mxu0 0
      %1474 = vmatpush1.bf16.msra.mxu0 %v1455
      %1475 = vmatprep.subr.bf16.mxu0 0
      %1476 = vmatpush1.bf16.msra.mxu0 %v1454
      %1477 = vmatprep.subr.bf16.mxu0 0
      %1478 = vmatpush1.bf16.msra.mxu0 %v1453
      %1479 = vmatprep.subr.bf16.mxu0 0
      %1480 = vmatpush1.bf16.msra.mxu0 %v1452
      %1481 = vmatprep.subr.bf16.mxu0 0
      %1482 = vmatpush1.bf16.msra.mxu0 %v1451
      %1483 = vmatprep.subr.bf16.mxu0 0
      %1484 = vmatpush2.bf16.msra.mxu0 0
      %1485 = vmatprep.subr.bf16.mxu0 0
      %1486 = vmatpush2.bf16.msra.mxu0 0
      %1487 = vmatprep.subr.bf16.mxu0 0
      %1488 = vmatpush2.bf16.msra.mxu0 0
      %1489 = vmatprep.subr.bf16.mxu0 0
      %1490 = vmatpush2.bf16.msra.mxu0 0
      %1491 = vmatprep.subr.bf16.mxu0 0
      %1492 = vmatpush2.bf16.msra.mxu0 0
      %1493 = vmatprep.subr.bf16.mxu0 0
      %1494 = vmatpush2.bf16.msra.mxu0 0
      %1495 = vmatprep.subr.bf16.mxu0 0
      %1496 = vmatpush2.bf16.msra.mxu0 0
      %1497 = vmatprep.subr.bf16.mxu0 0
      %1498 = vmatpush2.bf16.msra.mxu0 0
      %1499 = vmatprep.mubr.bf16.mxu0 0
      %1500 = vmatmul.mubr.bf16.gmra.mxu0 %v1395
      %v1501 = vpop.f32.mrf.mxu0
      %v1502 = vadd.f32 0.0, %v1501
      %v1503 = vpop.f32.mrf.mxu0
      %v1504 = vpop.f32.mrf.mxu0
      %v1505 = vadd.f32 0.0, %v1504
      %v1506 = vpop.f32.mrf.mxu0
      %1507 = vmatprep.mubr.bf16.mxu0 0
      %1508 = vmatmul.mubr.bf16.gmra.mxu0 %v1396
      %v1509 = vpop.f32.mrf.mxu0
      %v1510 = vadd.f32 0.0, %v1509
      %v1511 = vpop.f32.mrf.mxu0
      %v1512 = vpop.f32.mrf.mxu0
      %v1513 = vadd.f32 0.0, %v1512
      %v1514 = vpop.f32.mrf.mxu0
      %1515 = vmatprep.mubr.bf16.mxu0 0
      %1516 = vmatmul.mubr.bf16.gmra.mxu0 %v1397
      %v1517 = vpop.f32.mrf.mxu0
      %v1518 = vadd.f32 0.0, %v1517
      %v1519 = vpop.f32.mrf.mxu0
      %v1520 = vpop.f32.mrf.mxu0
      %v1521 = vadd.f32 0.0, %v1520
      %v1522 = vpop.f32.mrf.mxu0
      %1523 = vmatprep.mubr.bf16.mxu0 0
      %1524 = vmatmul.mubr.bf16.gmra.mxu0 %v1398
      %v1525 = vpop.f32.mrf.mxu0
      %v1526 = vadd.f32 0.0, %v1525
      %v1527 = vpop.f32.mrf.mxu0
      %v1528 = vpop.f32.mrf.mxu0
      %v1529 = vadd.f32 0.0, %v1528
      %v1530 = vpop.f32.mrf.mxu0
      %1531 = vmatprep.mubr.bf16.mxu0 0
      %1532 = vmatmul.mubr.bf16.gmra.mxu0 %v1399
      %v1533 = vpop.f32.mrf.mxu0
      %v1534 = vadd.f32 0.0, %v1533
      %v1535 = vpop.f32.mrf.mxu0
      %v1536 = vpop.f32.mrf.mxu0
      %v1537 = vadd.f32 0.0, %v1536
      %v1538 = vpop.f32.mrf.mxu0
      %1539 = vmatprep.mubr.bf16.mxu0 0
      %1540 = vmatmul.mubr.bf16.gmra.mxu0 %v1400
      %v1541 = vpop.f32.mrf.mxu0
      %v1542 = vadd.f32 0.0, %v1541
      %v1543 = vpop.f32.mrf.mxu0
      %v1544 = vpop.f32.mrf.mxu0
      %v1545 = vadd.f32 0.0, %v1544
      %v1546 = vpop.f32.mrf.mxu0
      %1547 = vmatprep.mubr.bf16.mxu0 0
      %1548 = vmatmul.mubr.bf16.gmra.mxu0 %v1401
      %v1549 = vpop.f32.mrf.mxu0
      %v1550 = vadd.f32 0.0, %v1549
      %v1551 = vpop.f32.mrf.mxu0
      %v1552 = vpop.f32.mrf.mxu0
      %v1553 = vadd.f32 0.0, %v1552
      %v1554 = vpop.f32.mrf.mxu0
      %1555 = vmatprep.mubr.bf16.mxu0 0
      %1556 = vmatmul.mubr.bf16.gmra.mxu0 %v1402
      %v1557 = vpop.f32.mrf.mxu0
      %v1558 = vadd.f32 0.0, %v1557
      %v1559 = vpop.f32.mrf.mxu0
      %v1560 = vpop.f32.mrf.mxu0
      %v1561 = vadd.f32 0.0, %v1560
      %v1562 = vpop.f32.mrf.mxu0
      %1563 = vdwg.mxu0
      %v1564 = vpack.c.bf16 %v1502, %v1502
      %v1565 = vpack.c.bf16 %v1505, %v1505
      %v1566 = vpack.c.bf16 %v1510, %v1510
      %v1567 = vpack.c.bf16 %v1513, %v1513
      %v1568 = vpack.c.bf16 %v1518, %v1518
      %v1569 = vpack.c.bf16 %v1521, %v1521
      %v1570 = vpack.c.bf16 %v1526, %v1526
      %v1571 = vpack.c.bf16 %v1529, %v1529
      %v1572 = vpack.c.bf16 %v1534, %v1534
      %v1573 = vpack.c.bf16 %v1537, %v1537
      %v1574 = vpack.c.bf16 %v1542, %v1542
      %v1575 = vpack.c.bf16 %v1545, %v1545
      %v1576 = vpack.c.bf16 %v1550, %v1550
      %v1577 = vpack.c.bf16 %v1553, %v1553
      %v1578 = vpack.c.bf16 %v1558, %v1558
      %v1579 = vpack.c.bf16 %v1561, %v1561
      %1580 = vst [vmem:[%s654] sm:$0xf] %v1564
      %1581 = vst [vmem:[%s654 + $0x4] sm:$0xf] %v1565
      %1582 = vst [vmem:[%s654 + $0x8] sm:$0xf] %v1566
      %1583 = vst [vmem:[%s654 + $0xc] sm:$0xf] %v1567
      %1584 = vst [vmem:[%s654 + $0x10] sm:$0xf] %v1568
      %1585 = vst [vmem:[%s654 + $0x14] sm:$0xf] %v1569
      %1586 = vst [vmem:[%s654 + $0x18] sm:$0xf] %v1570
      %1587 = vst [vmem:[%s654 + $0x1c] sm:$0xf] %v1571
      %1588 = vst [vmem:[%s654 + $0x20] sm:$0xf] %v1572
      %1589 = vst [vmem:[%s654 + $0x24] sm:$0xf] %v1573
      %1590 = vst [vmem:[%s654 + $0x28] sm:$0xf] %v1574
      %1591 = vst [vmem:[%s654 + $0x2c] sm:$0xf] %v1575
      %1592 = vst [vmem:[%s654 + $0x30] sm:$0xf] %v1576
      %1593 = vst [vmem:[%s654 + $0x34] sm:$0xf] %v1577
      %1594 = vst [vmem:[%s654 + $0x38] sm:$0xf] %v1578
      %1595 = vst [vmem:[%s654 + $0x3c] sm:$0xf] %v1579
      %v1596 = vadd.f32 %v1502, %v1505
      %v1597 = vadd.f32 %v1596, %v1510
      %v1598 = vadd.f32 %v1597, %v1513
      %v1599 = vadd.f32 %v1598, %v1518
      %v1600 = vadd.f32 %v1599, %v1521
      %v1601 = vadd.f32 %v1600, %v1526
      %v1602 = vadd.f32 %v1601, %v1529
      %v1603 = vadd.f32 %v1602, %v1534
      %v1604 = vadd.f32 %v1603, %v1537
      %v1605 = vadd.f32 %v1604, %v1542
      %v1606 = vadd.f32 %v1605, %v1545
      %v1607 = vadd.f32 %v1606, %v1550
      %v1608 = vadd.f32 %v1607, %v1553
      %v1609 = vadd.f32 %v1608, %v1558
      %v1610 = vadd.f32 %v1609, %v1561
      %v1611 = vrot.slane %v1610, 4
      %v1612 = vadd.f32 %v1610, %v1611
      %v1613 = vrot.slane %v1612, 2
      %v1614 = vadd.f32 %v1612, %v1613
      %v1615 = vrot.slane %v1614, 1
      %v1616 = vadd.f32 %v1614, %v1615
      %v1617 = vmul.f32 %v1502, %v1502
      %v1618 = vmul.f32 %v1505, %v1505
      %v1619 = vmul.f32 %v1510, %v1510
      %v1620 = vmul.f32 %v1513, %v1513
      %v1621 = vmul.f32 %v1518, %v1518
      %v1622 = vmul.f32 %v1521, %v1521
      %v1623 = vmul.f32 %v1526, %v1526
      %v1624 = vmul.f32 %v1529, %v1529
      %v1625 = vmul.f32 %v1534, %v1534
      %v1626 = vmul.f32 %v1537, %v1537
      %v1627 = vmul.f32 %v1542, %v1542
      %v1628 = vmul.f32 %v1545, %v1545
      %v1629 = vmul.f32 %v1550, %v1550
      %v1630 = vmul.f32 %v1553, %v1553
      %v1631 = vmul.f32 %v1558, %v1558
      %v1632 = vmul.f32 %v1561, %v1561
      %v1633 = vadd.f32 %v1617, %v1618
      %v1634 = vadd.f32 %v1633, %v1619
      %v1635 = vadd.f32 %v1634, %v1620
      %v1636 = vadd.f32 %v1635, %v1621
      %v1637 = vadd.f32 %v1636, %v1622
      %v1638 = vadd.f32 %v1637, %v1623
      %v1639 = vadd.f32 %v1638, %v1624
      %v1640 = vadd.f32 %v1639, %v1625
      %v1641 = vadd.f32 %v1640, %v1626
      %v1642 = vadd.f32 %v1641, %v1627
      %v1643 = vadd.f32 %v1642, %v1628
      %v1644 = vadd.f32 %v1643, %v1629
      %v1645 = vadd.f32 %v1644, %v1630
      %v1646 = vadd.f32 %v1645, %v1631
      %v1647 = vadd.f32 %v1646, %v1632
      %v1648 = vrot.slane %v1647, 4
      %v1649 = vadd.f32 %v1647, %v1648
      %v1650 = vrot.slane %v1649, 2
      %v1651 = vadd.f32 %v1649, %v1650
      %v1652 = vrot.slane %v1651, 1
      %v1653 = vadd.f32 %v1651, %v1652
      %v1654 = vsel %vm824, %v1616, %v1653
      %1655 = vst [vmem:[%s662] sm:$0x3] %v1654
      %s1656 = smul.u32 16, %s26
      %p1657 = scmp.lt.s32.totalorder %s25, 1
      %s1658 = scalar_select %p1657, %s25, 1
      %p1659 = scmp.lt.s32.totalorder %s1656, 15
      %s1660 = scalar_select %p1659, %s1656, 15
      %s1661 = smul.addr %s1658, 16
      %s1662 = sadd.s32 %s1660, %s1661
      %s1663 = smul.addr %s1662, 4
      %s1664 = scalar_lea.vmem %s8, %s1663
      %p1665 = scmp.lt.s32.totalorder %s25, 1
      %s1666 = scalar_select %p1665, %s25, 1
      %p1667 = scmp.lt.s32.totalorder %s26, 0
      %s1668 = scalar_select %p1667, %s26, 0
      %s1669 = sadd.s32 %s1668, %s1666
      %s1670 = smul.addr %s1669, 2
      %s1671 = scalar_lea.vmem %s9, %s1670
      // Predicated region
      $region53: #{up_forward.7} parent=51 // pred_check
        %p1672 = pneg %p295
      $region54: #{up_forward.7} parent=51 // pred_check_branch
        %1674 = sbr.rel (%p1672) target = $region56
      $region55: #{up_forward.7} parent=51 // pred_region
        %s1675 = smul.u32 16, %s26
      $region56: #{up_forward.7} parent=51 // pred_fallthru
        _
      // Predicated region
      $region57: #{up_forward.7} parent=51 // pred_check
        %p1676 = pneg %p323
      $region58: #{up_forward.7} parent=51 // pred_check_branch
        %1678 = sbr.rel (%p1676) target = $region60
      $region59: #{up_forward.7} parent=51 // pred_region
        _
      $region60: #{up_forward.7} parent=51 // pred_fallthru
        _
    $region52: #{up_forward.7} parent=5 // pred_fallthru
      _
    %p1679 = scmp.le.s32.totalorder 2, %s16
    // Predicated region
    $region61: #{up_forward.7} parent=5 // pred_check
      %p1680 = pneg %p1679
    $region62: #{up_forward.7} parent=5 // pred_check_branch
      %1682 = sbr.rel (%p1680) target = $region64
    $region63: #{up_forward.7} parent=5 // pred_region
      %s1683 = ssub.s32 %s16, 2
      // Predicated region
      $region65: #{up_forward.7} parent=63 // pred_check
        %p1684 = pneg %p301
      $region66: #{up_forward.7} parent=63 // pred_check_branch
        %1686 = sbr.rel (%p1684) target = $region68
      $region67: #{up_forward.7} parent=63 // pred_region
        %s1687 = smul.u32 16, %s28
        %p1688 = scmp.lt.s32.totalorder %s27, 1
        %s1689 = scalar_select %p1688, %s27, 1
        %p1690 = scmp.lt.s32.totalorder %s1687, 15
        %s1691 = scalar_select %p1690, %s1687, 15
        %s1692 = smul.addr %s1689, 16
        %s1693 = sadd.s32 %s1691, %s1692
        %s1694 = smul.addr %s1693, 4
        %s1695 = scalar_lea.vmem %s8, %s1694
      $region68: #{up_forward.7} parent=63 // pred_fallthru
        _
      // Predicated region
      $region69: #{up_forward.7} parent=63 // pred_check
        %p1696 = pneg %p329
      $region70: #{up_forward.7} parent=63 // pred_check_branch
        %1698 = sbr.rel (%p1696) target = $region72
      $region71: #{up_forward.7} parent=63 // pred_region
        %p1699 = scmp.lt.s32.totalorder %s27, 1
        %s1700 = scalar_select %p1699, %s27, 1
        %p1701 = scmp.lt.s32.totalorder %s28, 0
        %s1702 = scalar_select %p1701, %s28, 0
        %s1703 = sadd.s32 %s1702, %s1700
        %s1704 = smul.addr %s1703, 2
        %s1705 = scalar_lea.vmem %s9, %s1704
      $region72: #{up_forward.7} parent=63 // pred_fallthru
        _
    $region64: #{up_forward.7} parent=5 // pred_fallthru
      _
  $region6: #{up_forward.7} parent=0 // loop_footer
    %s20 = sadd.s32 1, %s16
  $region7: #{up_forward.7} parent=0 // loop_footer_branch
    %15 = sbr.rel target = $region3
  $region8: #{up_forward.7} parent=0 // loop_exit
    _

// kernel: up_forward.9
$region0: #{up_forward.9}
  #allocation0 [shape = 'u32[]', space=smem, size = 0x4, offset = 0x4, fixed_abs, tag = 'smem constant byte address 0x4 - core index']
  #allocation1 [shape = 'u32[144,128]{1,0:T(1,128)}', space=vmem, size = 0x12000, scoped, tag = 'internal scratch']
  %s0 = inlined_call_operand.vmem [shape: bf16[2,16,8,128], index: 0, kind: input, shape index: {}]
  %s1 = inlined_call_operand.vmem [shape: f32[1,128], index: 1, kind: input, shape index: {}]
  %s2 = inlined_call_operand.vmem [shape: f32[1,128], index: 2, kind: input, shape index: {}]
  %s3 = inlined_call_operand.vmem [shape: f32[2,16,8,128], index: 3, kind: output, shape index: {}]
  %s4 = sld [smem:[#allocation0]]
  $region45: #{up_forward.9} parent=0
    _
  %s6 = ssub.s32 1, %s4
  %s7 = scalar_select 0, %s6, %s4
  loop: start=0, step=1, limit=4
  $region2: #{up_forward.9} parent=0 // loop_pre_header
    _
  $region3: #{up_forward.9} parent=0 // loop_header
    %s9 = sphi 0, %s13
    %p10 = scmp.ge.s32.totalorder %s9, 4
    %s16 = sphi 0, %s28
    %s17 = sphi 0, %s24
    %s18 = sphi 0, %s16
    %s19 = sphi 0, %s17
    %s20 = sphi 0, %s18
    %s21 = sphi 0, %s19
    %s33 = sphi 0, %s35
    %s36 = sphi 0, %s33
    %s37 = sphi 0, %s36
    %s53 = sphi 0, %s37
    %s57 = sphi 0, %s57
    %s59 = sphi 0, %s57
    %s60 = sphi 0, %s59
    %s74 = sphi 0, %s60
    %s78 = sphi 0, %s78
    %s80 = sphi 0, %s78
    %s81 = sphi 0, %s80
    %s95 = sphi 0, %s81
    %s103 = sphi 0, %s105
    %s106 = sphi 0, %s103
    %s107 = sphi 0, %s106
    %s123 = sphi 0, %s107
  $region4: #{up_forward.9} parent=0 // loop_header_branch
    %12 = sbr.rel (%p10) target = $region8
  $region5: #{up_forward.9} parent=0 // loop_body
    %s14 = ssub.s32 %s9, 1
    %s15 = ssub.s32 %s9, 2
    %s22 = sadd.s32 1, %s17
    %p23 = scmp.ge.s32.totalorder %s22, 1
    %s24 = scalar_select %p23, 0, %s22
    %s25 = sadd.s32 1, %s16
    %s26 = scalar_select %p23, %s25, %s16
    %p27 = scmp.ge.s32.totalorder %s26, 2
    %s28 = scalar_select %p27, 0, %s26
    %s29 = ssub.s32 %s16, %s28
    %s30 = ssub.s32 %s17, %s24
    %s31 = sor.u32 %s29, %s30
    %p32 = scmp.eq.s32.totalorder %s31, 0
    %s34 = sadd.s32 %s33, 1
    %s35 = scalar_select %p32, %s33, %s34
    %p38 = pneg %p32
    %p39 = scmp.eq.s32.totalorder %s9, 1
    %p40 = por %p38, %p39
    %p41 = scmp.ne.s32.totalorder %s33, %s36
    %p42 = scmp.eq.s32.totalorder %s9, 0
    %p43 = por %p41, %p42
    %p44 = scmp.ne.s32.totalorder %s33, %s36
    %p45 = scmp.eq.s32.totalorder %s14, 1
    %p46 = por %p44, %p45
    %p47 = scmp.ne.s32.totalorder %s36, %s37
    %p48 = scmp.eq.s32.totalorder %s14, 0
    %p49 = por %p47, %p48
    %p50 = scmp.ne.s32.totalorder %s36, %s37
    %p51 = scmp.eq.s32.totalorder %s15, 1
    %p52 = por %p50, %p51
    %p54 = scmp.ne.s32.totalorder %s37, %s53
    %p55 = scmp.eq.s32.totalorder %s15, 0
    %p56 = por %p54, %p55
    %s58 = sadd.s32 %s57, 1
    %p61 = scmp.eq.s32.totalorder %s9, 1
    %p62 = scmp.ne.s32.totalorder %s57, %s59
    %p63 = scmp.eq.s32.totalorder %s9, 0
    %p64 = por %p62, %p63
    %p65 = scmp.ne.s32.totalorder %s57, %s59
    %p66 = scmp.eq.s32.totalorder %s14, 1
    %p67 = por %p65, %p66
    %p68 = scmp.ne.s32.totalorder %s59, %s60
    %p69 = scmp.eq.s32.totalorder %s14, 0
    %p70 = por %p68, %p69
    %p71 = scmp.ne.s32.totalorder %s59, %s60
    %p72 = scmp.eq.s32.totalorder %s15, 1
    %p73 = por %p71, %p72
    %p75 = scmp.ne.s32.totalorder %s60, %s74
    %p76 = scmp.eq.s32.totalorder %s15, 0
    %p77 = por %p75, %p76
    %s79 = sadd.s32 %s78, 1
    %p82 = scmp.eq.s32.totalorder %s9, 1
    %p83 = scmp.ne.s32.totalorder %s78, %s80
    %p84 = scmp.eq.s32.totalorder %s9, 0
    %p85 = por %p83, %p84
    %p86 = scmp.ne.s32.totalorder %s78, %s80
    %p87 = scmp.eq.s32.totalorder %s14, 1
    %p88 = por %p86, %p87
    %p89 = scmp.ne.s32.totalorder %s80, %s81
    %p90 = scmp.eq.s32.totalorder %s14, 0
    %p91 = por %p89, %p90
    %p92 = scmp.ne.s32.totalorder %s80, %s81
    %p93 = scmp.eq.s32.totalorder %s15, 1
    %p94 = por %p92, %p93
    %p96 = scmp.ne.s32.totalorder %s81, %s95
    %p97 = scmp.eq.s32.totalorder %s15, 0
    %p98 = por %p96, %p97
    %s99 = ssub.s32 %s16, %s28
    %s100 = ssub.s32 %s17, %s24
    %s101 = sor.u32 %s99, %s100
    %p102 = scmp.eq.s32.totalorder %s101, 0
    %s104 = sadd.s32 %s103, 1
    %s105 = scalar_select %p102, %s103, %s104
    %p108 = pneg %p102
    %p109 = scmp.eq.s32.totalorder %s9, 1
    %p110 = por %p108, %p109
    %p111 = scmp.ne.s32.totalorder %s103, %s106
    %p112 = scmp.eq.s32.totalorder %s9, 0
    %p113 = por %p111, %p112
    %p114 = scmp.ne.s32.totalorder %s103, %s106
    %p115 = scmp.eq.s32.totalorder %s14, 1
    %p116 = por %p114, %p115
    %p117 = scmp.ne.s32.totalorder %s106, %s107
    %p118 = scmp.eq.s32.totalorder %s14, 0
    %p119 = por %p117, %p118
    %p120 = scmp.ne.s32.totalorder %s106, %s107
    %p121 = scmp.eq.s32.totalorder %s15, 1
    %p122 = por %p120, %p121
    %p124 = scmp.ne.s32.totalorder %s107, %s123
    %p125 = scmp.eq.s32.totalorder %s15, 0
    %p126 = por %p124, %p125
    %p127 = scmp.le.s32.totalorder 1, %s9
    %p128 = scmp.lt.s32.totalorder %s9, 3
    %p129 = pnand %p127, %p128
    %p130 = pneg %p129
    // Predicated region
    $region9: #{up_forward.9} parent=5 // pred_check
      _
    $region10: #{up_forward.9} parent=5 // pred_check_branch
      %132 = sbr.rel (%p129) target = $region12
    $region11: #{up_forward.9} parent=5 // pred_region
      %s133 = ssub.s32 %s9, 1
      // Predicated region
      $region13: #{up_forward.9} parent=11 // pred_check
        %p134 = pneg %p70
      $region14: #{up_forward.9} parent=11 // pred_check_branch
        %136 = sbr.rel (%p134) target = $region16
      $region15: #{up_forward.9} parent=11 // pred_region
        _
      $region16: #{up_forward.9} parent=11 // pred_fallthru
        _
      // Predicated region
      $region17: #{up_forward.9} parent=11 // pred_check
        %p137 = pneg %p91
      $region18: #{up_forward.9} parent=11 // pred_check_branch
        %139 = sbr.rel (%p137) target = $region20
      $region19: #{up_forward.9} parent=11 // pred_region
        _
      $region20: #{up_forward.9} parent=11 // pred_fallthru
        _
    $region12: #{up_forward.9} parent=5 // pred_fallthru
      _
    %p140 = scmp.lt.s32.totalorder %s9, 2
    // Predicated region
    $region21: #{up_forward.9} parent=5 // pred_check
      %p141 = pneg %p140
    $region22: #{up_forward.9} parent=5 // pred_check_branch
      %143 = sbr.rel (%p141) target = $region24
    $region23: #{up_forward.9} parent=5 // pred_region
      // Predicated region
      $region25: #{up_forward.9} parent=23 // pred_check
        %p144 = pneg %p43
      $region26: #{up_forward.9} parent=23 // pred_check_branch
        %146 = sbr.rel (%p144) target = $region28
      $region27: #{up_forward.9} parent=23 // pred_region
        %s147 = smul.u32 16, %s17
        %p148 = scmp.lt.s32.totalorder %s16, 1
        %s149 = scalar_select %p148, %s16, 1
        %p150 = scmp.lt.s32.totalorder %s147, 15
        %s151 = scalar_select %p150, %s147, 15
        %s152 = smul.addr %s149, 16
        %s153 = sadd.s32 %s151, %s152
        %s154 = smul.addr %s153, 4
        %s155 = scalar_lea.vmem %s0, %s154
        %s156 = smul.u32 16, %s17
      $region28: #{up_forward.9} parent=23 // pred_fallthru
        _
    $region24: #{up_forward.9} parent=5 // pred_fallthru
      _
    %p157 = scmp.le.s32.totalorder 1, %s9
    %p158 = scmp.lt.s32.totalorder %s9, 3
    %p159 = pnand %p157, %p158
    %p160 = pneg %p159
    // Predicated region
    $region29: #{up_forward.9} parent=5 // pred_check
      _
    $region30: #{up_forward.9} parent=5 // pred_check_branch
      %162 = sbr.rel (%p159) target = $region32
    $region31: #{up_forward.9} parent=5 // pred_region
      %s163 = ssub.s32 %s9, 1
      %s164 = smul.u32 16, %s19
      %p165 = scmp.lt.s32.totalorder %s18, 1
      %s166 = scalar_select %p165, %s18, 1
      %p167 = scmp.lt.s32.totalorder %s164, 15
      %s168 = scalar_select %p167, %s164, 15
      %s169 = smul.addr %s166, 16
      %s170 = sadd.s32 %s168, %s169
      %s171 = smul.addr %s170, 4
      %s172 = scalar_lea.vmem %s0, %s171
      %p173 = pneg %p49
      %p174 = pneg %p46
      %p175 = pneg %p70
      %p176 = pneg %p67
      %p177 = pneg %p91
      %p178 = pneg %p88
      %p179 = pneg %p119
      %p180 = pneg %p116
      %s181 = smul.u32 16, %s19
      %p182 = scmp.lt.s32.totalorder %s18, 1
      %s183 = scalar_select %p182, %s18, 1
      %p184 = scmp.lt.s32.totalorder %s181, 15
      %s185 = scalar_select %p184, %s181, 15
      %s186 = smul.addr %s183, 16
      %s187 = sadd.s32 %s185, %s186
      %s188 = smul.addr %s187, 8
      %s189 = scalar_lea.vmem %s3, %s188
      %s190 = smul.u32 16, %s19
      %p191 = scmp.lt.s32.totalorder %s18, 1
      %s192 = scalar_select %p191, %s18, 1
      %p193 = scmp.lt.s32.totalorder %s190, 15
      %s194 = scalar_select %p193, %s190, 15
      %s195 = smul.addr %s192, 16
      %s196 = sadd.s32 %s194, %s195
      %s197 = smul.addr %s196, 4
      %s198 = scalar_lea.vmem %s0, %s197
      %s199 = smul.u32 16, %s19
      %s200 = smul.u32 16, %s19
      %p201 = scmp.lt.s32.totalorder %s18, 1
      %s202 = scalar_select %p201, %s18, 1
      %p203 = scmp.lt.s32.totalorder %s200, 15
      %s204 = scalar_select %p203, %s200, 15
      %s205 = smul.addr %s202, 16
      %s206 = sadd.s32 %s204, %s205
      %s207 = smul.addr %s206, 8
      %s208 = scalar_lea.vmem %s3, %s207
      %s209 = smul.u32 16, %s19
      %v210 = vld [vmem:[%s198] sm:$0xf]
      %v211 = vld [vmem:[%s198 + $0x4] sm:$0xf]
      %v212 = vld [vmem:[%s198 + $0x8] sm:$0xf]
      %v213 = vld [vmem:[%s198 + $0xc] sm:$0xf]
      %v214 = vld [vmem:[%s198 + $0x10] sm:$0xf]
      %v215 = vld [vmem:[%s198 + $0x14] sm:$0xf]
      %v216 = vld [vmem:[%s198 + $0x18] sm:$0xf]
      %v217 = vld [vmem:[%s198 + $0x1c] sm:$0xf]
      %v218 = vld [vmem:[%s198 + $0x20] sm:$0xf]
      %v219 = vld [vmem:[%s198 + $0x24] sm:$0xf]
      %v220 = vld [vmem:[%s198 + $0x28] sm:$0xf]
      %v221 = vld [vmem:[%s198 + $0x2c] sm:$0xf]
      %v222 = vld [vmem:[%s198 + $0x30] sm:$0xf]
      %v223 = vld [vmem:[%s198 + $0x34] sm:$0xf]
      %v224 = vld [vmem:[%s198 + $0x38] sm:$0xf]
      %v225 = vld [vmem:[%s198 + $0x3c] sm:$0xf]
      %v226 = vunpack.c.l.bf16 %v210
      %v227 = vunpack.c.l.bf16 %v211
      %v228 = vunpack.c.l.bf16 %v212
      %v229 = vunpack.c.l.bf16 %v213
      %v230 = vunpack.c.l.bf16 %v214
      %v231 = vunpack.c.l.bf16 %v215
      %v232 = vunpack.c.l.bf16 %v216
      %v233 = vunpack.c.l.bf16 %v217
      %v234 = vunpack.c.l.bf16 %v218
      %v235 = vunpack.c.l.bf16 %v219
      %v236 = vunpack.c.l.bf16 %v220
      %v237 = vunpack.c.l.bf16 %v221
      %v238 = vunpack.c.l.bf16 %v222
      %v239 = vunpack.c.l.bf16 %v223
      %v240 = vunpack.c.l.bf16 %v224
      %v241 = vunpack.c.l.bf16 %v225
      %v242 = vld [vmem:[%s1] sm:$0x1]
      %v244 = vlaneseq
      %v245 = vshrl.u32 %v244, 7
      %v246 = vsub.s32 0, %v245
      %v247 = vrot.slane %v242, %v246
      %v249 = vmul.f32 %v226, %v247
      %v250 = vmul.f32 %v227, %v247
      %v251 = vmul.f32 %v228, %v247
      %v252 = vmul.f32 %v229, %v247
      %v253 = vmul.f32 %v230, %v247
      %v254 = vmul.f32 %v231, %v247
      %v255 = vmul.f32 %v232, %v247
      %v256 = vmul.f32 %v233, %v247
      %v257 = vmul.f32 %v234, %v247
      %v258 = vmul.f32 %v235, %v247
      %v259 = vmul.f32 %v236, %v247
      %v260 = vmul.f32 %v237, %v247
      %v261 = vmul.f32 %v238, %v247
      %v262 = vmul.f32 %v239, %v247
      %v263 = vmul.f32 %v240, %v247
      %v264 = vmul.f32 %v241, %v247
      %v265 = vld [vmem:[%s2] sm:$0x1]
      %v267 = vlaneseq
      %v268 = vshrl.u32 %v267, 7
      %v269 = vsub.s32 0, %v268
      %v270 = vrot.slane %v265, %v269
      %v272 = vadd.f32 %v249, %v270
      %v273 = vadd.f32 %v250, %v270
      %v274 = vadd.f32 %v251, %v270
      %v275 = vadd.f32 %v252, %v270
      %v276 = vadd.f32 %v253, %v270
      %v277 = vadd.f32 %v254, %v270
      %v278 = vadd.f32 %v255, %v270
      %v279 = vadd.f32 %v256, %v270
      %v280 = vadd.f32 %v257, %v270
      %v281 = vadd.f32 %v258, %v270
      %v282 = vadd.f32 %v259, %v270
      %v283 = vadd.f32 %v260, %v270
      %v284 = vadd.f32 %v261, %v270
      %v285 = vadd.f32 %v262, %v270
      %v286 = vadd.f32 %v263, %v270
      %v287 = vadd.f32 %v264, %v270
      %v288 = vmax.f32 %v272, 0.0
      %v289 = vmax.f32 %v273, 0.0
      %v290 = vmax.f32 %v274, 0.0
      %v291 = vmax.f32 %v275, 0.0
      %v292 = vmax.f32 %v276, 0.0
      %v293 = vmax.f32 %v277, 0.0
      %v294 = vmax.f32 %v278, 0.0
      %v295 = vmax.f32 %v279, 0.0
      %v296 = vmax.f32 %v280, 0.0
      %v297 = vmax.f32 %v281, 0.0
      %v298 = vmax.f32 %v282, 0.0
      %v299 = vmax.f32 %v283, 0.0
      %v300 = vmax.f32 %v284, 0.0
      %v301 = vmax.f32 %v285, 0.0
      %v302 = vmax.f32 %v286, 0.0
      %v303 = vmax.f32 %v287, 0.0
      %304 = vst [vmem:[%s208] sm:$0xff] %v288
      %305 = vst [vmem:[%s208 + $0x8] sm:$0xff] %v289
      %306 = vst [vmem:[%s208 + $0x10] sm:$0xff] %v290
      %307 = vst [vmem:[%s208 + $0x18] sm:$0xff] %v291
      %308 = vst [vmem:[%s208 + $0x20] sm:$0xff] %v292
      %309 = vst [vmem:[%s208 + $0x28] sm:$0xff] %v293
      %310 = vst [vmem:[%s208 + $0x30] sm:$0xff] %v294
      %311 = vst [vmem:[%s208 + $0x38] sm:$0xff] %v295
      %312 = vst [vmem:[%s208 + $0x40] sm:$0xff] %v296
      %313 = vst [vmem:[%s208 + $0x48] sm:$0xff] %v297
      %314 = vst [vmem:[%s208 + $0x50] sm:$0xff] %v298
      %315 = vst [vmem:[%s208 + $0x58] sm:$0xff] %v299
      %316 = vst [vmem:[%s208 + $0x60] sm:$0xff] %v300
      %317 = vst [vmem:[%s208 + $0x68] sm:$0xff] %v301
      %318 = vst [vmem:[%s208 + $0x70] sm:$0xff] %v302
      %319 = vst [vmem:[%s208 + $0x78] sm:$0xff] %v303
      %s320 = smul.u32 16, %s19
      %p321 = scmp.lt.s32.totalorder %s18, 1
      %s322 = scalar_select %p321, %s18, 1
      %p323 = scmp.lt.s32.totalorder %s320, 15
      %s324 = scalar_select %p323, %s320, 15
      %s325 = smul.addr %s322, 16
      %s326 = sadd.s32 %s324, %s325
      %s327 = smul.addr %s326, 8
      %s328 = scalar_lea.vmem %s3, %s327
      // Predicated region
      $region33: #{up_forward.9} parent=31 // pred_check
        %p329 = pneg %p116
      $region34: #{up_forward.9} parent=31 // pred_check_branch
        %331 = sbr.rel (%p329) target = $region36
      $region35: #{up_forward.9} parent=31 // pred_region
        %s332 = smul.u32 16, %s19
      $region36: #{up_forward.9} parent=31 // pred_fallthru
        _
    $region32: #{up_forward.9} parent=5 // pred_fallthru
      _
    %p333 = scmp.le.s32.totalorder 2, %s9
    // Predicated region
    $region37: #{up_forward.9} parent=5 // pred_check
      %p334 = pneg %p333
    $region38: #{up_forward.9} parent=5 // pred_check_branch
      %336 = sbr.rel (%p334) target = $region40
    $region39: #{up_forward.9} parent=5 // pred_region
      %s337 = ssub.s32 %s9, 2
      // Predicated region
      $region41: #{up_forward.9} parent=39 // pred_check
        %p338 = pneg %p122
      $region42: #{up_forward.9} parent=39 // pred_check_branch
        %340 = sbr.rel (%p338) target = $region44
      $region43: #{up_forward.9} parent=39 // pred_region
        %s341 = smul.u32 16, %s21
        %p342 = scmp.lt.s32.totalorder %s20, 1
        %s343 = scalar_select %p342, %s20, 1
        %p344 = scmp.lt.s32.totalorder %s341, 15
        %s345 = scalar_select %p344, %s341, 15
        %s346 = smul.addr %s343, 16
        %s347 = sadd.s32 %s345, %s346
        %s348 = smul.addr %s347, 8
        %s349 = scalar_lea.vmem %s3, %s348
      $region44: #{up_forward.9} parent=39 // pred_fallthru
        _
    $region40: #{up_forward.9} parent=5 // pred_fallthru
      _
  $region6: #{up_forward.9} parent=0 // loop_footer
    %s13 = sadd.s32 1, %s9
  $region7: #{up_forward.9} parent=0 // loop_footer_branch
    %8 = sbr.rel target = $region3
  $region8: #{up_forward.9} parent=0 // loop_exit
    _

// kernel: up_forward.8
$region0: #{up_forward.8}
  #allocation0 [shape = 'u32[]', space=smem, size = 0x4, offset = 0x4, fixed_abs, tag = 'smem constant byte address 0x4 - core index']
  #allocation1 [shape = 'u32[144,128]{1,0:T(1,128)}', space=vmem, size = 0x12000, scoped, tag = 'internal scratch']
  %s0 = inlined_call_operand.vmem [shape: bf16[2,16,8,128], index: 0, kind: input, shape index: {}, may-alias: {0,1,2}]
  %s1 = inlined_call_operand.vmem [shape: bf16[2,16,8,128], index: 1, kind: input, shape index: {}, may-alias: {0,1,2}]
  %s2 = inlined_call_operand.vmem [shape: bf16[2,16,8,128], index: 2, kind: input, shape index: {}, may-alias: {0,1,2}]
  %s3 = inlined_call_operand.vmem [shape: f32[1,128], index: 3, kind: input, shape index: {}]
  %s4 = inlined_call_operand.vmem [shape: f32[1,128], index: 4, kind: input, shape index: {}]
  %s5 = inlined_call_operand.vmem [shape: f32[9,128], index: 5, kind: input, shape index: {}]
  %s6 = inlined_call_operand.vmem [shape: bf16[128,128], index: 6, kind: input, shape index: {}]
  %s7 = inlined_call_operand.vmem [shape: bf16[2,16,8,128], index: 7, kind: output, shape index: {0}]
  %s8 = inlined_call_operand.vmem [shape: f32[2,1,2,128], index: 8, kind: output, shape index: {1}]
  %9 = xla_tuple %s7, %s8
  %s10 = sld [smem:[#allocation0]]
  $region69: #{up_forward.8} parent=0
    _
  %s12 = ssub.s32 1, %s10
  %s13 = scalar_select 0, %s12, %s10
  loop: start=0, step=1, limit=4
  $region2: #{up_forward.8} parent=0 // loop_pre_header
    _
  $region3: #{up_forward.8} parent=0 // loop_header
    %s15 = sphi 0, %s19
    %p16 = scmp.ge.s32.totalorder %s15, 4
    %s22 = sphi 0, %s34
    %s23 = sphi 0, %s30
    %s24 = sphi 0, %s22
    %s25 = sphi 0, %s23
    %s26 = sphi 0, %s24
    %s27 = sphi 0, %s25
    %s47 = sphi 0, %s49
    %s50 = sphi 0, %s47
    %s51 = sphi 0, %s50
    %s67 = sphi 0, %s51
    %s75 = sphi 0, %s77
    %s78 = sphi 0, %s75
    %s79 = sphi 0, %s78
    %s95 = sphi 0, %s79
    %s111 = sphi 0, %s113
    %s114 = sphi 0, %s111
    %s115 = sphi 0, %s114
    %s131 = sphi 0, %s115
    %s135 = sphi 0, %s135
    %s137 = sphi 0, %s135
    %s138 = sphi 0, %s137
    %s152 = sphi 0, %s138
    %s156 = sphi 0, %s156
    %s158 = sphi 0, %s156
    %s159 = sphi 0, %s158
    %s173 = sphi 0, %s159
    %s177 = sphi 0, %s177
    %s179 = sphi 0, %s177
    %s180 = sphi 0, %s179
    %s194 = sphi 0, %s180
    %s198 = sphi 0, %s198
    %s200 = sphi 0, %s198
    %s201 = sphi 0, %s200
    %s215 = sphi 0, %s201
    %s223 = sphi 0, %s225
    %s226 = sphi 0, %s223
    %s227 = sphi 0, %s226
    %s243 = sphi 0, %s227
    %s251 = sphi 0, %s253
    %s254 = sphi 0, %s251
    %s255 = sphi 0, %s254
    %s271 = sphi 0, %s255
  $region4: #{up_forward.8} parent=0 // loop_header_branch
    %18 = sbr.rel (%p16) target = $region8
  $region5: #{up_forward.8} parent=0 // loop_body
    %s20 = ssub.s32 %s15, 1
    %s21 = ssub.s32 %s15, 2
    %s28 = sadd.s32 1, %s23
    %p29 = scmp.ge.s32.totalorder %s28, 1
    %s30 = scalar_select %p29, 0, %s28
    %s31 = sadd.s32 1, %s22
    %s32 = scalar_select %p29, %s31, %s22
    %p33 = scmp.ge.s32.totalorder %s32, 2
    %s34 = scalar_select %p33, 0, %s32
    %s35 = smul.u32 %s23, 16
    %s36 = ssub.s32 %s35, 1
    %p37 = scmp.gt.s32.totalorder %s36, 0
    %s38 = scalar_select %p37, %s36, 0
    %s39 = smul.u32 %s30, 16
    %s40 = ssub.s32 %s39, 1
    %p41 = scmp.gt.s32.totalorder %s40, 0
    %s42 = scalar_select %p41, %s40, 0
    %s43 = ssub.s32 %s22, %s34
    %s44 = ssub.s32 %s38, %s42
    %s45 = sor.u32 %s43, %s44
    %p46 = scmp.eq.s32.totalorder %s45, 0
    %s48 = sadd.s32 %s47, 1
    %s49 = scalar_select %p46, %s47, %s48
    %p52 = pneg %p46
    %p53 = scmp.eq.s32.totalorder %s15, 1
    %p54 = por %p52, %p53
    %p55 = scmp.ne.s32.totalorder %s47, %s50
    %p56 = scmp.eq.s32.totalorder %s15, 0
    %p57 = por %p55, %p56
    %p58 = scmp.ne.s32.totalorder %s47, %s50
    %p59 = scmp.eq.s32.totalorder %s20, 1
    %p60 = por %p58, %p59
    %p61 = scmp.ne.s32.totalorder %s50, %s51
    %p62 = scmp.eq.s32.totalorder %s20, 0
    %p63 = por %p61, %p62
    %p64 = scmp.ne.s32.totalorder %s50, %s51
    %p65 = scmp.eq.s32.totalorder %s21, 1
    %p66 = por %p64, %p65
    %p68 = scmp.ne.s32.totalorder %s51, %s67
    %p69 = scmp.eq.s32.totalorder %s21, 0
    %p70 = por %p68, %p69
    %s71 = ssub.s32 %s22, %s34
    %s72 = ssub.s32 %s23, %s30
    %s73 = sor.u32 %s71, %s72
    %p74 = scmp.eq.s32.totalorder %s73, 0
    %s76 = sadd.s32 %s75, 1
    %s77 = scalar_select %p74, %s75, %s76
    %p80 = pneg %p74
    %p81 = scmp.eq.s32.totalorder %s15, 1
    %p82 = por %p80, %p81
    %p83 = scmp.ne.s32.totalorder %s75, %s78
    %p84 = scmp.eq.s32.totalorder %s15, 0
    %p85 = por %p83, %p84
    %p86 = scmp.ne.s32.totalorder %s75, %s78
    %p87 = scmp.eq.s32.totalorder %s20, 1
    %p88 = por %p86, %p87
    %p89 = scmp.ne.s32.totalorder %s78, %s79
    %p90 = scmp.eq.s32.totalorder %s20, 0
    %p91 = por %p89, %p90
    %p92 = scmp.ne.s32.totalorder %s78, %s79
    %p93 = scmp.eq.s32.totalorder %s21, 1
    %p94 = por %p92, %p93
    %p96 = scmp.ne.s32.totalorder %s79, %s95
    %p97 = scmp.eq.s32.totalorder %s21, 0
    %p98 = por %p96, %p97
    %s99 = smul.u32 %s23, 16
    %s100 = sadd.s32 %s99, 16
    %p101 = scmp.lt.s32.totalorder %s100, 15
    %s102 = scalar_select %p101, %s100, 15
    %s103 = smul.u32 %s30, 16
    %s104 = sadd.s32 %s103, 16
    %p105 = scmp.lt.s32.totalorder %s104, 15
    %s106 = scalar_select %p105, %s104, 15
    %s107 = ssub.s32 %s22, %s34
    %s108 = ssub.s32 %s102, %s106
    %s109 = sor.u32 %s107, %s108
    %p110 = scmp.eq.s32.totalorder %s109, 0
    %s112 = sadd.s32 %s111, 1
    %s113 = scalar_select %p110, %s111, %s112
    %p116 = pneg %p110
    %p117 = scmp.eq.s32.totalorder %s15, 1
    %p118 = por %p116, %p117
    %p119 = scmp.ne.s32.totalorder %s111, %s114
    %p120 = scmp.eq.s32.totalorder %s15, 0
    %p121 = por %p119, %p120
    %p122 = scmp.ne.s32.totalorder %s111, %s114
    %p123 = scmp.eq.s32.totalorder %s20, 1
    %p124 = por %p122, %p123
    %p125 = scmp.ne.s32.totalorder %s114, %s115
    %p126 = scmp.eq.s32.totalorder %s20, 0
    %p127 = por %p125, %p126
    %p128 = scmp.ne.s32.totalorder %s114, %s115
    %p129 = scmp.eq.s32.totalorder %s21, 1
    %p130 = por %p128, %p129
    %p132 = scmp.ne.s32.totalorder %s115, %s131
    %p133 = scmp.eq.s32.totalorder %s21, 0
    %p134 = por %p132, %p133
    %s136 = sadd.s32 %s135, 1
    %p139 = scmp.eq.s32.totalorder %s15, 1
    %p140 = scmp.ne.s32.totalorder %s135, %s137
    %p141 = scmp.eq.s32.totalorder %s15, 0
    %p142 = por %p140, %p141
    %p143 = scmp.ne.s32.totalorder %s135, %s137
    %p144 = scmp.eq.s32.totalorder %s20, 1
    %p145 = por %p143, %p144
    %p146 = scmp.ne.s32.totalorder %s137, %s138
    %p147 = scmp.eq.s32.totalorder %s20, 0
    %p148 = por %p146, %p147
    %p149 = scmp.ne.s32.totalorder %s137, %s138
    %p150 = scmp.eq.s32.totalorder %s21, 1
    %p151 = por %p149, %p150
    %p153 = scmp.ne.s32.totalorder %s138, %s152
    %p154 = scmp.eq.s32.totalorder %s21, 0
    %p155 = por %p153, %p154
    %s157 = sadd.s32 %s156, 1
    %p160 = scmp.eq.s32.totalorder %s15, 1
    %p161 = scmp.ne.s32.totalorder %s156, %s158
    %p162 = scmp.eq.s32.totalorder %s15, 0
    %p163 = por %p161, %p162
    %p164 = scmp.ne.s32.totalorder %s156, %s158
    %p165 = scmp.eq.s32.totalorder %s20, 1
    %p166 = por %p164, %p165
    %p167 = scmp.ne.s32.totalorder %s158, %s159
    %p168 = scmp.eq.s32.totalorder %s20, 0
    %p169 = por %p167, %p168
    %p170 = scmp.ne.s32.totalorder %s158, %s159
    %p171 = scmp.eq.s32.totalorder %s21, 1
    %p172 = por %p170, %p171
    %p174 = scmp.ne.s32.totalorder %s159, %s173
    %p175 = scmp.eq.s32.totalorder %s21, 0
    %p176 = por %p174, %p175
    %s178 = sadd.s32 %s177, 1
    %p181 = scmp.eq.s32.totalorder %s15, 1
    %p182 = scmp.ne.s32.totalorder %s177, %s179
    %p183 = scmp.eq.s32.totalorder %s15, 0
    %p184 = por %p182, %p183
    %p185 = scmp.ne.s32.totalorder %s177, %s179
    %p186 = scmp.eq.s32.totalorder %s20, 1
    %p187 = por %p185, %p186
    %p188 = scmp.ne.s32.totalorder %s179, %s180
    %p189 = scmp.eq.s32.totalorder %s20, 0
    %p190 = por %p188, %p189
    %p191 = scmp.ne.s32.totalorder %s179, %s180
    %p192 = scmp.eq.s32.totalorder %s21, 1
    %p193 = por %p191, %p192
    %p195 = scmp.ne.s32.totalorder %s180, %s194
    %p196 = scmp.eq.s32.totalorder %s21, 0
    %p197 = por %p195, %p196
    %s199 = sadd.s32 %s198, 1
    %p202 = scmp.eq.s32.totalorder %s15, 1
    %p203 = scmp.ne.s32.totalorder %s198, %s200
    %p204 = scmp.eq.s32.totalorder %s15, 0
    %p205 = por %p203, %p204
    %p206 = scmp.ne.s32.totalorder %s198, %s200
    %p207 = scmp.eq.s32.totalorder %s20, 1
    %p208 = por %p206, %p207
    %p209 = scmp.ne.s32.totalorder %s200, %s201
    %p210 = scmp.eq.s32.totalorder %s20, 0
    %p211 = por %p209, %p210
    %p212 = scmp.ne.s32.totalorder %s200, %s201
    %p213 = scmp.eq.s32.totalorder %s21, 1
    %p214 = por %p212, %p213
    %p216 = scmp.ne.s32.totalorder %s201, %s215
    %p217 = scmp.eq.s32.totalorder %s21, 0
    %p218 = por %p216, %p217
    %s219 = ssub.s32 %s22, %s34
    %s220 = ssub.s32 %s23, %s30
    %s221 = sor.u32 %s219, %s220
    %p222 = scmp.eq.s32.totalorder %s221, 0
    %s224 = sadd.s32 %s223, 1
    %s225 = scalar_select %p222, %s223, %s224
    %p228 = pneg %p222
    %p229 = scmp.eq.s32.totalorder %s15, 1
    %p230 = por %p228, %p229
    %p231 = scmp.ne.s32.totalorder %s223, %s226
    %p232 = scmp.eq.s32.totalorder %s15, 0
    %p233 = por %p231, %p232
    %p234 = scmp.ne.s32.totalorder %s223, %s226
    %p235 = scmp.eq.s32.totalorder %s20, 1
    %p236 = por %p234, %p235
    %p237 = scmp.ne.s32.totalorder %s226, %s227
    %p238 = scmp.eq.s32.totalorder %s20, 0
    %p239 = por %p237, %p238
    %p240 = scmp.ne.s32.totalorder %s226, %s227
    %p241 = scmp.eq.s32.totalorder %s21, 1
    %p242 = por %p240, %p241
    %p244 = scmp.ne.s32.totalorder %s227, %s243
    %p245 = scmp.eq.s32.totalorder %s21, 0
    %p246 = por %p244, %p245
    %s247 = ssub.s32 %s22, %s34
    %s248 = ssub.s32 %s23, %s30
    %s249 = sor.u32 %s247, %s248
    %p250 = scmp.eq.s32.totalorder %s249, 0
    %s252 = sadd.s32 %s251, 1
    %s253 = scalar_select %p250, %s251, %s252
    %p256 = pneg %p250
    %p257 = scmp.eq.s32.totalorder %s15, 1
    %p258 = por %p256, %p257
    %p259 = scmp.ne.s32.totalorder %s251, %s254
    %p260 = scmp.eq.s32.totalorder %s15, 0
    %p261 = por %p259, %p260
    %p262 = scmp.ne.s32.totalorder %s251, %s254
    %p263 = scmp.eq.s32.totalorder %s20, 1
    %p264 = por %p262, %p263
    %p265 = scmp.ne.s32.totalorder %s254, %s255
    %p266 = scmp.eq.s32.totalorder %s20, 0
    %p267 = por %p265, %p266
    %p268 = scmp.ne.s32.totalorder %s254, %s255
    %p269 = scmp.eq.s32.totalorder %s21, 1
    %p270 = por %p268, %p269
    %p272 = scmp.ne.s32.totalorder %s255, %s271
    %p273 = scmp.eq.s32.totalorder %s21, 0
    %p274 = por %p272, %p273
    %p275 = scmp.le.s32.totalorder 1, %s15
    %p276 = scmp.lt.s32.totalorder %s15, 3
    %p277 = pnand %p275, %p276
    %p278 = pneg %p277
    // Predicated region
    $region9: #{up_forward.8} parent=5 // pred_check
      _
    $region10: #{up_forward.8} parent=5 // pred_check_branch
      %280 = sbr.rel (%p277) target = $region12
    $region11: #{up_forward.8} parent=5 // pred_region
      %s281 = ssub.s32 %s15, 1
      // Predicated region
      $region13: #{up_forward.8} parent=11 // pred_check
        %p282 = pneg %p148
      $region14: #{up_forward.8} parent=11 // pred_check_branch
        %284 = sbr.rel (%p282) target = $region16
      $region15: #{up_forward.8} parent=11 // pred_region
        _
      $region16: #{up_forward.8} parent=11 // pred_fallthru
        _
      // Predicated region
      $region17: #{up_forward.8} parent=11 // pred_check
        %p285 = pneg %p169
      $region18: #{up_forward.8} parent=11 // pred_check_branch
        %287 = sbr.rel (%p285) target = $region20
      $region19: #{up_forward.8} parent=11 // pred_region
        _
      $region20: #{up_forward.8} parent=11 // pred_fallthru
        _
      // Predicated region
      $region21: #{up_forward.8} parent=11 // pred_check
        %p288 = pneg %p190
      $region22: #{up_forward.8} parent=11 // pred_check_branch
        %290 = sbr.rel (%p288) target = $region24
      $region23: #{up_forward.8} parent=11 // pred_region
        _
      $region24: #{up_forward.8} parent=11 // pred_fallthru
        _
      // Predicated region
      $region25: #{up_forward.8} parent=11 // pred_check
        %p291 = pneg %p211
      $region26: #{up_forward.8} parent=11 // pred_check_branch
        %293 = sbr.rel (%p291) target = $region28
      $region27: #{up_forward.8} parent=11 // pred_region
        _
      $region28: #{up_forward.8} parent=11 // pred_fallthru
        _
    $region12: #{up_forward.8} parent=5 // pred_fallthru
      _
    %p294 = scmp.lt.s32.totalorder %s15, 2
    // Predicated region
    $region29: #{up_forward.8} parent=5 // pred_check
      %p295 = pneg %p294
    $region30: #{up_forward.8} parent=5 // pred_check_branch
      %297 = sbr.rel (%p295) target = $region32
    $region31: #{up_forward.8} parent=5 // pred_region
      // Predicated region
      $region33: #{up_forward.8} parent=31 // pred_check
        %p298 = pneg %p57
      $region34: #{up_forward.8} parent=31 // pred_check_branch
        %300 = sbr.rel (%p298) target = $region36
      $region35: #{up_forward.8} parent=31 // pred_region
        %s301 = smul.u32 %s23, 16
        %s302 = ssub.s32 %s301, 1
        %p303 = scmp.gt.s32.totalorder %s302, 0
        %s304 = scalar_select %p303, %s302, 0
        %p305 = scmp.lt.s32.totalorder %s22, 1
        %s306 = scalar_select %p305, %s22, 1
        %p307 = scmp.lt.s32.totalorder %s304, 15
        %s308 = scalar_select %p307, %s304, 15
        %s309 = smul.addr %s306, 16
        %s310 = sadd.s32 %s308, %s309
        %s311 = smul.addr %s310, 4
        %s312 = scalar_lea.vmem %s0, %s311
        %s313 = smul.u32 %s23, 16
        %s314 = ssub.s32 %s313, 1
        %p315 = scmp.gt.s32.totalorder %s314, 0
        %s316 = scalar_select %p315, %s314, 0
      $region36: #{up_forward.8} parent=31 // pred_fallthru
        _
      // Predicated region
      $region37: #{up_forward.8} parent=31 // pred_check
        %p317 = pneg %p85
      $region38: #{up_forward.8} parent=31 // pred_check_branch
        %319 = sbr.rel (%p317) target = $region40
      $region39: #{up_forward.8} parent=31 // pred_region
        %s320 = smul.u32 16, %s23
        %p321 = scmp.lt.s32.totalorder %s22, 1
        %s322 = scalar_select %p321, %s22, 1
        %p323 = scmp.lt.s32.totalorder %s320, 15
        %s324 = scalar_select %p323, %s320, 15
        %s325 = smul.addr %s322, 16
        %s326 = sadd.s32 %s324, %s325
        %s327 = smul.addr %s326, 4
        %s328 = scalar_lea.vmem %s1, %s327
        %s329 = smul.u32 16, %s23
      $region40: #{up_forward.8} parent=31 // pred_fallthru
        _
      // Predicated region
      $region41: #{up_forward.8} parent=31 // pred_check
        %p330 = pneg %p121
      $region42: #{up_forward.8} parent=31 // pred_check_branch
        %332 = sbr.rel (%p330) target = $region44
      $region43: #{up_forward.8} parent=31 // pred_region
        %s333 = smul.u32 %s23, 16
        %s334 = sadd.s32 %s333, 16
        %p335 = scmp.lt.s32.totalorder %s334, 15
        %s336 = scalar_select %p335, %s334, 15
        %p337 = scmp.lt.s32.totalorder %s22, 1
        %s338 = scalar_select %p337, %s22, 1
        %p339 = scmp.lt.s32.totalorder %s336, 15
        %s340 = scalar_select %p339, %s336, 15
        %s341 = smul.addr %s338, 16
        %s342 = sadd.s32 %s340, %s341
        %s343 = smul.addr %s342, 4
        %s344 = scalar_lea.vmem %s2, %s343
        %s345 = smul.u32 %s23, 16
        %s346 = sadd.s32 %s345, 16
        %p347 = scmp.lt.s32.totalorder %s346, 15
        %s348 = scalar_select %p347, %s346, 15
      $region44: #{up_forward.8} parent=31 // pred_fallthru
        _
    $region32: #{up_forward.8} parent=5 // pred_fallthru
      _
    %p349 = scmp.le.s32.totalorder 1, %s15
    %p350 = scmp.lt.s32.totalorder %s15, 3
    %p351 = pnand %p349, %p350
    %p352 = pneg %p351
    // Predicated region
    $region45: #{up_forward.8} parent=5 // pred_check
      _
    $region46: #{up_forward.8} parent=5 // pred_check_branch
      %354 = sbr.rel (%p351) target = $region48
    $region47: #{up_forward.8} parent=5 // pred_region
      %s355 = ssub.s32 %s15, 1
      %s356 = smul.u32 %s25, 16
      %s357 = ssub.s32 %s356, 1
      %p358 = scmp.gt.s32.totalorder %s357, 0
      %s359 = scalar_select %p358, %s357, 0
      %p360 = scmp.lt.s32.totalorder %s24, 1
      %s361 = scalar_select %p360, %s24, 1
      %p362 = scmp.lt.s32.totalorder %s359, 15
      %s363 = scalar_select %p362, %s359, 15
      %s364 = smul.addr %s361, 16
      %s365 = sadd.s32 %s363, %s364
      %s366 = smul.addr %s365, 4
      %s367 = scalar_lea.vmem %s0, %s366
      %p368 = pneg %p63
      %p369 = pneg %p60
      %s370 = smul.u32 16, %s25
      %p371 = scmp.lt.s32.totalorder %s24, 1
      %s372 = scalar_select %p371, %s24, 1
      %p373 = scmp.lt.s32.totalorder %s370, 15
      %s374 = scalar_select %p373, %s370, 15
      %s375 = smul.addr %s372, 16
      %s376 = sadd.s32 %s374, %s375
      %s377 = smul.addr %s376, 4
      %s378 = scalar_lea.vmem %s1, %s377
      %p379 = pneg %p91
      %p380 = pneg %p88
      %s381 = smul.u32 %s25, 16
      %s382 = sadd.s32 %s381, 16
      %p383 = scmp.lt.s32.totalorder %s382, 15
      %s384 = scalar_select %p383, %s382, 15
      %p385 = scmp.lt.s32.totalorder %s24, 1
      %s386 = scalar_select %p385, %s24, 1
      %p387 = scmp.lt.s32.totalorder %s384, 15
      %s388 = scalar_select %p387, %s384, 15
      %s389 = smul.addr %s386, 16
      %s390 = sadd.s32 %s388, %s389
      %s391 = smul.addr %s390, 4
      %s392 = scalar_lea.vmem %s2, %s391
      %p393 = pneg %p127
      %p394 = pneg %p124
      %p395 = pneg %p148
      %p396 = pneg %p145
      %p397 = pneg %p169
      %p398 = pneg %p166
      %p399 = pneg %p190
      %p400 = pneg %p187
      %p401 = pneg %p211
      %p402 = pneg %p208
      %p403 = pneg %p239
      %p404 = pneg %p236
      %s405 = smul.u32 16, %s25
      %p406 = scmp.lt.s32.totalorder %s24, 1
      %s407 = scalar_select %p406, %s24, 1
      %p408 = scmp.lt.s32.totalorder %s405, 15
      %s409 = scalar_select %p408, %s405, 15
      %s410 = smul.addr %s407, 16
      %s411 = sadd.s32 %s409, %s410
      %s412 = smul.addr %s411, 4
      %s413 = scalar_lea.vmem %s7, %s412
      %p414 = pneg %p267
      %p415 = pneg %p264
      %p416 = scmp.lt.s32.totalorder %s24, 1
      %s417 = scalar_select %p416, %s24, 1
      %p418 = scmp.lt.s32.totalorder %s25, 0
      %s419 = scalar_select %p418, %s25, 0
      %s420 = sadd.s32 %s419, %s417
      %s421 = smul.addr %s420, 2
      %s422 = scalar_lea.vmem %s8, %s421
      %s423 = smul.u32 %s25, 16
      %s424 = ssub.s32 %s423, 1
      %p425 = scmp.gt.s32.totalorder %s424, 0
      %s426 = scalar_select %p425, %s424, 0
      %p427 = scmp.lt.s32.totalorder %s24, 1
      %s428 = scalar_select %p427, %s24, 1
      %p429 = scmp.lt.s32.totalorder %s426, 15
      %s430 = scalar_select %p429, %s426, 15
      %s431 = smul.addr %s428, 16
      %s432 = sadd.s32 %s430, %s431
      %s433 = smul.addr %s432, 4
      %s434 = scalar_lea.vmem %s0, %s433
      %s435 = smul.u32 %s25, 16
      %s436 = ssub.s32 %s435, 1
      %p437 = scmp.gt.s32.totalorder %s436, 0
      %s438 = scalar_select %p437, %s436, 0
      %s439 = smul.u32 16, %s25
      %p440 = scmp.lt.s32.totalorder %s24, 1
      %s441 = scalar_select %p440, %s24, 1
      %p442 = scmp.lt.s32.totalorder %s439, 15
      %s443 = scalar_select %p442, %s439, 15
      %s444 = smul.addr %s441, 16
      %s445 = sadd.s32 %s443, %s444
      %s446 = smul.addr %s445, 4
      %s447 = scalar_lea.vmem %s1, %s446
      %s448 = smul.u32 16, %s25
      %s449 = smul.u32 %s25, 16
      %s450 = sadd.s32 %s449, 16
      %p451 = scmp.lt.s32.totalorder %s450, 15
      %s452 = scalar_select %p451, %s450, 15
      %p453 = scmp.lt.s32.totalorder %s24, 1
      %s454 = scalar_select %p453, %s24, 1
      %p455 = scmp.lt.s32.totalorder %s452, 15
      %s456 = scalar_select %p455, %s452, 15
      %s457 = smul.addr %s454, 16
      %s458 = sadd.s32 %s456, %s457
      %s459 = smul.addr %s458, 4
      %s460 = scalar_lea.vmem %s2, %s459
      %s461 = smul.u32 %s25, 16
      %s462 = sadd.s32 %s461, 16
      %p463 = scmp.lt.s32.totalorder %s462, 15
      %s464 = scalar_select %p463, %s462, 15
      %s465 = smul.u32 16, %s25
      %p466 = scmp.lt.s32.totalorder %s24, 1
      %s467 = scalar_select %p466, %s24, 1
      %p468 = scmp.lt.s32.totalorder %s465, 15
      %s469 = scalar_select %p468, %s465, 15
      %s470 = smul.addr %s467, 16
      %s471 = sadd.s32 %s469, %s470
      %s472 = smul.addr %s471, 4
      %s473 = scalar_lea.vmem %s7, %s472
      %s474 = smul.u32 16, %s25
      %p475 = scmp.lt.s32.totalorder %s24, 1
      %s476 = scalar_select %p475, %s24, 1
      %p477 = scmp.lt.s32.totalorder %s25, 0
      %s478 = scalar_select %p477, %s25, 0
      %s479 = sadd.s32 %s478, %s476
      %s480 = smul.addr %s479, 2
      %s481 = scalar_lea.vmem %s8, %s480
      %v483 = vld [vmem:[%s3] sm:$0x1]
      %v484 = vld [vmem:[%s4] sm:$0x1]
      %v485 = vld [vmem:[%s434] sm:$0xf]
      %v486 = vunpack.c.l.bf16 %v485
      %v488 = vlaneseq
      %v489 = vshrl.u32 %v488, 7
      %v490 = vsub.s32 0, %v489
      %v491 = vrot.slane %v483, %v490
      %v493 = vmul.f32 %v486, %v491
      %v495 = vlaneseq
      %v496 = vshrl.u32 %v495, 7
      %v497 = vsub.s32 0, %v496
      %v498 = vrot.slane %v484, %v497
      %v500 = vadd.f32 %v493, %v498
      %v501 = vmax.f32 %v500, 0.0
      %v502 = vld [vmem:[%s460] sm:$0xf]
      %v503 = vunpack.c.l.bf16 %v502
      %v504 = vmul.f32 %v503, %v491
      %v505 = vadd.f32 %v504, %v498
      %v506 = vmax.f32 %v505, 0.0
      %v507 = vld [vmem:[%s447] sm:$0xf]
      %v508 = vld [vmem:[%s447 + $0x4] sm:$0xf]
      %v509 = vld [vmem:[%s447 + $0x8] sm:$0xf]
      %v510 = vld [vmem:[%s447 + $0xc] sm:$0xf]
      %v511 = vld [vmem:[%s447 + $0x10] sm:$0xf]
      %v512 = vld [vmem:[%s447 + $0x14] sm:$0xf]
      %v513 = vld [vmem:[%s447 + $0x18] sm:$0xf]
      %v514 = vld [vmem:[%s447 + $0x1c] sm:$0xf]
      %v515 = vld [vmem:[%s447 + $0x20] sm:$0xf]
      %v516 = vld [vmem:[%s447 + $0x24] sm:$0xf]
      %v517 = vld [vmem:[%s447 + $0x28] sm:$0xf]
      %v518 = vld [vmem:[%s447 + $0x2c] sm:$0xf]
      %v519 = vld [vmem:[%s447 + $0x30] sm:$0xf]
      %v520 = vld [vmem:[%s447 + $0x34] sm:$0xf]
      %v521 = vld [vmem:[%s447 + $0x38] sm:$0xf]
      %v522 = vld [vmem:[%s447 + $0x3c] sm:$0xf]
      %v523 = vunpack.c.l.bf16 %v507
      %v524 = vunpack.c.l.bf16 %v508
      %v525 = vunpack.c.l.bf16 %v509
      %v526 = vunpack.c.l.bf16 %v510
      %v527 = vunpack.c.l.bf16 %v511
      %v528 = vunpack.c.l.bf16 %v512
      %v529 = vunpack.c.l.bf16 %v513
      %v530 = vunpack.c.l.bf16 %v514
      %v531 = vunpack.c.l.bf16 %v515
      %v532 = vunpack.c.l.bf16 %v516
      %v533 = vunpack.c.l.bf16 %v517
      %v534 = vunpack.c.l.bf16 %v518
      %v535 = vunpack.c.l.bf16 %v519
      %v536 = vunpack.c.l.bf16 %v520
      %v537 = vunpack.c.l.bf16 %v521
      %v538 = vunpack.c.l.bf16 %v522
      %v539 = vmul.f32 %v523, %v491
      %v540 = vmul.f32 %v524, %v491
      %v541 = vmul.f32 %v525, %v491
      %v542 = vmul.f32 %v526, %v491
      %v543 = vmul.f32 %v527, %v491
      %v544 = vmul.f32 %v528, %v491
      %v545 = vmul.f32 %v529, %v491
      %v546 = vmul.f32 %v530, %v491
      %v547 = vmul.f32 %v531, %v491
      %v548 = vmul.f32 %v532, %v491
      %v549 = vmul.f32 %v533, %v491
      %v550 = vmul.f32 %v534, %v491
      %v551 = vmul.f32 %v535, %v491
      %v552 = vmul.f32 %v536, %v491
      %v553 = vmul.f32 %v537, %v491
      %v554 = vmul.f32 %v538, %v491
      %v555 = vadd.f32 %v539, %v498
      %v556 = vadd.f32 %v540, %v498
      %v557 = vadd.f32 %v541, %v498
      %v558 = vadd.f32 %v542, %v498
      %v559 = vadd.f32 %v543, %v498
      %v560 = vadd.f32 %v544, %v498
      %v561 = vadd.f32 %v545, %v498
      %v562 = vadd.f32 %v546, %v498
      %v563 = vadd.f32 %v547, %v498
      %v564 = vadd.f32 %v548, %v498
      %v565 = vadd.f32 %v549, %v498
      %v566 = vadd.f32 %v550, %v498
      %v567 = vadd.f32 %v551, %v498
      %v568 = vadd.f32 %v552, %v498
      %v569 = vadd.f32 %v553, %v498
      %v570 = vadd.f32 %v554, %v498
      %v571 = vmax.f32 %v555, 0.0
      %v572 = vmax.f32 %v556, 0.0
      %v573 = vmax.f32 %v557, 0.0
      %v574 = vmax.f32 %v558, 0.0
      %v575 = vmax.f32 %v559, 0.0
      %v576 = vmax.f32 %v560, 0.0
      %v577 = vmax.f32 %v561, 0.0
      %v578 = vmax.f32 %v562, 0.0
      %v579 = vmax.f32 %v563, 0.0
      %v580 = vmax.f32 %v564, 0.0
      %v581 = vmax.f32 %v565, 0.0
      %v582 = vmax.f32 %v566, 0.0
      %v583 = vmax.f32 %v567, 0.0
      %v584 = vmax.f32 %v568, 0.0
      %v585 = vmax.f32 %v569, 0.0
      %v586 = vmax.f32 %v570, 0.0
      %p587 = scmp.eq.s32.totalorder %s25, 0
      %s588 = scalar_select %p587, 1, 0
      %v589 = vstv %s588
      %vm590 = vcmp.eq.s32.totalorder %v589, 1
      %v591 = vsel %vm590, 0.0, %v501
      %v592 = vsel %vm590, 0.0, %v506
      %v593 = vld [vmem:[%s5] sm:$0xff]
      %v594 = vld [vmem:[%s5 + $0x8] sm:$0x1]
      %v611 = vrot.slane %v591, 7
      %v612 = vrot.slane %v571, 7
      %v613 = vrot.slane %v572, 7
      %v614 = vrot.slane %v573, 7
      %v615 = vrot.slane %v574, 7
      %v616 = vrot.slane %v575, 7
      %v617 = vrot.slane %v576, 7
      %v618 = vrot.slane %v577, 7
      %v619 = vrot.slane %v578, 7
      %v620 = vrot.slane %v579, 7
      %v621 = vrot.slane %v580, 7
      %v622 = vrot.slane %v581, 7
      %v623 = vrot.slane %v582, 7
      %v624 = vrot.slane %v583, 7
      %v625 = vrot.slane %v584, 7
      %v626 = vrot.slane %v585, 7
      %627 = vrot.lane.b32.xlu0 %v611, 64
      %v628 = vpop.permute.xlu0 %627
      %629 = vrot.lane.b32.xlu0 %v612, 64
      %v630 = vpop.permute.xlu0 %629
      %631 = vrot.lane.b32.xlu0 %v613, 64
      %v632 = vpop.permute.xlu0 %631
      %633 = vrot.lane.b32.xlu0 %v614, 64
      %v634 = vpop.permute.xlu0 %633
      %635 = vrot.lane.b32.xlu0 %v615, 64
      %v636 = vpop.permute.xlu0 %635
      %637 = vrot.lane.b32.xlu0 %v616, 64
      %v638 = vpop.permute.xlu0 %637
      %639 = vrot.lane.b32.xlu0 %v617, 64
      %v640 = vpop.permute.xlu0 %639
      %641 = vrot.lane.b32.xlu0 %v618, 64
      %v642 = vpop.permute.xlu0 %641
      %643 = vrot.lane.b32.xlu0 %v619, 64
      %v644 = vpop.permute.xlu0 %643
      %645 = vrot.lane.b32.xlu0 %v620, 64
      %v646 = vpop.permute.xlu0 %645
      %647 = vrot.lane.b32.xlu0 %v621, 64
      %v648 = vpop.permute.xlu0 %647
      %649 = vrot.lane.b32.xlu0 %v622, 64
      %v650 = vpop.permute.xlu0 %649
      %651 = vrot.lane.b32.xlu0 %v623, 64
      %v652 = vpop.permute.xlu0 %651
      %653 = vrot.lane.b32.xlu0 %v624, 64
      %v654 = vpop.permute.xlu0 %653
      %655 = vrot.lane.b32.xlu0 %v625, 64
      %v656 = vpop.permute.xlu0 %655
      %657 = vrot.lane.b32.xlu0 %v626, 64
      %v658 = vpop.permute.xlu0 %657
      %vm675 = vcmask 1040384
      %v676 = vsel %vm675, 0.0, %v628
      %v677 = vsel %vm675, 0.0, %v630
      %v678 = vsel %vm675, 0.0, %v632
      %v679 = vsel %vm675, 0.0, %v634
      %v680 = vsel %vm675, 0.0, %v636
      %v681 = vsel %vm675, 0.0, %v638
      %v682 = vsel %vm675, 0.0, %v640
      %v683 = vsel %vm675, 0.0, %v642
      %v684 = vsel %vm675, 0.0, %v644
      %v685 = vsel %vm675, 0.0, %v646
      %v686 = vsel %vm675, 0.0, %v648
      %v687 = vsel %vm675, 0.0, %v650
      %v688 = vsel %vm675, 0.0, %v652
      %v689 = vsel %vm675, 0.0, %v654
      %v690 = vsel %vm675, 0.0, %v656
      %v691 = vsel %vm675, 0.0, %v658
      %v692 = vrot.slane %v591, 1
      %v693 = vrot.slane %v571, 1
      %v694 = vrot.slane %v572, 1
      %v695 = vrot.slane %v573, 1
      %v696 = vrot.slane %v574, 1
      %v697 = vrot.slane %v575, 1
      %v698 = vrot.slane %v576, 1
      %v699 = vrot.slane %v577, 1
      %v700 = vrot.slane %v578, 1
      %v701 = vrot.slane %v579, 1
      %v702 = vrot.slane %v580, 1
      %v703 = vrot.slane %v581, 1
      %v704 = vrot.slane %v582, 1
      %v705 = vrot.slane %v583, 1
      %v706 = vrot.slane %v584, 1
      %v707 = vrot.slane %v585, 1
      %vm724 = vcmask 1046528
      %v725 = vsel %vm724, %v692, 0.0
      %v726 = vsel %vm724, %v693, 0.0
      %v727 = vsel %vm724, %v694, 0.0
      %v728 = vsel %vm724, %v695, 0.0
      %v729 = vsel %vm724, %v696, 0.0
      %v730 = vsel %vm724, %v697, 0.0
      %v731 = vsel %vm724, %v698, 0.0
      %v732 = vsel %vm724, %v699, 0.0
      %v733 = vsel %vm724, %v700, 0.0
      %v734 = vsel %vm724, %v701, 0.0
      %v735 = vsel %vm724, %v702, 0.0
      %v736 = vsel %vm724, %v703, 0.0
      %v737 = vsel %vm724, %v704, 0.0
      %v738 = vsel %vm724, %v705, 0.0
      %v739 = vsel %vm724, %v706, 0.0
      %v740 = vsel %vm724, %v707, 0.0
      %741 = vrot.lane.b32.xlu0 %v591, 64
      %v742 = vpop.permute.xlu0 %741
      %743 = vrot.lane.b32.xlu0 %v571, 64
      %v744 = vpop.permute.xlu0 %743
      %745 = vrot.lane.b32.xlu0 %v572, 64
      %v746 = vpop.permute.xlu0 %745
      %747 = vrot.lane.b32.xlu0 %v573, 64
      %v748 = vpop.permute.xlu0 %747
      %749 = vrot.lane.b32.xlu0 %v574, 64
      %v750 = vpop.permute.xlu0 %749
      %751 = vrot.lane.b32.xlu0 %v575, 64
      %v752 = vpop.permute.xlu0 %751
      %753 = vrot.lane.b32.xlu0 %v576, 64
      %v754 = vpop.permute.xlu0 %753
      %755 = vrot.lane.b32.xlu0 %v577, 64
      %v756 = vpop.permute.xlu0 %755
      %757 = vrot.lane.b32.xlu0 %v578, 64
      %v758 = vpop.permute.xlu0 %757
      %759 = vrot.lane.b32.xlu0 %v579, 64
      %v760 = vpop.permute.xlu0 %759
      %761 = vrot.lane.b32.xlu0 %v580, 64
      %v762 = vpop.permute.xlu0 %761
      %763 = vrot.lane.b32.xlu0 %v581, 64
      %v764 = vpop.permute.xlu0 %763
      %765 = vrot.lane.b32.xlu0 %v582, 64
      %v766 = vpop.permute.xlu0 %765
      %767 = vrot.lane.b32.xlu0 %v583, 64
      %v768 = vpop.permute.xlu0 %767
      %769 = vrot.lane.b32.xlu0 %v584, 64
      %v770 = vpop.permute.xlu0 %769
      %771 = vrot.lane.b32.xlu0 %v585, 64
      %v772 = vpop.permute.xlu0 %771
      %vm789 = vcmask 523264
      %v790 = vsel %vm789, %v676, %v742
      %v791 = vsel %vm789, %v677, %v744
      %v792 = vsel %vm789, %v678, %v746
      %v793 = vsel %vm789, %v679, %v748
      %v794 = vsel %vm789, %v680, %v750
      %v795 = vsel %vm789, %v681, %v752
      %v796 = vsel %vm789, %v682, %v754
      %v797 = vsel %vm789, %v683, %v756
      %v798 = vsel %vm789, %v684, %v758
      %v799 = vsel %vm789, %v685, %v760
      %v800 = vsel %vm789, %v686, %v762
      %v801 = vsel %vm789, %v687, %v764
      %v802 = vsel %vm789, %v688, %v766
      %v803 = vsel %vm789, %v689, %v768
      %v804 = vsel %vm789, %v690, %v770
      %v805 = vsel %vm789, %v691, %v772
      %822 = vrot.lane.b32.xlu0 %v725, 64
      %v823 = vpop.permute.xlu0 %822
      %824 = vrot.lane.b32.xlu0 %v726, 64
      %v825 = vpop.permute.xlu0 %824
      %826 = vrot.lane.b32.xlu0 %v727, 64
      %v827 = vpop.permute.xlu0 %826
      %828 = vrot.lane.b32.xlu0 %v728, 64
      %v829 = vpop.permute.xlu0 %828
      %830 = vrot.lane.b32.xlu0 %v729, 64
      %v831 = vpop.permute.xlu0 %830
      %832 = vrot.lane.b32.xlu0 %v730, 64
      %v833 = vpop.permute.xlu0 %832
      %834 = vrot.lane.b32.xlu0 %v731, 64
      %v835 = vpop.permute.xlu0 %834
      %836 = vrot.lane.b32.xlu0 %v732, 64
      %v837 = vpop.permute.xlu0 %836
      %838 = vrot.lane.b32.xlu0 %v733, 64
      %v839 = vpop.permute.xlu0 %838
      %840 = vrot.lane.b32.xlu0 %v734, 64
      %v841 = vpop.permute.xlu0 %840
      %842 = vrot.lane.b32.xlu0 %v735, 64
      %v843 = vpop.permute.xlu0 %842
      %844 = vrot.lane.b32.xlu0 %v736, 64
      %v845 = vpop.permute.xlu0 %844
      %846 = vrot.lane.b32.xlu0 %v737, 64
      %v847 = vpop.permute.xlu0 %846
      %848 = vrot.lane.b32.xlu0 %v738, 64
      %v849 = vpop.permute.xlu0 %848
      %850 = vrot.lane.b32.xlu0 %v739, 64
      %v851 = vpop.permute.xlu0 %850
      %852 = vrot.lane.b32.xlu0 %v740, 64
      %v853 = vpop.permute.xlu0 %852
      %v870 = vsel %vm789, %v742, %v823
      %v871 = vsel %vm789, %v744, %v825
      %v872 = vsel %vm789, %v746, %v827
      %v873 = vsel %vm789, %v748, %v829
      %v874 = vsel %vm789, %v750, %v831
      %v875 = vsel %vm789, %v752, %v833
      %v876 = vsel %vm789, %v754, %v835
      %v877 = vsel %vm789, %v756, %v837
      %v878 = vsel %vm789, %v758, %v839
      %v879 = vsel %vm789, %v760, %v841
      %v880 = vsel %vm789, %v762, %v843
      %v881 = vsel %vm789, %v764, %v845
      %v882 = vsel %vm789, %v766, %v847
      %v883 = vsel %vm789, %v768, %v849
      %v884 = vsel %vm789, %v770, %v851
      %v885 = vsel %vm789, %v772, %v853
      %v886 = vlaneseq
      %v887 = vshrl.u32 %v886, 7
      %v888 = vsub.s32 0, %v887
      %v889 = vrot.slane %v593, %v888
      %v890 = vmul.f32 %v790, %v889
      %v891 = vmul.f32 %v791, %v889
      %v892 = vmul.f32 %v792, %v889
      %v893 = vmul.f32 %v793, %v889
      %v894 = vmul.f32 %v794, %v889
      %v895 = vmul.f32 %v795, %v889
      %v896 = vmul.f32 %v796, %v889
      %v897 = vmul.f32 %v797, %v889
      %v898 = vmul.f32 %v798, %v889
      %v899 = vmul.f32 %v799, %v889
      %v900 = vmul.f32 %v800, %v889
      %v901 = vmul.f32 %v801, %v889
      %v902 = vmul.f32 %v802, %v889
      %v903 = vmul.f32 %v803, %v889
      %v904 = vmul.f32 %v804, %v889
      %v905 = vmul.f32 %v805, %v889
      %v906 = vadd.f32 %v890, 0.0
      %v907 = vadd.f32 %v891, 0.0
      %v908 = vadd.f32 %v892, 0.0
      %v909 = vadd.f32 %v893, 0.0
      %v910 = vadd.f32 %v894, 0.0
      %v911 = vadd.f32 %v895, 0.0
      %v912 = vadd.f32 %v896, 0.0
      %v913 = vadd.f32 %v897, 0.0
      %v914 = vadd.f32 %v898, 0.0
      %v915 = vadd.f32 %v899, 0.0
      %v916 = vadd.f32 %v900, 0.0
      %v917 = vadd.f32 %v901, 0.0
      %v918 = vadd.f32 %v902, 0.0
      %v919 = vadd.f32 %v903, 0.0
      %v920 = vadd.f32 %v904, 0.0
      %v921 = vadd.f32 %v905, 0.0
      %v922 = vlaneseq
      %v923 = vshrl.u32 %v922, 7
      %v924 = vsub.s32 1, %v923
      %v925 = vrot.slane %v593, %v924
      %v926 = vmul.f32 %v591, %v925
      %v927 = vmul.f32 %v571, %v925
      %v928 = vmul.f32 %v572, %v925
      %v929 = vmul.f32 %v573, %v925
      %v930 = vmul.f32 %v574, %v925
      %v931 = vmul.f32 %v575, %v925
      %v932 = vmul.f32 %v576, %v925
      %v933 = vmul.f32 %v577, %v925
      %v934 = vmul.f32 %v578, %v925
      %v935 = vmul.f32 %v579, %v925
      %v936 = vmul.f32 %v580, %v925
      %v937 = vmul.f32 %v581, %v925
      %v938 = vmul.f32 %v582, %v925
      %v939 = vmul.f32 %v583, %v925
      %v940 = vmul.f32 %v584, %v925
      %v941 = vmul.f32 %v585, %v925
      %v942 = vadd.f32 %v906, %v926
      %v943 = vadd.f32 %v907, %v927
      %v944 = vadd.f32 %v908, %v928
      %v945 = vadd.f32 %v909, %v929
      %v946 = vadd.f32 %v910, %v930
      %v947 = vadd.f32 %v911, %v931
      %v948 = vadd.f32 %v912, %v932
      %v949 = vadd.f32 %v913, %v933
      %v950 = vadd.f32 %v914, %v934
      %v951 = vadd.f32 %v915, %v935
      %v952 = vadd.f32 %v916, %v936
      %v953 = vadd.f32 %v917, %v937
      %v954 = vadd.f32 %v918, %v938
      %v955 = vadd.f32 %v919, %v939
      %v956 = vadd.f32 %v920, %v940
      %v957 = vadd.f32 %v921, %v941
      %v958 = vlaneseq
      %v959 = vshrl.u32 %v958, 7
      %v960 = vsub.s32 2, %v959
      %v961 = vrot.slane %v593, %v960
      %v962 = vmul.f32 %v870, %v961
      %v963 = vmul.f32 %v871, %v961
      %v964 = vmul.f32 %v872, %v961
      %v965 = vmul.f32 %v873, %v961
      %v966 = vmul.f32 %v874, %v961
      %v967 = vmul.f32 %v875, %v961
      %v968 = vmul.f32 %v876, %v961
      %v969 = vmul.f32 %v877, %v961
      %v970 = vmul.f32 %v878, %v961
      %v971 = vmul.f32 %v879, %v961
      %v972 = vmul.f32 %v880, %v961
      %v973 = vmul.f32 %v881, %v961
      %v974 = vmul.f32 %v882, %v961
      %v975 = vmul.f32 %v883, %v961
      %v976 = vmul.f32 %v884, %v961
      %v977 = vmul.f32 %v885, %v961
      %v978 = vadd.f32 %v942, %v962
      %v979 = vadd.f32 %v943, %v963
      %v980 = vadd.f32 %v944, %v964
      %v981 = vadd.f32 %v945, %v965
      %v982 = vadd.f32 %v946, %v966
      %v983 = vadd.f32 %v947, %v967
      %v984 = vadd.f32 %v948, %v968
      %v985 = vadd.f32 %v949, %v969
      %v986 = vadd.f32 %v950, %v970
      %v987 = vadd.f32 %v951, %v971
      %v988 = vadd.f32 %v952, %v972
      %v989 = vadd.f32 %v953, %v973
      %v990 = vadd.f32 %v954, %v974
      %v991 = vadd.f32 %v955, %v975
      %v992 = vadd.f32 %v956, %v976
      %v993 = vadd.f32 %v957, %v977
      %v995 = vrot.slane %v586, 7
      %996 = vrot.lane.b32.xlu0 %v995, 64
      %v997 = vpop.permute.xlu0 %996
      %v999 = vsel %vm675, 0.0, %v997
      %v1000 = vrot.slane %v586, 1
      %v1002 = vsel %vm724, %v1000, 0.0
      %1003 = vrot.lane.b32.xlu0 %v586, 64
      %v1004 = vpop.permute.xlu0 %1003
      %v1006 = vsel %vm789, %v999, %v1004
      %1008 = vrot.lane.b32.xlu0 %v1002, 64
      %v1009 = vpop.permute.xlu0 %1008
      %v1011 = vsel %vm789, %v1004, %v1009
      %v1012 = vlaneseq
      %v1013 = vshrl.u32 %v1012, 7
      %v1014 = vsub.s32 3, %v1013
      %v1015 = vrot.slane %v593, %v1014
      %v1016 = vmul.f32 %v791, %v1015
      %v1017 = vmul.f32 %v792, %v1015
      %v1018 = vmul.f32 %v793, %v1015
      %v1019 = vmul.f32 %v794, %v1015
      %v1020 = vmul.f32 %v795, %v1015
      %v1021 = vmul.f32 %v796, %v1015
      %v1022 = vmul.f32 %v797, %v1015
      %v1023 = vmul.f32 %v798, %v1015
      %v1024 = vmul.f32 %v799, %v1015
      %v1025 = vmul.f32 %v800, %v1015
      %v1026 = vmul.f32 %v801, %v1015
      %v1027 = vmul.f32 %v802, %v1015
      %v1028 = vmul.f32 %v803, %v1015
      %v1029 = vmul.f32 %v804, %v1015
      %v1030 = vmul.f32 %v805, %v1015
      %v1031 = vmul.f32 %v1006, %v1015
      %v1032 = vadd.f32 %v978, %v1016
      %v1033 = vadd.f32 %v979, %v1017
      %v1034 = vadd.f32 %v980, %v1018
      %v1035 = vadd.f32 %v981, %v1019
      %v1036 = vadd.f32 %v982, %v1020
      %v1037 = vadd.f32 %v983, %v1021
      %v1038 = vadd.f32 %v984, %v1022
      %v1039 = vadd.f32 %v985, %v1023
      %v1040 = vadd.f32 %v986, %v1024
      %v1041 = vadd.f32 %v987, %v1025
      %v1042 = vadd.f32 %v988, %v1026
      %v1043 = vadd.f32 %v989, %v1027
      %v1044 = vadd.f32 %v990, %v1028
      %v1045 = vadd.f32 %v991, %v1029
      %v1046 = vadd.f32 %v992, %v1030
      %v1047 = vadd.f32 %v993, %v1031
      %v1048 = vlaneseq
      %v1049 = vshrl.u32 %v1048, 7
      %v1050 = vsub.s32 4, %v1049
      %v1051 = vrot.slane %v593, %v1050
      %v1052 = vmul.f32 %v571, %v1051
      %v1053 = vmul.f32 %v572, %v1051
      %v1054 = vmul.f32 %v573, %v1051
      %v1055 = vmul.f32 %v574, %v1051
      %v1056 = vmul.f32 %v575, %v1051
      %v1057 = vmul.f32 %v576, %v1051
      %v1058 = vmul.f32 %v577, %v1051
      %v1059 = vmul.f32 %v578, %v1051
      %v1060 = vmul.f32 %v579, %v1051
      %v1061 = vmul.f32 %v580, %v1051
      %v1062 = vmul.f32 %v581, %v1051
      %v1063 = vmul.f32 %v582, %v1051
      %v1064 = vmul.f32 %v583, %v1051
      %v1065 = vmul.f32 %v584, %v1051
      %v1066 = vmul.f32 %v585, %v1051
      %v1067 = vmul.f32 %v586, %v1051
      %v1068 = vadd.f32 %v1032, %v1052
      %v1069 = vadd.f32 %v1033, %v1053
      %v1070 = vadd.f32 %v1034, %v1054
      %v1071 = vadd.f32 %v1035, %v1055
      %v1072 = vadd.f32 %v1036, %v1056
      %v1073 = vadd.f32 %v1037, %v1057
      %v1074 = vadd.f32 %v1038, %v1058
      %v1075 = vadd.f32 %v1039, %v1059
      %v1076 = vadd.f32 %v1040, %v1060
      %v1077 = vadd.f32 %v1041, %v1061
      %v1078 = vadd.f32 %v1042, %v1062
      %v1079 = vadd.f32 %v1043, %v1063
      %v1080 = vadd.f32 %v1044, %v1064
      %v1081 = vadd.f32 %v1045, %v1065
      %v1082 = vadd.f32 %v1046, %v1066
      %v1083 = vadd.f32 %v1047, %v1067
      %v1084 = vlaneseq
      %v1085 = vshrl.u32 %v1084, 7
      %v1086 = vsub.s32 5, %v1085
      %v1087 = vrot.slane %v593, %v1086
      %v1088 = vmul.f32 %v871, %v1087
      %v1089 = vmul.f32 %v872, %v1087
      %v1090 = vmul.f32 %v873, %v1087
      %v1091 = vmul.f32 %v874, %v1087
      %v1092 = vmul.f32 %v875, %v1087
      %v1093 = vmul.f32 %v876, %v1087
      %v1094 = vmul.f32 %v877, %v1087
      %v1095 = vmul.f32 %v878, %v1087
      %v1096 = vmul.f32 %v879, %v1087
      %v1097 = vmul.f32 %v880, %v1087
      %v1098 = vmul.f32 %v881, %v1087
      %v1099 = vmul.f32 %v882, %v1087
      %v1100 = vmul.f32 %v883, %v1087
      %v1101 = vmul.f32 %v884, %v1087
      %v1102 = vmul.f32 %v885, %v1087
      %v1103 = vmul.f32 %v1011, %v1087
      %v1104 = vadd.f32 %v1068, %v1088
      %v1105 = vadd.f32 %v1069, %v1089
      %v1106 = vadd.f32 %v1070, %v1090
      %v1107 = vadd.f32 %v1071, %v1091
      %v1108 = vadd.f32 %v1072, %v1092
      %v1109 = vadd.f32 %v1073, %v1093
      %v1110 = vadd.f32 %v1074, %v1094
      %v1111 = vadd.f32 %v1075, %v1095
      %v1112 = vadd.f32 %v1076, %v1096
      %v1113 = vadd.f32 %v1077, %v1097
      %v1114 = vadd.f32 %v1078, %v1098
      %v1115 = vadd.f32 %v1079, %v1099
      %v1116 = vadd.f32 %v1080, %v1100
      %v1117 = vadd.f32 %v1081, %v1101
      %v1118 = vadd.f32 %v1082, %v1102
      %v1119 = vadd.f32 %v1083, %v1103
      %v1121 = vrot.slane %v592, 7
      %1122 = vrot.lane.b32.xlu0 %v1121, 64
      %v1123 = vpop.permute.xlu0 %1122
      %v1125 = vsel %vm675, 0.0, %v1123
      %v1126 = vrot.slane %v592, 1
      %v1128 = vsel %vm724, %v1126, 0.0
      %1129 = vrot.lane.b32.xlu0 %v592, 64
      %v1130 = vpop.permute.xlu0 %1129
      %v1132 = vsel %vm789, %v1125, %v1130
      %1134 = vrot.lane.b32.xlu0 %v1128, 64
      %v1135 = vpop.permute.xlu0 %1134
      %v1137 = vsel %vm789, %v1130, %v1135
      %v1138 = vlaneseq
      %v1139 = vshrl.u32 %v1138, 7
      %v1140 = vsub.s32 6, %v1139
      %v1141 = vrot.slane %v593, %v1140
      %v1142 = vmul.f32 %v792, %v1141
      %v1143 = vmul.f32 %v793, %v1141
      %v1144 = vmul.f32 %v794, %v1141
      %v1145 = vmul.f32 %v795, %v1141
      %v1146 = vmul.f32 %v796, %v1141
      %v1147 = vmul.f32 %v797, %v1141
      %v1148 = vmul.f32 %v798, %v1141
      %v1149 = vmul.f32 %v799, %v1141
      %v1150 = vmul.f32 %v800, %v1141
      %v1151 = vmul.f32 %v801, %v1141
      %v1152 = vmul.f32 %v802, %v1141
      %v1153 = vmul.f32 %v803, %v1141
      %v1154 = vmul.f32 %v804, %v1141
      %v1155 = vmul.f32 %v805, %v1141
      %v1156 = vmul.f32 %v1006, %v1141
      %v1157 = vmul.f32 %v1132, %v1141
      %v1158 = vadd.f32 %v1104, %v1142
      %v1159 = vadd.f32 %v1105, %v1143
      %v1160 = vadd.f32 %v1106, %v1144
      %v1161 = vadd.f32 %v1107, %v1145
      %v1162 = vadd.f32 %v1108, %v1146
      %v1163 = vadd.f32 %v1109, %v1147
      %v1164 = vadd.f32 %v1110, %v1148
      %v1165 = vadd.f32 %v1111, %v1149
      %v1166 = vadd.f32 %v1112, %v1150
      %v1167 = vadd.f32 %v1113, %v1151
      %v1168 = vadd.f32 %v1114, %v1152
      %v1169 = vadd.f32 %v1115, %v1153
      %v1170 = vadd.f32 %v1116, %v1154
      %v1171 = vadd.f32 %v1117, %v1155
      %v1172 = vadd.f32 %v1118, %v1156
      %v1173 = vadd.f32 %v1119, %v1157
      %v1174 = vlaneseq
      %v1175 = vshrl.u32 %v1174, 7
      %v1176 = vsub.s32 7, %v1175
      %v1177 = vrot.slane %v593, %v1176
      %v1178 = vmul.f32 %v572, %v1177
      %v1179 = vmul.f32 %v573, %v1177
      %v1180 = vmul.f32 %v574, %v1177
      %v1181 = vmul.f32 %v575, %v1177
      %v1182 = vmul.f32 %v576, %v1177
      %v1183 = vmul.f32 %v577, %v1177
      %v1184 = vmul.f32 %v578, %v1177
      %v1185 = vmul.f32 %v579, %v1177
      %v1186 = vmul.f32 %v580, %v1177
      %v1187 = vmul.f32 %v581, %v1177
      %v1188 = vmul.f32 %v582, %v1177
      %v1189 = vmul.f32 %v583, %v1177
      %v1190 = vmul.f32 %v584, %v1177
      %v1191 = vmul.f32 %v585, %v1177
      %v1192 = vmul.f32 %v586, %v1177
      %v1193 = vmul.f32 %v592, %v1177
      %v1194 = vadd.f32 %v1158, %v1178
      %v1195 = vadd.f32 %v1159, %v1179
      %v1196 = vadd.f32 %v1160, %v1180
      %v1197 = vadd.f32 %v1161, %v1181
      %v1198 = vadd.f32 %v1162, %v1182
      %v1199 = vadd.f32 %v1163, %v1183
      %v1200 = vadd.f32 %v1164, %v1184
      %v1201 = vadd.f32 %v1165, %v1185
      %v1202 = vadd.f32 %v1166, %v1186
      %v1203 = vadd.f32 %v1167, %v1187
      %v1204 = vadd.f32 %v1168, %v1188
      %v1205 = vadd.f32 %v1169, %v1189
      %v1206 = vadd.f32 %v1170, %v1190
      %v1207 = vadd.f32 %v1171, %v1191
      %v1208 = vadd.f32 %v1172, %v1192
      %v1209 = vadd.f32 %v1173, %v1193
      %v1210 = vlaneseq
      %v1211 = vshrl.u32 %v1210, 7
      %v1212 = vsub.s32 0, %v1211
      %v1213 = vrot.slane %v594, %v1212
      %v1214 = vmul.f32 %v872, %v1213
      %v1215 = vmul.f32 %v873, %v1213
      %v1216 = vmul.f32 %v874, %v1213
      %v1217 = vmul.f32 %v875, %v1213
      %v1218 = vmul.f32 %v876, %v1213
      %v1219 = vmul.f32 %v877, %v1213
      %v1220 = vmul.f32 %v878, %v1213
      %v1221 = vmul.f32 %v879, %v1213
      %v1222 = vmul.f32 %v880, %v1213
      %v1223 = vmul.f32 %v881, %v1213
      %v1224 = vmul.f32 %v882, %v1213
      %v1225 = vmul.f32 %v883, %v1213
      %v1226 = vmul.f32 %v884, %v1213
      %v1227 = vmul.f32 %v885, %v1213
      %v1228 = vmul.f32 %v1011, %v1213
      %v1229 = vmul.f32 %v1137, %v1213
      %v1230 = vadd.f32 %v1194, %v1214
      %v1231 = vadd.f32 %v1195, %v1215
      %v1232 = vadd.f32 %v1196, %v1216
      %v1233 = vadd.f32 %v1197, %v1217
      %v1234 = vadd.f32 %v1198, %v1218
      %v1235 = vadd.f32 %v1199, %v1219
      %v1236 = vadd.f32 %v1200, %v1220
      %v1237 = vadd.f32 %v1201, %v1221
      %v1238 = vadd.f32 %v1202, %v1222
      %v1239 = vadd.f32 %v1203, %v1223
      %v1240 = vadd.f32 %v1204, %v1224
      %v1241 = vadd.f32 %v1205, %v1225
      %v1242 = vadd.f32 %v1206, %v1226
      %v1243 = vadd.f32 %v1207, %v1227
      %v1244 = vadd.f32 %v1208, %v1228
      %v1245 = vadd.f32 %v1209, %v1229
      %v1246 = vpack.c.bf16 %v1231, %v1230
      %v1247 = vpack.c.bf16 %v1233, %v1232
      %v1248 = vpack.c.bf16 %v1235, %v1234
      %v1249 = vpack.c.bf16 %v1237, %v1236
      %v1250 = vpack.c.bf16 %v1239, %v1238
      %v1251 = vpack.c.bf16 %v1241, %v1240
      %v1252 = vpack.c.bf16 %v1243, %v1242
      %v1253 = vpack.c.bf16 %v1245, %v1244
      %v1254 = vld [vmem:[%s6] sm:$0xf]
      %v1255 = vld [vmem:[%s6 + $0x4] sm:$0xf]
      %v1256 = vld [vmem:[%s6 + $0x8] sm:$0xf]
      %v1257 = vld [vmem:[%s6 + $0xc] sm:$0xf]
      %v1258 = vld [vmem:[%s6 + $0x10] sm:$0xf]
      %v1259 = vld [vmem:[%s6 + $0x14] sm:$0xf]
      %v1260 = vld [vmem:[%s6 + $0x18] sm:$0xf]
      %v1261 = vld [vmem:[%s6 + $0x1c] sm:$0xf]
      %v1262 = vld [vmem:[%s6 + $0x20] sm:$0xf]
      %v1263 = vld [vmem:[%s6 + $0x24] sm:$0xf]
      %v1264 = vld [vmem:[%s6 + $0x28] sm:$0xf]
      %v1265 = vld [vmem:[%s6 + $0x2c] sm:$0xf]
      %v1266 = vld [vmem:[%s6 + $0x30] sm:$0xf]
      %v1267 = vld [vmem:[%s6 + $0x34] sm:$0xf]
      %v1268 = vld [vmem:[%s6 + $0x38] sm:$0xf]
      %v1269 = vld [vmem:[%s6 + $0x3c] sm:$0xf]
      %v1286 = vunpack.c.l.b16 %v1254
      %v1287 = vunpack.c.l.b16 %v1255
      %v1288 = vunpack.c.l.b16 %v1256
      %v1289 = vunpack.c.l.b16 %v1257
      %v1290 = vunpack.c.l.b16 %v1258
      %v1291 = vunpack.c.l.b16 %v1259
      %v1292 = vunpack.c.l.b16 %v1260
      %v1293 = vunpack.c.l.b16 %v1261
      %v1294 = vunpack.c.l.b16 %v1262
      %v1295 = vunpack.c.l.b16 %v1263
      %v1296 = vunpack.c.l.b16 %v1264
      %v1297 = vunpack.c.l.b16 %v1265
      %v1298 = vunpack.c.l.b16 %v1266
      %v1299 = vunpack.c.l.b16 %v1267
      %v1300 = vunpack.c.l.b16 %v1268
      %v1301 = vunpack.c.l.b16 %v1269
      %v1302 = vpack.c.b16 %v1287, %v1286
      %v1303 = vpack.c.b16 %v1289, %v1288
      %v1304 = vpack.c.b16 %v1291, %v1290
      %v1305 = vpack.c.b16 %v1293, %v1292
      %v1306 = vpack.c.b16 %v1295, %v1294
      %v1307 = vpack.c.b16 %v1297, %v1296
      %v1308 = vpack.c.b16 %v1299, %v1298
      %v1309 = vpack.c.b16 %v1301, %v1300
      %1318 = vmatprep.subr.bf16.mxu0 0
      %1319 = vmatpush1.bf16.msra.mxu0 %v1309
      %1320 = vmatprep.subr.bf16.mxu0 0
      %1321 = vmatpush1.bf16.msra.mxu0 %v1308
      %1322 = vmatprep.subr.bf16.mxu0 0
      %1323 = vmatpush1.bf16.msra.mxu0 %v1307
      %1324 = vmatprep.subr.bf16.mxu0 0
      %1325 = vmatpush1.bf16.msra.mxu0 %v1306
      %1326 = vmatprep.subr.bf16.mxu0 0
      %1327 = vmatpush1.bf16.msra.mxu0 %v1305
      %1328 = vmatprep.subr.bf16.mxu0 0
      %1329 = vmatpush1.bf16.msra.mxu0 %v1304
      %1330 = vmatprep.subr.bf16.mxu0 0
      %1331 = vmatpush1.bf16.msra.mxu0 %v1303
      %1332 = vmatprep.subr.bf16.mxu0 0
      %1333 = vmatpush1.bf16.msra.mxu0 %v1302
      %1334 = vmatprep.subr.bf16.mxu0 0
      %1335 = vmatpush2.bf16.msra.mxu0 0
      %1336 = vmatprep.subr.bf16.mxu0 0
      %1337 = vmatpush2.bf16.msra.mxu0 0
      %1338 = vmatprep.subr.bf16.mxu0 0
      %1339 = vmatpush2.bf16.msra.mxu0 0
      %1340 = vmatprep.subr.bf16.mxu0 0
      %1341 = vmatpush2.bf16.msra.mxu0 0
      %1342 = vmatprep.subr.bf16.mxu0 0
      %1343 = vmatpush2.bf16.msra.mxu0 0
      %1344 = vmatprep.subr.bf16.mxu0 0
      %1345 = vmatpush2.bf16.msra.mxu0 0
      %1346 = vmatprep.subr.bf16.mxu0 0
      %1347 = vmatpush2.bf16.msra.mxu0 0
      %1348 = vmatprep.subr.bf16.mxu0 0
      %1349 = vmatpush2.bf16.msra.mxu0 0
      %1350 = vmatprep.mubr.bf16.mxu0 0
      %1351 = vmatmul.mubr.bf16.gmra.mxu0 %v1246
      %v1352 = vpop.f32.mrf.mxu0
      %v1353 = vadd.f32 0.0, %v1352
      %v1354 = vpop.f32.mrf.mxu0
      %v1355 = vpop.f32.mrf.mxu0
      %v1356 = vadd.f32 0.0, %v1355
      %v1357 = vpop.f32.mrf.mxu0
      %1358 = vmatprep.mubr.bf16.mxu0 0
      %1359 = vmatmul.mubr.bf16.gmra.mxu0 %v1247
      %v1360 = vpop.f32.mrf.mxu0
      %v1361 = vadd.f32 0.0, %v1360
      %v1362 = vpop.f32.mrf.mxu0
      %v1363 = vpop.f32.mrf.mxu0
      %v1364 = vadd.f32 0.0, %v1363
      %v1365 = vpop.f32.mrf.mxu0
      %1366 = vmatprep.mubr.bf16.mxu0 0
      %1367 = vmatmul.mubr.bf16.gmra.mxu0 %v1248
      %v1368 = vpop.f32.mrf.mxu0
      %v1369 = vadd.f32 0.0, %v1368
      %v1370 = vpop.f32.mrf.mxu0
      %v1371 = vpop.f32.mrf.mxu0
      %v1372 = vadd.f32 0.0, %v1371
      %v1373 = vpop.f32.mrf.mxu0
      %1374 = vmatprep.mubr.bf16.mxu0 0
      %1375 = vmatmul.mubr.bf16.gmra.mxu0 %v1249
      %v1376 = vpop.f32.mrf.mxu0
      %v1377 = vadd.f32 0.0, %v1376
      %v1378 = vpop.f32.mrf.mxu0
      %v1379 = vpop.f32.mrf.mxu0
      %v1380 = vadd.f32 0.0, %v1379
      %v1381 = vpop.f32.mrf.mxu0
      %1382 = vmatprep.mubr.bf16.mxu0 0
      %1383 = vmatmul.mubr.bf16.gmra.mxu0 %v1250
      %v1384 = vpop.f32.mrf.mxu0
      %v1385 = vadd.f32 0.0, %v1384
      %v1386 = vpop.f32.mrf.mxu0
      %v1387 = vpop.f32.mrf.mxu0
      %v1388 = vadd.f32 0.0, %v1387
      %v1389 = vpop.f32.mrf.mxu0
      %1390 = vmatprep.mubr.bf16.mxu0 0
      %1391 = vmatmul.mubr.bf16.gmra.mxu0 %v1251
      %v1392 = vpop.f32.mrf.mxu0
      %v1393 = vadd.f32 0.0, %v1392
      %v1394 = vpop.f32.mrf.mxu0
      %v1395 = vpop.f32.mrf.mxu0
      %v1396 = vadd.f32 0.0, %v1395
      %v1397 = vpop.f32.mrf.mxu0
      %1398 = vmatprep.mubr.bf16.mxu0 0
      %1399 = vmatmul.mubr.bf16.gmra.mxu0 %v1252
      %v1400 = vpop.f32.mrf.mxu0
      %v1401 = vadd.f32 0.0, %v1400
      %v1402 = vpop.f32.mrf.mxu0
      %v1403 = vpop.f32.mrf.mxu0
      %v1404 = vadd.f32 0.0, %v1403
      %v1405 = vpop.f32.mrf.mxu0
      %1406 = vmatprep.mubr.bf16.mxu0 0
      %1407 = vmatmul.mubr.bf16.gmra.mxu0 %v1253
      %v1408 = vpop.f32.mrf.mxu0
      %v1409 = vadd.f32 0.0, %v1408
      %v1410 = vpop.f32.mrf.mxu0
      %v1411 = vpop.f32.mrf.mxu0
      %v1412 = vadd.f32 0.0, %v1411
      %v1413 = vpop.f32.mrf.mxu0
      %1414 = vdwg.mxu0
      %v1415 = vpack.c.bf16 %v1353, %v1353
      %v1416 = vpack.c.bf16 %v1356, %v1356
      %v1417 = vpack.c.bf16 %v1361, %v1361
      %v1418 = vpack.c.bf16 %v1364, %v1364
      %v1419 = vpack.c.bf16 %v1369, %v1369
      %v1420 = vpack.c.bf16 %v1372, %v1372
      %v1421 = vpack.c.bf16 %v1377, %v1377
      %v1422 = vpack.c.bf16 %v1380, %v1380
      %v1423 = vpack.c.bf16 %v1385, %v1385
      %v1424 = vpack.c.bf16 %v1388, %v1388
      %v1425 = vpack.c.bf16 %v1393, %v1393
      %v1426 = vpack.c.bf16 %v1396, %v1396
      %v1427 = vpack.c.bf16 %v1401, %v1401
      %v1428 = vpack.c.bf16 %v1404, %v1404
      %v1429 = vpack.c.bf16 %v1409, %v1409
      %v1430 = vpack.c.bf16 %v1412, %v1412
      %1431 = vst [vmem:[%s473] sm:$0xf] %v1415
      %1432 = vst [vmem:[%s473 + $0x4] sm:$0xf] %v1416
      %1433 = vst [vmem:[%s473 + $0x8] sm:$0xf] %v1417
      %1434 = vst [vmem:[%s473 + $0xc] sm:$0xf] %v1418
      %1435 = vst [vmem:[%s473 + $0x10] sm:$0xf] %v1419
      %1436 = vst [vmem:[%s473 + $0x14] sm:$0xf] %v1420
      %1437 = vst [vmem:[%s473 + $0x18] sm:$0xf] %v1421
      %1438 = vst [vmem:[%s473 + $0x1c] sm:$0xf] %v1422
      %1439 = vst [vmem:[%s473 + $0x20] sm:$0xf] %v1423
      %1440 = vst [vmem:[%s473 + $0x24] sm:$0xf] %v1424
      %1441 = vst [vmem:[%s473 + $0x28] sm:$0xf] %v1425
      %1442 = vst [vmem:[%s473 + $0x2c] sm:$0xf] %v1426
      %1443 = vst [vmem:[%s473 + $0x30] sm:$0xf] %v1427
      %1444 = vst [vmem:[%s473 + $0x34] sm:$0xf] %v1428
      %1445 = vst [vmem:[%s473 + $0x38] sm:$0xf] %v1429
      %1446 = vst [vmem:[%s473 + $0x3c] sm:$0xf] %v1430
      %v1447 = vadd.f32 %v1353, %v1356
      %v1448 = vadd.f32 %v1447, %v1361
      %v1449 = vadd.f32 %v1448, %v1364
      %v1450 = vadd.f32 %v1449, %v1369
      %v1451 = vadd.f32 %v1450, %v1372
      %v1452 = vadd.f32 %v1451, %v1377
      %v1453 = vadd.f32 %v1452, %v1380
      %v1454 = vadd.f32 %v1453, %v1385
      %v1455 = vadd.f32 %v1454, %v1388
      %v1456 = vadd.f32 %v1455, %v1393
      %v1457 = vadd.f32 %v1456, %v1396
      %v1458 = vadd.f32 %v1457, %v1401
      %v1459 = vadd.f32 %v1458, %v1404
      %v1460 = vadd.f32 %v1459, %v1409
      %v1461 = vadd.f32 %v1460, %v1412
      %v1462 = vrot.slane %v1461, 4
      %v1463 = vadd.f32 %v1461, %v1462
      %v1464 = vrot.slane %v1463, 2
      %v1465 = vadd.f32 %v1463, %v1464
      %v1466 = vrot.slane %v1465, 1
      %v1467 = vadd.f32 %v1465, %v1466
      %v1468 = vmul.f32 %v1353, %v1353
      %v1469 = vmul.f32 %v1356, %v1356
      %v1470 = vmul.f32 %v1361, %v1361
      %v1471 = vmul.f32 %v1364, %v1364
      %v1472 = vmul.f32 %v1369, %v1369
      %v1473 = vmul.f32 %v1372, %v1372
      %v1474 = vmul.f32 %v1377, %v1377
      %v1475 = vmul.f32 %v1380, %v1380
      %v1476 = vmul.f32 %v1385, %v1385
      %v1477 = vmul.f32 %v1388, %v1388
      %v1478 = vmul.f32 %v1393, %v1393
      %v1479 = vmul.f32 %v1396, %v1396
      %v1480 = vmul.f32 %v1401, %v1401
      %v1481 = vmul.f32 %v1404, %v1404
      %v1482 = vmul.f32 %v1409, %v1409
      %v1483 = vmul.f32 %v1412, %v1412
      %v1484 = vadd.f32 %v1468, %v1469
      %v1485 = vadd.f32 %v1484, %v1470
      %v1486 = vadd.f32 %v1485, %v1471
      %v1487 = vadd.f32 %v1486, %v1472
      %v1488 = vadd.f32 %v1487, %v1473
      %v1489 = vadd.f32 %v1488, %v1474
      %v1490 = vadd.f32 %v1489, %v1475
      %v1491 = vadd.f32 %v1490, %v1476
      %v1492 = vadd.f32 %v1491, %v1477
      %v1493 = vadd.f32 %v1492, %v1478
      %v1494 = vadd.f32 %v1493, %v1479
      %v1495 = vadd.f32 %v1494, %v1480
      %v1496 = vadd.f32 %v1495, %v1481
      %v1497 = vadd.f32 %v1496, %v1482
      %v1498 = vadd.f32 %v1497, %v1483
      %v1499 = vrot.slane %v1498, 4
      %v1500 = vadd.f32 %v1498, %v1499
      %v1501 = vrot.slane %v1500, 2
      %v1502 = vadd.f32 %v1500, %v1501
      %v1503 = vrot.slane %v1502, 1
      %v1504 = vadd.f32 %v1502, %v1503
      %v1505 = vsel %vm675, %v1467, %v1504
      %1506 = vst [vmem:[%s481] sm:$0x3] %v1505
      %s1507 = smul.u32 16, %s25
      %p1508 = scmp.lt.s32.totalorder %s24, 1
      %s1509 = scalar_select %p1508, %s24, 1
      %p1510 = scmp.lt.s32.totalorder %s1507, 15
      %s1511 = scalar_select %p1510, %s1507, 15
      %s1512 = smul.addr %s1509, 16
      %s1513 = sadd.s32 %s1511, %s1512
      %s1514 = smul.addr %s1513, 4
      %s1515 = scalar_lea.vmem %s7, %s1514
      %p1516 = scmp.lt.s32.totalorder %s24, 1
      %s1517 = scalar_select %p1516, %s24, 1
      %p1518 = scmp.lt.s32.totalorder %s25, 0
      %s1519 = scalar_select %p1518, %s25, 0
      %s1520 = sadd.s32 %s1519, %s1517
      %s1521 = smul.addr %s1520, 2
      %s1522 = scalar_lea.vmem %s8, %s1521
      // Predicated region
      $region49: #{up_forward.8} parent=47 // pred_check
        %p1523 = pneg %p236
      $region50: #{up_forward.8} parent=47 // pred_check_branch
        %1525 = sbr.rel (%p1523) target = $region52
      $region51: #{up_forward.8} parent=47 // pred_region
        %s1526 = smul.u32 16, %s25
      $region52: #{up_forward.8} parent=47 // pred_fallthru
        _
      // Predicated region
      $region53: #{up_forward.8} parent=47 // pred_check
        %p1527 = pneg %p264
      $region54: #{up_forward.8} parent=47 // pred_check_branch
        %1529 = sbr.rel (%p1527) target = $region56
      $region55: #{up_forward.8} parent=47 // pred_region
        _
      $region56: #{up_forward.8} parent=47 // pred_fallthru
        _
    $region48: #{up_forward.8} parent=5 // pred_fallthru
      _
    %p1530 = scmp.le.s32.totalorder 2, %s15
    // Predicated region
    $region57: #{up_forward.8} parent=5 // pred_check
      %p1531 = pneg %p1530
    $region58: #{up_forward.8} parent=5 // pred_check_branch
      %1533 = sbr.rel (%p1531) target = $region60
    $region59: #{up_forward.8} parent=5 // pred_region
      %s1534 = ssub.s32 %s15, 2
      // Predicated region
      $region61: #{up_forward.8} parent=59 // pred_check
        %p1535 = pneg %p242
      $region62: #{up_forward.8} parent=59 // pred_check_branch
        %1537 = sbr.rel (%p1535) target = $region64
      $region63: #{up_forward.8} parent=59 // pred_region
        %s1538 = smul.u32 16, %s27
        %p1539 = scmp.lt.s32.totalorder %s26, 1
        %s1540 = scalar_select %p1539, %s26, 1
        %p1541 = scmp.lt.s32.totalorder %s1538, 15
        %s1542 = scalar_select %p1541, %s1538, 15
        %s1543 = smul.addr %s1540, 16
        %s1544 = sadd.s32 %s1542, %s1543
        %s1545 = smul.addr %s1544, 4
        %s1546 = scalar_lea.vmem %s7, %s1545
      $region64: #{up_forward.8} parent=59 // pred_fallthru
        _
      // Predicated region
      $region65: #{up_forward.8} parent=59 // pred_check
        %p1547 = pneg %p270
      $region66: #{up_forward.8} parent=59 // pred_check_branch
        %1549 = sbr.rel (%p1547) target = $region68
      $region67: #{up_forward.8} parent=59 // pred_region
        %p1550 = scmp.lt.s32.totalorder %s26, 1
        %s1551 = scalar_select %p1550, %s26, 1
        %p1552 = scmp.lt.s32.totalorder %s27, 0
        %s1553 = scalar_select %p1552, %s27, 0
        %s1554 = sadd.s32 %s1553, %s1551
        %s1555 = smul.addr %s1554, 2
        %s1556 = scalar_lea.vmem %s8, %s1555
      $region68: #{up_forward.8} parent=59 // pred_fallthru
        _
    $region60: #{up_forward.8} parent=5 // pred_fallthru
      _
  $region6: #{up_forward.8} parent=0 // loop_footer
    %s19 = sadd.s32 1, %s15
  $region7: #{up_forward.8} parent=0 // loop_footer_branch
    %14 = sbr.rel target = $region3
  $region8: #{up_forward.8} parent=0 // loop_exit
    _

</llo_original>
